<compile_context>
chip_gen: v5e
topology: v5e:2x2
jax: 0.10.0
libtpu: 0.0.40
codegen_flags: <defaults>
</compile_context>

<pallas_src>
import functools

import jax
import jax.numpy as jnp
from jax.experimental import pallas as pl
from jax.experimental.pallas import tpu as pltpu

HIDDEN = 1024      # wav2vec2-large hidden size (classifier in_features)
NUM_LABELS = 8     # synthetic number of emotion classes


def _make_kernel(rem):
    """Build the kernel for a given ragged remainder rem = T % tT (0 if exact)."""

    def kernel(h_ref, m_ref, w_ref, b_ref, o_ref, num_acc, den_acc):
        # h_ref: (bB, tT, H) native dtype, m_ref: (bB, tT) f32, w_ref: (H, Np) f32,
        # b_ref: (1, Np) f32, o_ref: (bB, Np) f32,
        # num_acc: (bB, H) f32, den_acc: (bB, 1) f32.
        t = pl.program_id(1)
        nt = pl.num_programs(1)

        @pl.when(t == 0)
        def _init():
            num_acc[...] = jnp.zeros_like(num_acc)
            den_acc[...] = jnp.zeros_like(den_acc)

        def _accumulate(h, m):
            # h: (bB, tt, H) native dtype; m: (bB, tt) f32 (mask values are 0/1).
            bB, tt, _ = h.shape
            # Batched (1, tt) @ (tt, H) contraction on the MXU, f32 accumulation.
            # (Mask cast to h.dtype is exact for 0/1 masks; no full-tile f32 upcast.)
            m3 = m.astype(h.dtype).reshape(bB, 1, tt)
            part = jax.lax.dot_general(
                m3, h,
                dimension_numbers=(((2,), (1,)), ((0,), (0,))),
                preferred_element_type=jnp.float32,
                precision=jax.lax.Precision.HIGHEST)           # (bB, 1, H)
            num_acc[...] += part.reshape(num_acc.shape)
            den_acc[...] += jnp.sum(m, axis=1, keepdims=True)  # (bB, 1)

        if rem == 0:
            _accumulate(h_ref[...], m_ref[...])
        else:
            @pl.when(t < nt - 1)
            def _full_tile():
                _accumulate(h_ref[...], m_ref[...])

            @pl.when(t == nt - 1)
            def _ragged_tile():
                # Only the first `rem` rows of the last T tile are in bounds; read
                # just those (static slice) so stale VMEM garbage never enters the
                # sums (avoids 0 * NaN contamination).
                _accumulate(h_ref[:, :rem, :], m_ref[:, :rem])

        @pl.when(t == nt - 1)
        def _finalize():
            den = jnp.maximum(den_acc[...], 1e-9)              # torch.clamp(min=1e-9)
            pooled = num_acc[...] / den                        # (bB, H)
            # Dropout(p=0.1) is identity in eval mode.
            logits = jnp.dot(pooled, w_ref[...],
                             preferred_element_type=jnp.float32,
                             precision=jax.lax.Precision.HIGHEST) + b_ref[...]
            o_ref[...] = logits.astype(o_ref.dtype)

    return kernel


def prepare_classifier_params(weight, bias):
    """Transpose + zero-pad nn.Linear params to lane-dense (H, Np) / (1, Np).

    Hoisted out of the per-forward path: call once per model."""
    n, h = weight.shape
    n_pad = max(128, pl.cdiv(n, 128) * 128)
    w = jnp.zeros((h, n_pad), jnp.float32).at[:, :n].set(
        jnp.transpose(weight).astype(jnp.float32))
    b = jnp.zeros((1, n_pad), jnp.float32).at[0, :n].set(bias.astype(jnp.float32))
    return w, b


def emotion_classifier_head(hidden_states, attention_mask, w_padded, b_padded,
                            num_labels, *, block_b=8, block_t=None):
    """hidden_states: (B, T, H) f32 or bf16 (kept in native dtype end-to-end)
       attention_mask: (B, T) or None (int/float, 1 = keep)
       w_padded: (H, Np) f32, b_padded: (1, Np) f32  (from prepare_classifier_params)
       returns logits (B, num_labels) f32."""
    B, T, H = hidden_states.shape
    Hp, Np = w_padded.shape
    assert Hp == H, "weight hidden dim mismatch"

    # Tiny (B, T) mask; also used for the None (mean pooling) path.
    if attention_mask is None:
        mask = jnp.ones((B, T), dtype=jnp.float32)
    else:
        mask = attention_mask.astype(jnp.float32)

    # ---- B tiling ----------------------------------------------------------------
    if B <= 8:
        bB = B                                  # single B tile (block == full dim)
    else:
        # >= 2 tiles so the "parallel" axis can occupy both TensorCores on v7x.
        bB = min(block_b, (B + 1) // 2)
        bB = max(8, (bB // 8) * 8)              # sublane-aligned
    nb = pl.cdiv(B, bB)

    # ---- T tiling (dtype-aware; ~16 MiB per hidden tile buffer) -------------------
    itemsize = jnp.dtype(hidden_states.dtype).itemsize
    if block_t is None:
        block_t = (16 * 1024 * 1024) // max(1, bB * H * itemsize)
        block_t = max(128, (block_t // 128) * 128)
    if T <= block_t:
        tT, rem = T, 0                          # single T tile: block == full dim
    else:
        tT = max(128, (block_t // 128) * 128)   # lane-dense mask blocks
        rem = T % tT
    nt = pl.cdiv(T, tT)

    tile_bytes = bB * tT * H * itemsize
    vmem_limit = int(min(96 * 2**20, max(32 * 2**20, 2 * tile_bytes + (8 << 20))))

    out = pl.pallas_call(
        _make_kernel(rem),
        out_shape=jax.ShapeDtypeStruct((B, Np), jnp.float32),
        grid_spec=pltpu.PrefetchScalarGridSpec(
            num_scalar_prefetch=0,
            grid=(nb, nt),
            in_specs=[
                pl.BlockSpec((bB, tT, H), lambda i, t: (i, t, 0)),   # streamed hidden
                pl.BlockSpec((bB, tT), lambda i, t: (i, t)),         # streamed mask
                pl.BlockSpec((H, Np), lambda i, t: (0, 0)),          # resident weight
                pl.BlockSpec((1, Np), lambda i, t: (0, 0)),          # resident bias
            ],
            out_specs=pl.BlockSpec((bB, Np), lambda i, t: (i, 0)),   # resident over T
            scratch_shapes=[
                pltpu.VMEM((bB, H), jnp.float32),                    # numerator acc
                pltpu.VMEM((bB, 1), jnp.float32),                    # denominator acc
            ],
        ),
        compiler_params=pltpu.CompilerParams(
            dimension_semantics=("parallel", "arbitrary"),
            vmem_limit_bytes=vmem_limit,
        ),
    )(hidden_states, mask, w_padded, b_padded)

    return out[:, :num_labels]


def _reference(hidden_states, attention_mask, weight, bias):
    """Pure-JAX reference mirroring the PyTorch forward (eval mode)."""
    h = hidden_states.astype(jnp.float32)
    if attention_mask is not None:
        m = attention_mask.astype(jnp.float32)[:, :, None]
        pooled = jnp.sum(h * m, axis=1) / jnp.maximum(jnp.sum(m, axis=1), 1e-9)
    else:
        pooled = jnp.mean(h, axis=1)
    return (jnp.dot(pooled, jnp.transpose(weight).astype(jnp.float32),
                    precision=jax.lax.Precision.HIGHEST)
            + bias.astype(jnp.float32))


if __name__ == "__main__":
    key = jax.random.PRNGKey(0)
    k_h, k_w, k_b = jax.random.split(key, 3)

    # Deterministic classifier parameters (nn.Linear(1024, num_labels) layout).
    weight = 0.02 * jax.random.normal(k_w, (NUM_LABELS, HIDDEN), dtype=jnp.float32)
    bias = 0.01 * jax.random.normal(k_b, (NUM_LABELS,), dtype=jnp.float32)
    # Hoisted per-model parameter prep (transpose + lane pad) -- done exactly once.
    w_pad, b_pad = prepare_classifier_params(weight, bias)
    head = functools.partial(emotion_classifier_head, w_padded=w_pad,
                             b_padded=b_pad, num_labels=NUM_LABELS)

    # --- case 1: small single-tile, with padding mask ---------------------------
    B, T = 2, 8
    h1 = jax.random.normal(k_h, (B, T, HIDDEN), dtype=jnp.float32)
    m1 = jnp.array([[1, 1, 1, 1, 1, 1, 1, 1],
                    [1, 1, 1, 1, 1, 0, 0, 0]], dtype=jnp.int32)
    out1 = jax.block_until_ready(head(h1, m1))
    ref1 = _reference(h1, m1, weight, bias)
    assert out1.shape == (B, NUM_LABELS)
    assert jnp.allclose(out1, ref1, atol=1e-4, rtol=1e-4), "case1 mismatch"

    # --- case 2: attention_mask=None (mean pooling) ------------------------------
    out2 = jax.block_until_ready(head(h1, None))
    ref2 = _reference(h1, None, weight, bias)
    assert jnp.allclose(out2, ref2, atol=1e-4, rtol=1e-4), "case2 mismatch"

    # --- case 3: multi-tile T reduction with ragged last tile (T=200, tT=128) ----
    B3, T3 = 2, 200
    h3 = jax.random.normal(jax.random.PRNGKey(1), (B3, T3, HIDDEN), dtype=jnp.float32)
    lens = jnp.array([200, 137])
    m3 = (jnp.arange(T3)[None, :] < lens[:, None]).astype(jnp.int32)
    out3 = jax.block_until_ready(head(h3, m3, block_t=128))
    ref3 = _reference(h3, m3, weight, bias)
    assert jnp.allclose(out3, ref3, atol=1e-4, rtol=1e-4), "case3 mismatch"

    # --- case 4: mask=None with ragged T tiling (mean must ignore OOB rows) ------
    out4 = jax.block_until_ready(head(h3, None, block_t=128))
    ref4 = _reference(h3, None, weight, bias)
    assert jnp.allclose(out4, ref4, atol=1e-4, rtol=1e-4), "case4 mismatch"

    # --- case 5: bf16 hidden states + ragged B tiling (B=9 -> nb=2) --------------
    B5, T5 = 9, 8
    h5 = jax.random.normal(jax.random.PRNGKey(2), (B5, T5, HIDDEN),
                           dtype=jnp.float32).astype(jnp.bfloat16)
    m5 = jnp.ones((B5, T5), dtype=jnp.int32).at[4, 5:].set(0)
    out5 = jax.block_until_ready(head(h5, m5))
    ref5 = _reference(h5.astype(jnp.float32), m5, weight, bias)
    assert out5.shape == (B5, NUM_LABELS)
    assert jnp.allclose(out5, ref5, atol=1e-3, rtol=1e-3), "case5 mismatch"

    # --- case 6: bf16 + ragged B + ragged T, everything at once ------------------
    B6, T6 = 9, 200
    h6 = jax.random.normal(jax.random.PRNGKey(3), (B6, T6, HIDDEN),
                           dtype=jnp.float32).astype(jnp.bfloat16)
    lens6 = jnp.array([200, 137, 64, 200, 13, 200, 99, 1, 150])
    m6 = (jnp.arange(T6)[None, :] < lens6[:, None]).astype(jnp.int32)
    out6 = jax.block_until_ready(head(h6, m6, block_t=128))
    ref6 = _reference(h6.astype(jnp.float32), m6, weight, bias)
    assert jnp.allclose(out6, ref6, atol=1e-3, rtol=1e-3), "case6 mismatch"

    print("KERNEL_OK")
</pallas_src>

<mosaic_0001>
module attributes {stable_mosaic.version = 11 : i64} {
  func.func @kernel(%arg0: i32, %arg1: i32, %arg2: memref<2x8x1024xf32, #tpu.memory_space<vmem>>, %arg3: memref<2x8xf32, #tpu.memory_space<vmem>>, %arg4: memref<1024x128xf32, #tpu.memory_space<vmem>>, %arg5: memref<1x128xf32, #tpu.memory_space<vmem>>, %arg6: memref<2x128xf32, #tpu.memory_space<vmem>>, %arg7: memref<2x1024xf32, #tpu.memory_space<vmem>>, %arg8: memref<2x1xf32, #tpu.memory_space<vmem>>) attributes {dimension_semantics = [#tpu.dimension_semantics<parallel>, #tpu.dimension_semantics<arbitrary>], iteration_bounds = array<i64: 1, 1>, scalar_prefetch = 0 : i64, scratch_operands = 2 : i64, tpu.core_type = #tpu.core_type<tc>, window_params = [{transform_indices = @transform_0, window_bounds = array<i64: 2, 8, 1024>}, {transform_indices = @transform_1, window_bounds = array<i64: 2, 8>}, {pipeline_mode = #tpu.pipeline_mode<synchronous>, transform_indices = @transform_2, window_bounds = array<i64: 1024, 128>}, {pipeline_mode = #tpu.pipeline_mode<synchronous>, transform_indices = @transform_3, window_bounds = array<i64: 1, 128>}, {transform_indices = @transform_4, window_bounds = array<i64: 2, 128>}]} {
    %c0_i32 = arith.constant 0 : i32
    %0 = arith.cmpi eq, %arg1, %c0_i32 : i32
    %1 = arith.extui %0 : i1 to i32
    %c0_i32_0 = arith.constant 0 : i32
    %2 = arith.cmpi ne, %1, %c0_i32_0 : i32
    scf.if %2 {
      %cst_16 = arith.constant 0.000000e+00 : f32
      %19 = vector.broadcast %cst_16 : f32 to vector<2x1024xf32>
      %c0_17 = arith.constant 0 : index
      %c0_18 = arith.constant 0 : index
      %20 = vector.load %arg7[%c0_17, %c0_18] : memref<2x1024xf32, #tpu.memory_space<vmem>>, vector<2x1024xf32>
      tpu.vector_store %arg7[%c0_17, %c0_18], %19 {strides = array<i32>} : memref<2x1024xf32, #tpu.memory_space<vmem>>, vector<2x1024xf32>,
      %cst_19 = arith.constant 0.000000e+00 : f32
      %21 = vector.broadcast %cst_19 : f32 to vector<2x1xf32>
      %c0_20 = arith.constant 0 : index
      %c0_21 = arith.constant 0 : index
      %22 = vector.load %arg8[%c0_20, %c0_21] : memref<2x1xf32, #tpu.memory_space<vmem>>, vector<2x1xf32>
      tpu.vector_store %arg8[%c0_20, %c0_21], %21 {strides = array<i32>} : memref<2x1xf32, #tpu.memory_space<vmem>>, vector<2x1xf32>,
    } else {
    }
    %c0 = arith.constant 0 : index
    %c0_1 = arith.constant 0 : index
    %c0_2 = arith.constant 0 : index
    %3 = vector.load %arg2[%c0, %c0_1, %c0_2] : memref<2x8x1024xf32, #tpu.memory_space<vmem>>, vector<2x8x1024xf32>
    %c0_3 = arith.constant 0 : index
    %c0_4 = arith.constant 0 : index
    %4 = vector.load %arg3[%c0_3, %c0_4] : memref<2x8xf32, #tpu.memory_space<vmem>>, vector<2x8xf32>
    %5 = vector.shape_cast %4 : vector<2x8xf32> to vector<2x1x8xf32>
    %cst = arith.constant dense<0.000000e+00> : vector<2x1x1024xf32>
    %6 = tpu.matmul %5, %3, %cst {dimension_numbers = #tpu.dot_dimension_numbers<[2], [1], [1], [2], [0, 0, 0, 1, 1, 2], [0], [0]>, precision = #tpu.contract_precision<fp32>} : vector<2x1x8xf32>, vector<2x8x1024xf32>, vector<2x1x1024xf32> -> vector<2x1x1024xf32>
    %c0_5 = arith.constant 0 : index
    %c0_6 = arith.constant 0 : index
    %7 = vector.load %arg7[%c0_5, %c0_6] : memref<2x1024xf32, #tpu.memory_space<vmem>>, vector<2x1024xf32>
    %8 = vector.shape_cast %6 : vector<2x1x1024xf32> to vector<2x1024xf32>
    %9 = arith.addf %7, %8 : vector<2x1024xf32>
    %c0_7 = arith.constant 0 : index
    %c0_8 = arith.constant 0 : index
    %10 = vector.load %arg7[%c0_7, %c0_8] : memref<2x1024xf32, #tpu.memory_space<vmem>>, vector<2x1024xf32>
    tpu.vector_store %arg7[%c0_7, %c0_8], %9 {strides = array<i32>} : memref<2x1024xf32, #tpu.memory_space<vmem>>, vector<2x1024xf32>,
    %c0_9 = arith.constant 0 : index
    %c0_10 = arith.constant 0 : index
    %11 = vector.load %arg8[%c0_9, %c0_10] : memref<2x1xf32, #tpu.memory_space<vmem>>, vector<2x1xf32>
    %cst_11 = arith.constant dense<0.000000e+00> : vector<2xf32>
    %12 = vector.multi_reduction <add>, %4, %cst_11 [1] : vector<2x8xf32> to vector<2xf32>
    %13 = vector.shape_cast %12 : vector<2xf32> to vector<2x1xf32>
    %14 = arith.addf %11, %13 : vector<2x1xf32>
    %c0_12 = arith.constant 0 : index
    %c0_13 = arith.constant 0 : index
    %15 = vector.load %arg8[%c0_12, %c0_13] : memref<2x1xf32, #tpu.memory_space<vmem>>, vector<2x1xf32>
    tpu.vector_store %arg8[%c0_12, %c0_13], %14 {strides = array<i32>} : memref<2x1xf32, #tpu.memory_space<vmem>>, vector<2x1xf32>,
    %c0_i32_14 = arith.constant 0 : i32
    %16 = arith.cmpi eq, %arg1, %c0_i32_14 : i32
    %17 = arith.extui %16 : i1 to i32
    %c0_i32_15 = arith.constant 0 : i32
    %18 = arith.cmpi ne, %17, %c0_i32_15 : i32
    scf.if %18 {
      %c0_16 = arith.constant 0 : index
      %c0_17 = arith.constant 0 : index
      %19 = vector.load %arg8[%c0_16, %c0_17] : memref<2x1xf32, #tpu.memory_space<vmem>>, vector<2x1xf32>
      %cst_18 = arith.constant 9.99999971E-10 : f32
      %20 = vector.broadcast %cst_18 : f32 to vector<2x1xf32>
      %21 = arith.maximumf %19, %20 : vector<2x1xf32>
      %c0_19 = arith.constant 0 : index
      %c0_20 = arith.constant 0 : index
      %22 = vector.load %arg7[%c0_19, %c0_20] : memref<2x1024xf32, #tpu.memory_space<vmem>>, vector<2x1024xf32>
      %23 = vector.broadcast %21 : vector<2x1xf32> to vector<2x1024xf32>
      %24 = arith.divf %22, %23 : vector<2x1024xf32>
      %c0_21 = arith.constant 0 : index
      %c0_22 = arith.constant 0 : index
      %25 = vector.load %arg4[%c0_21, %c0_22] : memref<1024x128xf32, #tpu.memory_space<vmem>>, vector<1024x128xf32>
      %cst_23 = arith.constant dense<0.000000e+00> : vector<2x128xf32>
      %26 = tpu.matmul %24, %25, %cst_23 {dimension_numbers = #tpu.dot_dimension_numbers<[1], [0], [0], [1], [0, 0, 1, 1], [], []>, precision = #tpu.contract_precision<fp32>} : vector<2x1024xf32>, vector<1024x128xf32>, vector<2x128xf32> -> vector<2x128xf32>
      %c0_24 = arith.constant 0 : index
      %c0_25 = arith.constant 0 : index
      %27 = vector.load %arg5[%c0_24, %c0_25] : memref<1x128xf32, #tpu.memory_space<vmem>>, vector<1x128xf32>
      %28 = vector.broadcast %27 : vector<1x128xf32> to vector<2x128xf32>
      %29 = arith.addf %26, %28 : vector<2x128xf32>
      %c0_26 = arith.constant 0 : index
      %c0_27 = arith.constant 0 : index
      %30 = vector.load %arg6[%c0_26, %c0_27] : memref<2x128xf32, #tpu.memory_space<vmem>>, vector<2x128xf32>
      tpu.vector_store %arg6[%c0_26, %c0_27], %29 {strides = array<i32>} : memref<2x128xf32, #tpu.memory_space<vmem>>, vector<2x128xf32>,
    } else {
    }
    return
  }
  func.func @transform_0(%arg0: i32, %arg1: i32) -> (i32, i32, i32) {
    %c0_i32 = arith.constant 0 : i32
    %c0_i32_0 = arith.constant 0 : i32
    return %arg0, %arg1, %c0_i32 : i32, i32, i32
  }
  func.func @transform_1(%arg0: i32, %arg1: i32) -> (i32, i32) {
    %c0_i32 = arith.constant 0 : i32
    return %arg0, %arg1 : i32, i32
  }
  func.func @transform_2(%arg0: i32, %arg1: i32) -> (i32, i32) {
    %c0_i32 = arith.constant 0 : i32
    %c0_i32_0 = arith.constant 0 : i32
    %c0_i32_1 = arith.constant 0 : i32
    return %c0_i32, %c0_i32_0 : i32, i32
  }
  func.func @transform_3(%arg0: i32, %arg1: i32) -> (i32, i32) {
    %c0_i32 = arith.constant 0 : i32
    %c0_i32_0 = arith.constant 0 : i32
    %c0_i32_1 = arith.constant 0 : i32
    return %c0_i32, %c0_i32_0 : i32, i32
  }
  func.func @transform_4(%arg0: i32, %arg1: i32) -> (i32, i32) {
    %c0_i32 = arith.constant 0 : i32
    %c0_i32_0 = arith.constant 0 : i32
    return %arg0, %c0_i32 : i32, i32
  }
}

</mosaic_0001>

<llo_original>
// kernel: tpu_custom_call.1
$region0: #{tpu_custom_call.1}
  #allocation0 [shape = 'u32[]', space=smem, size = 0x4, offset = 0x4, fixed_abs, tag = 'smem constant byte address 0x4 - core index']
  #allocation1 [shape = 'u32[72,128]{1,0:T(1,128)}', space=vmem, size = 0x9000, scoped, tag = 'internal scratch']
  #allocation2 [shape = 'f32[2,1024]{1,0:T(2,128)}', space=vmem, size = 0x2000, scoped, tag = 'scratch operand']
  #allocation3 [shape = 'f32[2,1]{1,0:T(2,128)}', space=vmem, size = 0x400, scoped, tag = 'scratch operand']
  %s0 = inlined_call_operand.hbm [shape: f32[2,8,1024], index: 0, kind: input, shape index: {}]
  %s1 = inlined_call_operand.hbm [shape: f32[2,8], index: 1, kind: input, shape index: {}]
  %s2 = inlined_call_operand.hbm [shape: f32[1024,128], index: 2, kind: input, shape index: {}]
  %s3 = inlined_call_operand.vmem [shape: f32[1,128], index: 3, kind: input, shape index: {}]
  %s4 = inlined_call_operand.hbm [shape: f32[2,128], index: 4, kind: output, shape index: {}]
  %s5 = sld [smem:[#allocation0]]
  $region46: #{tpu_custom_call.1} parent=0
    _
  %s7 = ssub.s32 1, %s5
  %s8 = scalar_select 0, %s7, %s5
  $region1: #{tpu_custom_call.1} parent=0
    #allocation4 [shape = 'u8[65536]{0}', space=vmem, size = 0x10000, scoped, tag = 'input window, operand 0, single buffered']
    #allocation5 [shape = 's32[1]{0}', space=sflag, size = 0x4, scoped, tag = 'scoped memory for tpu_custom_call.1']
    #allocation6 [shape = 's32[1]{0}', space=sflag, size = 0x4, scoped, tag = 'scoped memory for tpu_custom_call.1']
    #allocation7 [shape = 'u8[1024]{0}', space=vmem, size = 0x400, scoped, tag = 'input window, operand 1, single buffered']
    #allocation8 [shape = 's32[1]{0}', space=sflag, size = 0x4, scoped, tag = 'scoped memory for tpu_custom_call.1']
    #allocation9 [shape = 'u8[524288]{0}', space=vmem, size = 0x80000, scoped, tag = 'input window, operand 2, single buffered']
    #allocation10 [shape = 'u8[1024]{0}', space=vmem, size = 0x400, scoped, tag = 'output window, operand 0, single buffered']
    %9 = vsyncpa [#allocation5], 0
    %10 = vsyncpa [#allocation8], 0
    %11 = vsyncpa [#allocation6], 0
    // Predicated region
    $region2: #{tpu_custom_call.1} parent=1 // pred_check
      _
    $region3: #{tpu_custom_call.1} parent=1 // pred_check_branch
      %13 = sbr.rel (0) target = $region5
    $region4: #{tpu_custom_call.1} parent=1 // pred_region
      %15 = vsyncadd [#allocation5], 0
      %s16 = sshll.u32 %s0, 4
      %s17 = int_to_ptr.hbm [resolvable:$true] %s16
      %s18 = sshll.u32 [#allocation4], 4
      %s19 = int_to_ptr.vmem [resolvable:$true] %s18
      %24 = dma.hbm_to_vmem [thread:$0]  %s17, 2048, %s19, [#allocation5], 1024, 1024, 64
    $region5: #{tpu_custom_call.1} parent=1 // pred_fallthru
      _
    // Predicated region
    $region6: #{tpu_custom_call.1} parent=1 // pred_check
      _
    $region7: #{tpu_custom_call.1} parent=1 // pred_check_branch
      %26 = sbr.rel (0) target = $region9
    $region8: #{tpu_custom_call.1} parent=1 // pred_region
      %28 = vsyncadd [#allocation8], 0
      %s30 = sshll.u32 %s1, 4
      %s31 = int_to_ptr.hbm [resolvable:$true] %s30
      %s32 = sshll.u32 [#allocation7], 4
      %s33 = int_to_ptr.vmem [resolvable:$true] %s32
      %35 = dma.hbm_to_vmem [thread:$0]  %s31, 32, %s33, [#allocation8]
    $region9: #{tpu_custom_call.1} parent=1 // pred_fallthru
      _
    // Predicated region
    $region10: #{tpu_custom_call.1} parent=1 // pred_check
      _
    $region11: #{tpu_custom_call.1} parent=1 // pred_check_branch
      %37 = sbr.rel (0) target = $region13
    $region12: #{tpu_custom_call.1} parent=1 // pred_region
      %39 = vsyncadd [#allocation8], 0
      %s40 = sshll.u32 %s2, 4
      %s41 = int_to_ptr.hbm [resolvable:$true] %s40
      %s42 = sshll.u32 [#allocation9], 4
      %s43 = int_to_ptr.vmem [resolvable:$true] %s42
      %48 = dma.hbm_to_vmem [thread:$0]  %s41, 16384, %s43, [#allocation8], 128, 128, 8
    $region13: #{tpu_custom_call.1} parent=1 // pred_fallthru
      _
    // Predicated region
    $region14: #{tpu_custom_call.1} parent=1 // pred_check
      _
    $region15: #{tpu_custom_call.1} parent=1 // pred_check_branch
      %50 = sbr.rel (0) target = $region17
    $region16: #{tpu_custom_call.1} parent=1 // pred_region
      _
    $region17: #{tpu_custom_call.1} parent=1 // pred_fallthru
      _
    // Predicated region
    $region18: #{tpu_custom_call.1} parent=1 // pred_check
      _
    $region19: #{tpu_custom_call.1} parent=1 // pred_check_branch
      %52 = sbr.rel (0) target = $region21
    $region20: #{tpu_custom_call.1} parent=1 // pred_region
      %54 = dma.done [#allocation5], 2048
    $region21: #{tpu_custom_call.1} parent=1 // pred_fallthru
      _
    // Predicated region
    $region22: #{tpu_custom_call.1} parent=1 // pred_check
      _
    $region23: #{tpu_custom_call.1} parent=1 // pred_check_branch
      %56 = sbr.rel (0) target = $region25
    $region24: #{tpu_custom_call.1} parent=1 // pred_region
      %58 = dma.done [#allocation8], 32
    $region25: #{tpu_custom_call.1} parent=1 // pred_fallthru
      _
    // Predicated region
    $region26: #{tpu_custom_call.1} parent=1 // pred_check
      _
    $region27: #{tpu_custom_call.1} parent=1 // pred_check_branch
      %60 = sbr.rel (0) target = $region29
    $region28: #{tpu_custom_call.1} parent=1 // pred_region
      %62 = dma.done [#allocation8], 16384
    $region29: #{tpu_custom_call.1} parent=1 // pred_fallthru
      _
    %p63 = scmp.eq.s32.totalorder 0, 0
    // Predicated region
    $region30: #{tpu_custom_call.1} parent=1 // pred_check
      %p64 = pneg %p63
    $region31: #{tpu_custom_call.1} parent=1 // pred_check_branch
      %66 = sbr.rel (%p64) target = $region33
    $region32: #{tpu_custom_call.1} parent=1 // pred_region
      %67 = vst [vmem:[#allocation2] sm:$0xff] 0.0
      %68 = vst [vmem:[#allocation2 + $0x8] sm:$0xff] 0.0
      %vm69 = vcmask 1024
      %70 = vst.msk [vmem:[#allocation3] sm:$0x3] %vm69, 0.0
    $region33: #{tpu_custom_call.1} parent=1 // pred_fallthru
      _
    %v71 = vld [vmem:[#allocation4] sm:$0xff]
    %v72 = vld [vmem:[#allocation4 + $0x8] sm:$0xff]
    %v73 = vld [vmem:[#allocation4 + $0x10] sm:$0xff]
    %v74 = vld [vmem:[#allocation4 + $0x18] sm:$0xff]
    %v75 = vld [vmem:[#allocation4 + $0x20] sm:$0xff]
    %v76 = vld [vmem:[#allocation4 + $0x28] sm:$0xff]
    %v77 = vld [vmem:[#allocation4 + $0x30] sm:$0xff]
    %v78 = vld [vmem:[#allocation4 + $0x38] sm:$0xff]
    %v79 = vld [vmem:[#allocation4 + $0x40] sm:$0xff]
    %v80 = vld [vmem:[#allocation4 + $0x48] sm:$0xff]
    %v81 = vld [vmem:[#allocation4 + $0x50] sm:$0xff]
    %v82 = vld [vmem:[#allocation4 + $0x58] sm:$0xff]
    %v83 = vld [vmem:[#allocation4 + $0x60] sm:$0xff]
    %v84 = vld [vmem:[#allocation4 + $0x68] sm:$0xff]
    %v85 = vld [vmem:[#allocation4 + $0x70] sm:$0xff]
    %v86 = vld [vmem:[#allocation4 + $0x78] sm:$0xff]
    %v87 = vld [vmem:[#allocation7] sm:$0x3]
    %v89 = vrot.slane %v87, 1
    %vm90 = vcmask 64512
    %v91 = vsel %vm90, %v87, 0
    %93 = vmatpush.msra.mxu0 0.0
    %94 = vmatpush.msra.mxu0 0.0
    %95 = vmatpush.msra.mxu0 0.0
    %96 = vmatpush.msra.mxu0 0.0
    %97 = vmatpush.msra.mxu0 0.0
    %98 = vmatpush.msra.mxu0 0.0
    %99 = vmatpush.msra.mxu0 0.0
    %100 = vmatpush.msra.mxu0 0.0
    %101 = vmatpush.msra.mxu0 0.0
    %102 = vmatpush.msra.mxu0 0.0
    %103 = vmatpush.msra.mxu0 0.0
    %104 = vmatpush.msra.mxu0 0.0
    %105 = vmatpush.msra.mxu0 0.0
    %106 = vmatpush.msra.mxu0 0.0
    %107 = vmatpush.msra.mxu0 0.0
    %v108 = vand.u32 %v71, 4294901760
    %109 = vmatpush.msra.mxu0 %v108
    %v110 = vand.u32 %v91, 4294901760
    %v111 = vsub.f32 %v91, %v110
    %v112 = vand.u32 %v111, 4294901760
    %v113 = vsub.f32 %v111, %v112
    %v114 = vand.u32 %v113, 4294901760
    %115 = vmatmul.f32.gmra.mxu0 %v114
    %v116 = vpop.f32.mrf.mxu0
    %v117 = vadd.f32 0.0, %v116
    %118 = vdwg.mxu0
    %119 = vmatpush.msra.mxu0 0.0
    %120 = vmatpush.msra.mxu0 0.0
    %121 = vmatpush.msra.mxu0 0.0
    %122 = vmatpush.msra.mxu0 0.0
    %123 = vmatpush.msra.mxu0 0.0
    %124 = vmatpush.msra.mxu0 0.0
    %125 = vmatpush.msra.mxu0 0.0
    %126 = vmatpush.msra.mxu0 0.0
    %127 = vmatpush.msra.mxu0 0.0
    %128 = vmatpush.msra.mxu0 0.0
    %129 = vmatpush.msra.mxu0 0.0
    %130 = vmatpush.msra.mxu0 0.0
    %131 = vmatpush.msra.mxu0 0.0
    %132 = vmatpush.msra.mxu0 0.0
    %133 = vmatpush.msra.mxu0 0.0
    %v134 = vand.u32 %v71, 4294901760
    %v135 = vsub.f32 %v71, %v134
    %v136 = vand.u32 %v135, 4294901760
    %v137 = vsub.f32 %v135, %v136
    %v138 = vand.u32 %v137, 4294901760
    %139 = vmatpush.msra.mxu0 %v138
    %v140 = vand.u32 %v91, 4294901760
    %141 = vmatmul.f32.gmra.mxu0 %v140
    %v142 = vpop.f32.mrf.mxu0
    %v143 = vadd.f32 %v117, %v142
    %144 = vdwg.mxu0
    %145 = vmatpush.msra.mxu0 0.0
    %146 = vmatpush.msra.mxu0 0.0
    %147 = vmatpush.msra.mxu0 0.0
    %148 = vmatpush.msra.mxu0 0.0
    %149 = vmatpush.msra.mxu0 0.0
    %150 = vmatpush.msra.mxu0 0.0
    %151 = vmatpush.msra.mxu0 0.0
    %152 = vmatpush.msra.mxu0 0.0
    %153 = vmatpush.msra.mxu0 0.0
    %154 = vmatpush.msra.mxu0 0.0
    %155 = vmatpush.msra.mxu0 0.0
    %156 = vmatpush.msra.mxu0 0.0
    %157 = vmatpush.msra.mxu0 0.0
    %158 = vmatpush.msra.mxu0 0.0
    %159 = vmatpush.msra.mxu0 0.0
    %v160 = vand.u32 %v71, 4294901760
    %v161 = vsub.f32 %v71, %v160
    %162 = vmatpush.msra.mxu0 %v161
    %v163 = vand.u32 %v91, 4294901760
    %v164 = vsub.f32 %v91, %v163
    %165 = vmatmul.f32.gmra.mxu0 %v164
    %v166 = vpop.f32.mrf.mxu0
    %v167 = vadd.f32 %v143, %v166
    %168 = vdwg.mxu0
    %169 = vmatpush.msra.mxu0 0.0
    %170 = vmatpush.msra.mxu0 0.0
    %171 = vmatpush.msra.mxu0 0.0
    %172 = vmatpush.msra.mxu0 0.0
    %173 = vmatpush.msra.mxu0 0.0
    %174 = vmatpush.msra.mxu0 0.0
    %175 = vmatpush.msra.mxu0 0.0
    %176 = vmatpush.msra.mxu0 0.0
    %177 = vmatpush.msra.mxu0 0.0
    %178 = vmatpush.msra.mxu0 0.0
    %179 = vmatpush.msra.mxu0 0.0
    %180 = vmatpush.msra.mxu0 0.0
    %181 = vmatpush.msra.mxu0 0.0
    %182 = vmatpush.msra.mxu0 0.0
    %183 = vmatpush.msra.mxu0 0.0
    %v184 = vand.u32 %v71, 4294901760
    %185 = vmatpush.msra.mxu0 %v184
    %v186 = vand.u32 %v91, 4294901760
    %v187 = vsub.f32 %v91, %v186
    %v188 = vand.u32 %v187, 4294901760
    %189 = vmatmul.f32.gmra.mxu0 %v188
    %v190 = vpop.f32.mrf.mxu0
    %v191 = vadd.f32 %v167, %v190
    %192 = vdwg.mxu0
    %193 = vmatpush.msra.mxu0 0.0
    %194 = vmatpush.msra.mxu0 0.0
    %195 = vmatpush.msra.mxu0 0.0
    %196 = vmatpush.msra.mxu0 0.0
    %197 = vmatpush.msra.mxu0 0.0
    %198 = vmatpush.msra.mxu0 0.0
    %199 = vmatpush.msra.mxu0 0.0
    %200 = vmatpush.msra.mxu0 0.0
    %201 = vmatpush.msra.mxu0 0.0
    %202 = vmatpush.msra.mxu0 0.0
    %203 = vmatpush.msra.mxu0 0.0
    %204 = vmatpush.msra.mxu0 0.0
    %205 = vmatpush.msra.mxu0 0.0
    %206 = vmatpush.msra.mxu0 0.0
    %207 = vmatpush.msra.mxu0 0.0
    %v208 = vand.u32 %v71, 4294901760
    %v209 = vsub.f32 %v71, %v208
    %v210 = vand.u32 %v209, 4294901760
    %211 = vmatpush.msra.mxu0 %v210
    %v212 = vand.u32 %v91, 4294901760
    %213 = vmatmul.f32.gmra.mxu0 %v212
    %v214 = vpop.f32.mrf.mxu0
    %v215 = vadd.f32 %v191, %v214
    %216 = vdwg.mxu0
    %217 = vmatpush.msra.mxu0 0.0
    %218 = vmatpush.msra.mxu0 0.0
    %219 = vmatpush.msra.mxu0 0.0
    %220 = vmatpush.msra.mxu0 0.0
    %221 = vmatpush.msra.mxu0 0.0
    %222 = vmatpush.msra.mxu0 0.0
    %223 = vmatpush.msra.mxu0 0.0
    %224 = vmatpush.msra.mxu0 0.0
    %225 = vmatpush.msra.mxu0 0.0
    %226 = vmatpush.msra.mxu0 0.0
    %227 = vmatpush.msra.mxu0 0.0
    %228 = vmatpush.msra.mxu0 0.0
    %229 = vmatpush.msra.mxu0 0.0
    %230 = vmatpush.msra.mxu0 0.0
    %231 = vmatpush.msra.mxu0 0.0
    %v232 = vand.u32 %v71, 4294901760
    %233 = vmatpush.msra.mxu0 %v232
    %v234 = vand.u32 %v91, 4294901760
    %235 = vmatmul.f32.gmra.mxu0 %v234
    %v236 = vpop.f32.mrf.mxu0
    %v237 = vadd.f32 %v215, %v236
    %238 = vdwg.mxu0
    %239 = vmatpush.msra.mxu0 0.0
    %240 = vmatpush.msra.mxu0 0.0
    %241 = vmatpush.msra.mxu0 0.0
    %242 = vmatpush.msra.mxu0 0.0
    %243 = vmatpush.msra.mxu0 0.0
    %244 = vmatpush.msra.mxu0 0.0
    %245 = vmatpush.msra.mxu0 0.0
    %246 = vmatpush.msra.mxu0 0.0
    %247 = vmatpush.msra.mxu0 0.0
    %248 = vmatpush.msra.mxu0 0.0
    %249 = vmatpush.msra.mxu0 0.0
    %250 = vmatpush.msra.mxu0 0.0
    %251 = vmatpush.msra.mxu0 0.0
    %252 = vmatpush.msra.mxu0 0.0
    %253 = vmatpush.msra.mxu0 0.0
    %v254 = vand.u32 %v72, 4294901760
    %255 = vmatpush.msra.mxu0 %v254
    %v256 = vand.u32 %v91, 4294901760
    %v257 = vsub.f32 %v91, %v256
    %v258 = vand.u32 %v257, 4294901760
    %v259 = vsub.f32 %v257, %v258
    %v260 = vand.u32 %v259, 4294901760
    %261 = vmatmul.f32.gmra.mxu0 %v260
    %v262 = vpop.f32.mrf.mxu0
    %v263 = vadd.f32 0.0, %v262
    %264 = vdwg.mxu0
    %265 = vmatpush.msra.mxu0 0.0
    %266 = vmatpush.msra.mxu0 0.0
    %267 = vmatpush.msra.mxu0 0.0
    %268 = vmatpush.msra.mxu0 0.0
    %269 = vmatpush.msra.mxu0 0.0
    %270 = vmatpush.msra.mxu0 0.0
    %271 = vmatpush.msra.mxu0 0.0
    %272 = vmatpush.msra.mxu0 0.0
    %273 = vmatpush.msra.mxu0 0.0
    %274 = vmatpush.msra.mxu0 0.0
    %275 = vmatpush.msra.mxu0 0.0
    %276 = vmatpush.msra.mxu0 0.0
    %277 = vmatpush.msra.mxu0 0.0
    %278 = vmatpush.msra.mxu0 0.0
    %279 = vmatpush.msra.mxu0 0.0
    %v280 = vand.u32 %v72, 4294901760
    %v281 = vsub.f32 %v72, %v280
    %v282 = vand.u32 %v281, 4294901760
    %v283 = vsub.f32 %v281, %v282
    %v284 = vand.u32 %v283, 4294901760
    %285 = vmatpush.msra.mxu0 %v284
    %v286 = vand.u32 %v91, 4294901760
    %287 = vmatmul.f32.gmra.mxu0 %v286
    %v288 = vpop.f32.mrf.mxu0
    %v289 = vadd.f32 %v263, %v288
    %290 = vdwg.mxu0
    %291 = vmatpush.msra.mxu0 0.0
    %292 = vmatpush.msra.mxu0 0.0
    %293 = vmatpush.msra.mxu0 0.0
    %294 = vmatpush.msra.mxu0 0.0
    %295 = vmatpush.msra.mxu0 0.0
    %296 = vmatpush.msra.mxu0 0.0
    %297 = vmatpush.msra.mxu0 0.0
    %298 = vmatpush.msra.mxu0 0.0
    %299 = vmatpush.msra.mxu0 0.0
    %300 = vmatpush.msra.mxu0 0.0
    %301 = vmatpush.msra.mxu0 0.0
    %302 = vmatpush.msra.mxu0 0.0
    %303 = vmatpush.msra.mxu0 0.0
    %304 = vmatpush.msra.mxu0 0.0
    %305 = vmatpush.msra.mxu0 0.0
    %v306 = vand.u32 %v72, 4294901760
    %v307 = vsub.f32 %v72, %v306
    %308 = vmatpush.msra.mxu0 %v307
    %v309 = vand.u32 %v91, 4294901760
    %v310 = vsub.f32 %v91, %v309
    %311 = vmatmul.f32.gmra.mxu0 %v310
    %v312 = vpop.f32.mrf.mxu0
    %v313 = vadd.f32 %v289, %v312
    %314 = vdwg.mxu0
    %315 = vmatpush.msra.mxu0 0.0
    %316 = vmatpush.msra.mxu0 0.0
    %317 = vmatpush.msra.mxu0 0.0
    %318 = vmatpush.msra.mxu0 0.0
    %319 = vmatpush.msra.mxu0 0.0
    %320 = vmatpush.msra.mxu0 0.0
    %321 = vmatpush.msra.mxu0 0.0
    %322 = vmatpush.msra.mxu0 0.0
    %323 = vmatpush.msra.mxu0 0.0
    %324 = vmatpush.msra.mxu0 0.0
    %325 = vmatpush.msra.mxu0 0.0
    %326 = vmatpush.msra.mxu0 0.0
    %327 = vmatpush.msra.mxu0 0.0
    %328 = vmatpush.msra.mxu0 0.0
    %329 = vmatpush.msra.mxu0 0.0
    %v330 = vand.u32 %v72, 4294901760
    %331 = vmatpush.msra.mxu0 %v330
    %v332 = vand.u32 %v91, 4294901760
    %v333 = vsub.f32 %v91, %v332
    %v334 = vand.u32 %v333, 4294901760
    %335 = vmatmul.f32.gmra.mxu0 %v334
    %v336 = vpop.f32.mrf.mxu0
    %v337 = vadd.f32 %v313, %v336
    %338 = vdwg.mxu0
    %339 = vmatpush.msra.mxu0 0.0
    %340 = vmatpush.msra.mxu0 0.0
    %341 = vmatpush.msra.mxu0 0.0
    %342 = vmatpush.msra.mxu0 0.0
    %343 = vmatpush.msra.mxu0 0.0
    %344 = vmatpush.msra.mxu0 0.0
    %345 = vmatpush.msra.mxu0 0.0
    %346 = vmatpush.msra.mxu0 0.0
    %347 = vmatpush.msra.mxu0 0.0
    %348 = vmatpush.msra.mxu0 0.0
    %349 = vmatpush.msra.mxu0 0.0
    %350 = vmatpush.msra.mxu0 0.0
    %351 = vmatpush.msra.mxu0 0.0
    %352 = vmatpush.msra.mxu0 0.0
    %353 = vmatpush.msra.mxu0 0.0
    %v354 = vand.u32 %v72, 4294901760
    %v355 = vsub.f32 %v72, %v354
    %v356 = vand.u32 %v355, 4294901760
    %357 = vmatpush.msra.mxu0 %v356
    %v358 = vand.u32 %v91, 4294901760
    %359 = vmatmul.f32.gmra.mxu0 %v358
    %v360 = vpop.f32.mrf.mxu0
    %v361 = vadd.f32 %v337, %v360
    %362 = vdwg.mxu0
    %363 = vmatpush.msra.mxu0 0.0
    %364 = vmatpush.msra.mxu0 0.0
    %365 = vmatpush.msra.mxu0 0.0
    %366 = vmatpush.msra.mxu0 0.0
    %367 = vmatpush.msra.mxu0 0.0
    %368 = vmatpush.msra.mxu0 0.0
    %369 = vmatpush.msra.mxu0 0.0
    %370 = vmatpush.msra.mxu0 0.0
    %371 = vmatpush.msra.mxu0 0.0
    %372 = vmatpush.msra.mxu0 0.0
    %373 = vmatpush.msra.mxu0 0.0
    %374 = vmatpush.msra.mxu0 0.0
    %375 = vmatpush.msra.mxu0 0.0
    %376 = vmatpush.msra.mxu0 0.0
    %377 = vmatpush.msra.mxu0 0.0
    %v378 = vand.u32 %v72, 4294901760
    %379 = vmatpush.msra.mxu0 %v378
    %v380 = vand.u32 %v91, 4294901760
    %381 = vmatmul.f32.gmra.mxu0 %v380
    %v382 = vpop.f32.mrf.mxu0
    %v383 = vadd.f32 %v361, %v382
    %384 = vdwg.mxu0
    %385 = vmatpush.msra.mxu0 0.0
    %386 = vmatpush.msra.mxu0 0.0
    %387 = vmatpush.msra.mxu0 0.0
    %388 = vmatpush.msra.mxu0 0.0
    %389 = vmatpush.msra.mxu0 0.0
    %390 = vmatpush.msra.mxu0 0.0
    %391 = vmatpush.msra.mxu0 0.0
    %392 = vmatpush.msra.mxu0 0.0
    %393 = vmatpush.msra.mxu0 0.0
    %394 = vmatpush.msra.mxu0 0.0
    %395 = vmatpush.msra.mxu0 0.0
    %396 = vmatpush.msra.mxu0 0.0
    %397 = vmatpush.msra.mxu0 0.0
    %398 = vmatpush.msra.mxu0 0.0
    %399 = vmatpush.msra.mxu0 0.0
    %v400 = vand.u32 %v73, 4294901760
    %401 = vmatpush.msra.mxu0 %v400
    %v402 = vand.u32 %v91, 4294901760
    %v403 = vsub.f32 %v91, %v402
    %v404 = vand.u32 %v403, 4294901760
    %v405 = vsub.f32 %v403, %v404
    %v406 = vand.u32 %v405, 4294901760
    %407 = vmatmul.f32.gmra.mxu0 %v406
    %v408 = vpop.f32.mrf.mxu0
    %v409 = vadd.f32 0.0, %v408
    %410 = vdwg.mxu0
    %411 = vmatpush.msra.mxu0 0.0
    %412 = vmatpush.msra.mxu0 0.0
    %413 = vmatpush.msra.mxu0 0.0
    %414 = vmatpush.msra.mxu0 0.0
    %415 = vmatpush.msra.mxu0 0.0
    %416 = vmatpush.msra.mxu0 0.0
    %417 = vmatpush.msra.mxu0 0.0
    %418 = vmatpush.msra.mxu0 0.0
    %419 = vmatpush.msra.mxu0 0.0
    %420 = vmatpush.msra.mxu0 0.0
    %421 = vmatpush.msra.mxu0 0.0
    %422 = vmatpush.msra.mxu0 0.0
    %423 = vmatpush.msra.mxu0 0.0
    %424 = vmatpush.msra.mxu0 0.0
    %425 = vmatpush.msra.mxu0 0.0
    %v426 = vand.u32 %v73, 4294901760
    %v427 = vsub.f32 %v73, %v426
    %v428 = vand.u32 %v427, 4294901760
    %v429 = vsub.f32 %v427, %v428
    %v430 = vand.u32 %v429, 4294901760
    %431 = vmatpush.msra.mxu0 %v430
    %v432 = vand.u32 %v91, 4294901760
    %433 = vmatmul.f32.gmra.mxu0 %v432
    %v434 = vpop.f32.mrf.mxu0
    %v435 = vadd.f32 %v409, %v434
    %436 = vdwg.mxu0
    %437 = vmatpush.msra.mxu0 0.0
    %438 = vmatpush.msra.mxu0 0.0
    %439 = vmatpush.msra.mxu0 0.0
    %440 = vmatpush.msra.mxu0 0.0
    %441 = vmatpush.msra.mxu0 0.0
    %442 = vmatpush.msra.mxu0 0.0
    %443 = vmatpush.msra.mxu0 0.0
    %444 = vmatpush.msra.mxu0 0.0
    %445 = vmatpush.msra.mxu0 0.0
    %446 = vmatpush.msra.mxu0 0.0
    %447 = vmatpush.msra.mxu0 0.0
    %448 = vmatpush.msra.mxu0 0.0
    %449 = vmatpush.msra.mxu0 0.0
    %450 = vmatpush.msra.mxu0 0.0
    %451 = vmatpush.msra.mxu0 0.0
    %v452 = vand.u32 %v73, 4294901760
    %v453 = vsub.f32 %v73, %v452
    %454 = vmatpush.msra.mxu0 %v453
    %v455 = vand.u32 %v91, 4294901760
    %v456 = vsub.f32 %v91, %v455
    %457 = vmatmul.f32.gmra.mxu0 %v456
    %v458 = vpop.f32.mrf.mxu0
    %v459 = vadd.f32 %v435, %v458
    %460 = vdwg.mxu0
    %461 = vmatpush.msra.mxu0 0.0
    %462 = vmatpush.msra.mxu0 0.0
    %463 = vmatpush.msra.mxu0 0.0
    %464 = vmatpush.msra.mxu0 0.0
    %465 = vmatpush.msra.mxu0 0.0
    %466 = vmatpush.msra.mxu0 0.0
    %467 = vmatpush.msra.mxu0 0.0
    %468 = vmatpush.msra.mxu0 0.0
    %469 = vmatpush.msra.mxu0 0.0
    %470 = vmatpush.msra.mxu0 0.0
    %471 = vmatpush.msra.mxu0 0.0
    %472 = vmatpush.msra.mxu0 0.0
    %473 = vmatpush.msra.mxu0 0.0
    %474 = vmatpush.msra.mxu0 0.0
    %475 = vmatpush.msra.mxu0 0.0
    %v476 = vand.u32 %v73, 4294901760
    %477 = vmatpush.msra.mxu0 %v476
    %v478 = vand.u32 %v91, 4294901760
    %v479 = vsub.f32 %v91, %v478
    %v480 = vand.u32 %v479, 4294901760
    %481 = vmatmul.f32.gmra.mxu0 %v480
    %v482 = vpop.f32.mrf.mxu0
    %v483 = vadd.f32 %v459, %v482
    %484 = vdwg.mxu0
    %485 = vmatpush.msra.mxu0 0.0
    %486 = vmatpush.msra.mxu0 0.0
    %487 = vmatpush.msra.mxu0 0.0
    %488 = vmatpush.msra.mxu0 0.0
    %489 = vmatpush.msra.mxu0 0.0
    %490 = vmatpush.msra.mxu0 0.0
    %491 = vmatpush.msra.mxu0 0.0
    %492 = vmatpush.msra.mxu0 0.0
    %493 = vmatpush.msra.mxu0 0.0
    %494 = vmatpush.msra.mxu0 0.0
    %495 = vmatpush.msra.mxu0 0.0
    %496 = vmatpush.msra.mxu0 0.0
    %497 = vmatpush.msra.mxu0 0.0
    %498 = vmatpush.msra.mxu0 0.0
    %499 = vmatpush.msra.mxu0 0.0
    %v500 = vand.u32 %v73, 4294901760
    %v501 = vsub.f32 %v73, %v500
    %v502 = vand.u32 %v501, 4294901760
    %503 = vmatpush.msra.mxu0 %v502
    %v504 = vand.u32 %v91, 4294901760
    %505 = vmatmul.f32.gmra.mxu0 %v504
    %v506 = vpop.f32.mrf.mxu0
    %v507 = vadd.f32 %v483, %v506
    %508 = vdwg.mxu0
    %509 = vmatpush.msra.mxu0 0.0
    %510 = vmatpush.msra.mxu0 0.0
    %511 = vmatpush.msra.mxu0 0.0
    %512 = vmatpush.msra.mxu0 0.0
    %513 = vmatpush.msra.mxu0 0.0
    %514 = vmatpush.msra.mxu0 0.0
    %515 = vmatpush.msra.mxu0 0.0
    %516 = vmatpush.msra.mxu0 0.0
    %517 = vmatpush.msra.mxu0 0.0
    %518 = vmatpush.msra.mxu0 0.0
    %519 = vmatpush.msra.mxu0 0.0
    %520 = vmatpush.msra.mxu0 0.0
    %521 = vmatpush.msra.mxu0 0.0
    %522 = vmatpush.msra.mxu0 0.0
    %523 = vmatpush.msra.mxu0 0.0
    %v524 = vand.u32 %v73, 4294901760
    %525 = vmatpush.msra.mxu0 %v524
    %v526 = vand.u32 %v91, 4294901760
    %527 = vmatmul.f32.gmra.mxu0 %v526
    %v528 = vpop.f32.mrf.mxu0
    %v529 = vadd.f32 %v507, %v528
    %530 = vdwg.mxu0
    %531 = vmatpush.msra.mxu0 0.0
    %532 = vmatpush.msra.mxu0 0.0
    %533 = vmatpush.msra.mxu0 0.0
    %534 = vmatpush.msra.mxu0 0.0
    %535 = vmatpush.msra.mxu0 0.0
    %536 = vmatpush.msra.mxu0 0.0
    %537 = vmatpush.msra.mxu0 0.0
    %538 = vmatpush.msra.mxu0 0.0
    %539 = vmatpush.msra.mxu0 0.0
    %540 = vmatpush.msra.mxu0 0.0
    %541 = vmatpush.msra.mxu0 0.0
    %542 = vmatpush.msra.mxu0 0.0
    %543 = vmatpush.msra.mxu0 0.0
    %544 = vmatpush.msra.mxu0 0.0
    %545 = vmatpush.msra.mxu0 0.0
    %v546 = vand.u32 %v74, 4294901760
    %547 = vmatpush.msra.mxu0 %v546
    %v548 = vand.u32 %v91, 4294901760
    %v549 = vsub.f32 %v91, %v548
    %v550 = vand.u32 %v549, 4294901760
    %v551 = vsub.f32 %v549, %v550
    %v552 = vand.u32 %v551, 4294901760
    %553 = vmatmul.f32.gmra.mxu0 %v552
    %v554 = vpop.f32.mrf.mxu0
    %v555 = vadd.f32 0.0, %v554
    %556 = vdwg.mxu0
    %557 = vmatpush.msra.mxu0 0.0
    %558 = vmatpush.msra.mxu0 0.0
    %559 = vmatpush.msra.mxu0 0.0
    %560 = vmatpush.msra.mxu0 0.0
    %561 = vmatpush.msra.mxu0 0.0
    %562 = vmatpush.msra.mxu0 0.0
    %563 = vmatpush.msra.mxu0 0.0
    %564 = vmatpush.msra.mxu0 0.0
    %565 = vmatpush.msra.mxu0 0.0
    %566 = vmatpush.msra.mxu0 0.0
    %567 = vmatpush.msra.mxu0 0.0
    %568 = vmatpush.msra.mxu0 0.0
    %569 = vmatpush.msra.mxu0 0.0
    %570 = vmatpush.msra.mxu0 0.0
    %571 = vmatpush.msra.mxu0 0.0
    %v572 = vand.u32 %v74, 4294901760
    %v573 = vsub.f32 %v74, %v572
    %v574 = vand.u32 %v573, 4294901760
    %v575 = vsub.f32 %v573, %v574
    %v576 = vand.u32 %v575, 4294901760
    %577 = vmatpush.msra.mxu0 %v576
    %v578 = vand.u32 %v91, 4294901760
    %579 = vmatmul.f32.gmra.mxu0 %v578
    %v580 = vpop.f32.mrf.mxu0
    %v581 = vadd.f32 %v555, %v580
    %582 = vdwg.mxu0
    %583 = vmatpush.msra.mxu0 0.0
    %584 = vmatpush.msra.mxu0 0.0
    %585 = vmatpush.msra.mxu0 0.0
    %586 = vmatpush.msra.mxu0 0.0
    %587 = vmatpush.msra.mxu0 0.0
    %588 = vmatpush.msra.mxu0 0.0
    %589 = vmatpush.msra.mxu0 0.0
    %590 = vmatpush.msra.mxu0 0.0
    %591 = vmatpush.msra.mxu0 0.0
    %592 = vmatpush.msra.mxu0 0.0
    %593 = vmatpush.msra.mxu0 0.0
    %594 = vmatpush.msra.mxu0 0.0
    %595 = vmatpush.msra.mxu0 0.0
    %596 = vmatpush.msra.mxu0 0.0
    %597 = vmatpush.msra.mxu0 0.0
    %v598 = vand.u32 %v74, 4294901760
    %v599 = vsub.f32 %v74, %v598
    %600 = vmatpush.msra.mxu0 %v599
    %v601 = vand.u32 %v91, 4294901760
    %v602 = vsub.f32 %v91, %v601
    %603 = vmatmul.f32.gmra.mxu0 %v602
    %v604 = vpop.f32.mrf.mxu0
    %v605 = vadd.f32 %v581, %v604
    %606 = vdwg.mxu0
    %607 = vmatpush.msra.mxu0 0.0
    %608 = vmatpush.msra.mxu0 0.0
    %609 = vmatpush.msra.mxu0 0.0
    %610 = vmatpush.msra.mxu0 0.0
    %611 = vmatpush.msra.mxu0 0.0
    %612 = vmatpush.msra.mxu0 0.0
    %613 = vmatpush.msra.mxu0 0.0
    %614 = vmatpush.msra.mxu0 0.0
    %615 = vmatpush.msra.mxu0 0.0
    %616 = vmatpush.msra.mxu0 0.0
    %617 = vmatpush.msra.mxu0 0.0
    %618 = vmatpush.msra.mxu0 0.0
    %619 = vmatpush.msra.mxu0 0.0
    %620 = vmatpush.msra.mxu0 0.0
    %621 = vmatpush.msra.mxu0 0.0
    %v622 = vand.u32 %v74, 4294901760
    %623 = vmatpush.msra.mxu0 %v622
    %v624 = vand.u32 %v91, 4294901760
    %v625 = vsub.f32 %v91, %v624
    %v626 = vand.u32 %v625, 4294901760
    %627 = vmatmul.f32.gmra.mxu0 %v626
    %v628 = vpop.f32.mrf.mxu0
    %v629 = vadd.f32 %v605, %v628
    %630 = vdwg.mxu0
    %631 = vmatpush.msra.mxu0 0.0
    %632 = vmatpush.msra.mxu0 0.0
    %633 = vmatpush.msra.mxu0 0.0
    %634 = vmatpush.msra.mxu0 0.0
    %635 = vmatpush.msra.mxu0 0.0
    %636 = vmatpush.msra.mxu0 0.0
    %637 = vmatpush.msra.mxu0 0.0
    %638 = vmatpush.msra.mxu0 0.0
    %639 = vmatpush.msra.mxu0 0.0
    %640 = vmatpush.msra.mxu0 0.0
    %641 = vmatpush.msra.mxu0 0.0
    %642 = vmatpush.msra.mxu0 0.0
    %643 = vmatpush.msra.mxu0 0.0
    %644 = vmatpush.msra.mxu0 0.0
    %645 = vmatpush.msra.mxu0 0.0
    %v646 = vand.u32 %v74, 4294901760
    %v647 = vsub.f32 %v74, %v646
    %v648 = vand.u32 %v647, 4294901760
    %649 = vmatpush.msra.mxu0 %v648
    %v650 = vand.u32 %v91, 4294901760
    %651 = vmatmul.f32.gmra.mxu0 %v650
    %v652 = vpop.f32.mrf.mxu0
    %v653 = vadd.f32 %v629, %v652
    %654 = vdwg.mxu0
    %655 = vmatpush.msra.mxu0 0.0
    %656 = vmatpush.msra.mxu0 0.0
    %657 = vmatpush.msra.mxu0 0.0
    %658 = vmatpush.msra.mxu0 0.0
    %659 = vmatpush.msra.mxu0 0.0
    %660 = vmatpush.msra.mxu0 0.0
    %661 = vmatpush.msra.mxu0 0.0
    %662 = vmatpush.msra.mxu0 0.0
    %663 = vmatpush.msra.mxu0 0.0
    %664 = vmatpush.msra.mxu0 0.0
    %665 = vmatpush.msra.mxu0 0.0
    %666 = vmatpush.msra.mxu0 0.0
    %667 = vmatpush.msra.mxu0 0.0
    %668 = vmatpush.msra.mxu0 0.0
    %669 = vmatpush.msra.mxu0 0.0
    %v670 = vand.u32 %v74, 4294901760
    %671 = vmatpush.msra.mxu0 %v670
    %v672 = vand.u32 %v91, 4294901760
    %673 = vmatmul.f32.gmra.mxu0 %v672
    %v674 = vpop.f32.mrf.mxu0
    %v675 = vadd.f32 %v653, %v674
    %676 = vdwg.mxu0
    %677 = vmatpush.msra.mxu0 0.0
    %678 = vmatpush.msra.mxu0 0.0
    %679 = vmatpush.msra.mxu0 0.0
    %680 = vmatpush.msra.mxu0 0.0
    %681 = vmatpush.msra.mxu0 0.0
    %682 = vmatpush.msra.mxu0 0.0
    %683 = vmatpush.msra.mxu0 0.0
    %684 = vmatpush.msra.mxu0 0.0
    %685 = vmatpush.msra.mxu0 0.0
    %686 = vmatpush.msra.mxu0 0.0
    %687 = vmatpush.msra.mxu0 0.0
    %688 = vmatpush.msra.mxu0 0.0
    %689 = vmatpush.msra.mxu0 0.0
    %690 = vmatpush.msra.mxu0 0.0
    %691 = vmatpush.msra.mxu0 0.0
    %v692 = vand.u32 %v75, 4294901760
    %693 = vmatpush.msra.mxu0 %v692
    %v694 = vand.u32 %v91, 4294901760
    %v695 = vsub.f32 %v91, %v694
    %v696 = vand.u32 %v695, 4294901760
    %v697 = vsub.f32 %v695, %v696
    %v698 = vand.u32 %v697, 4294901760
    %699 = vmatmul.f32.gmra.mxu0 %v698
    %v700 = vpop.f32.mrf.mxu0
    %v701 = vadd.f32 0.0, %v700
    %702 = vdwg.mxu0
    %703 = vmatpush.msra.mxu0 0.0
    %704 = vmatpush.msra.mxu0 0.0
    %705 = vmatpush.msra.mxu0 0.0
    %706 = vmatpush.msra.mxu0 0.0
    %707 = vmatpush.msra.mxu0 0.0
    %708 = vmatpush.msra.mxu0 0.0
    %709 = vmatpush.msra.mxu0 0.0
    %710 = vmatpush.msra.mxu0 0.0
    %711 = vmatpush.msra.mxu0 0.0
    %712 = vmatpush.msra.mxu0 0.0
    %713 = vmatpush.msra.mxu0 0.0
    %714 = vmatpush.msra.mxu0 0.0
    %715 = vmatpush.msra.mxu0 0.0
    %716 = vmatpush.msra.mxu0 0.0
    %717 = vmatpush.msra.mxu0 0.0
    %v718 = vand.u32 %v75, 4294901760
    %v719 = vsub.f32 %v75, %v718
    %v720 = vand.u32 %v719, 4294901760
    %v721 = vsub.f32 %v719, %v720
    %v722 = vand.u32 %v721, 4294901760
    %723 = vmatpush.msra.mxu0 %v722
    %v724 = vand.u32 %v91, 4294901760
    %725 = vmatmul.f32.gmra.mxu0 %v724
    %v726 = vpop.f32.mrf.mxu0
    %v727 = vadd.f32 %v701, %v726
    %728 = vdwg.mxu0
    %729 = vmatpush.msra.mxu0 0.0
    %730 = vmatpush.msra.mxu0 0.0
    %731 = vmatpush.msra.mxu0 0.0
    %732 = vmatpush.msra.mxu0 0.0
    %733 = vmatpush.msra.mxu0 0.0
    %734 = vmatpush.msra.mxu0 0.0
    %735 = vmatpush.msra.mxu0 0.0
    %736 = vmatpush.msra.mxu0 0.0
    %737 = vmatpush.msra.mxu0 0.0
    %738 = vmatpush.msra.mxu0 0.0
    %739 = vmatpush.msra.mxu0 0.0
    %740 = vmatpush.msra.mxu0 0.0
    %741 = vmatpush.msra.mxu0 0.0
    %742 = vmatpush.msra.mxu0 0.0
    %743 = vmatpush.msra.mxu0 0.0
    %v744 = vand.u32 %v75, 4294901760
    %v745 = vsub.f32 %v75, %v744
    %746 = vmatpush.msra.mxu0 %v745
    %v747 = vand.u32 %v91, 4294901760
    %v748 = vsub.f32 %v91, %v747
    %749 = vmatmul.f32.gmra.mxu0 %v748
    %v750 = vpop.f32.mrf.mxu0
    %v751 = vadd.f32 %v727, %v750
    %752 = vdwg.mxu0
    %753 = vmatpush.msra.mxu0 0.0
    %754 = vmatpush.msra.mxu0 0.0
    %755 = vmatpush.msra.mxu0 0.0
    %756 = vmatpush.msra.mxu0 0.0
    %757 = vmatpush.msra.mxu0 0.0
    %758 = vmatpush.msra.mxu0 0.0
    %759 = vmatpush.msra.mxu0 0.0
    %760 = vmatpush.msra.mxu0 0.0
    %761 = vmatpush.msra.mxu0 0.0
    %762 = vmatpush.msra.mxu0 0.0
    %763 = vmatpush.msra.mxu0 0.0
    %764 = vmatpush.msra.mxu0 0.0
    %765 = vmatpush.msra.mxu0 0.0
    %766 = vmatpush.msra.mxu0 0.0
    %767 = vmatpush.msra.mxu0 0.0
    %v768 = vand.u32 %v75, 4294901760
    %769 = vmatpush.msra.mxu0 %v768
    %v770 = vand.u32 %v91, 4294901760
    %v771 = vsub.f32 %v91, %v770
    %v772 = vand.u32 %v771, 4294901760
    %773 = vmatmul.f32.gmra.mxu0 %v772
    %v774 = vpop.f32.mrf.mxu0
    %v775 = vadd.f32 %v751, %v774
    %776 = vdwg.mxu0
    %777 = vmatpush.msra.mxu0 0.0
    %778 = vmatpush.msra.mxu0 0.0
    %779 = vmatpush.msra.mxu0 0.0
    %780 = vmatpush.msra.mxu0 0.0
    %781 = vmatpush.msra.mxu0 0.0
    %782 = vmatpush.msra.mxu0 0.0
    %783 = vmatpush.msra.mxu0 0.0
    %784 = vmatpush.msra.mxu0 0.0
    %785 = vmatpush.msra.mxu0 0.0
    %786 = vmatpush.msra.mxu0 0.0
    %787 = vmatpush.msra.mxu0 0.0
    %788 = vmatpush.msra.mxu0 0.0
    %789 = vmatpush.msra.mxu0 0.0
    %790 = vmatpush.msra.mxu0 0.0
    %791 = vmatpush.msra.mxu0 0.0
    %v792 = vand.u32 %v75, 4294901760
    %v793 = vsub.f32 %v75, %v792
    %v794 = vand.u32 %v793, 4294901760
    %795 = vmatpush.msra.mxu0 %v794
    %v796 = vand.u32 %v91, 4294901760
    %797 = vmatmul.f32.gmra.mxu0 %v796
    %v798 = vpop.f32.mrf.mxu0
    %v799 = vadd.f32 %v775, %v798
    %800 = vdwg.mxu0
    %801 = vmatpush.msra.mxu0 0.0
    %802 = vmatpush.msra.mxu0 0.0
    %803 = vmatpush.msra.mxu0 0.0
    %804 = vmatpush.msra.mxu0 0.0
    %805 = vmatpush.msra.mxu0 0.0
    %806 = vmatpush.msra.mxu0 0.0
    %807 = vmatpush.msra.mxu0 0.0
    %808 = vmatpush.msra.mxu0 0.0
    %809 = vmatpush.msra.mxu0 0.0
    %810 = vmatpush.msra.mxu0 0.0
    %811 = vmatpush.msra.mxu0 0.0
    %812 = vmatpush.msra.mxu0 0.0
    %813 = vmatpush.msra.mxu0 0.0
    %814 = vmatpush.msra.mxu0 0.0
    %815 = vmatpush.msra.mxu0 0.0
    %v816 = vand.u32 %v75, 4294901760
    %817 = vmatpush.msra.mxu0 %v816
    %v818 = vand.u32 %v91, 4294901760
    %819 = vmatmul.f32.gmra.mxu0 %v818
    %v820 = vpop.f32.mrf.mxu0
    %v821 = vadd.f32 %v799, %v820
    %822 = vdwg.mxu0
    %823 = vmatpush.msra.mxu0 0.0
    %824 = vmatpush.msra.mxu0 0.0
    %825 = vmatpush.msra.mxu0 0.0
    %826 = vmatpush.msra.mxu0 0.0
    %827 = vmatpush.msra.mxu0 0.0
    %828 = vmatpush.msra.mxu0 0.0
    %829 = vmatpush.msra.mxu0 0.0
    %830 = vmatpush.msra.mxu0 0.0
    %831 = vmatpush.msra.mxu0 0.0
    %832 = vmatpush.msra.mxu0 0.0
    %833 = vmatpush.msra.mxu0 0.0
    %834 = vmatpush.msra.mxu0 0.0
    %835 = vmatpush.msra.mxu0 0.0
    %836 = vmatpush.msra.mxu0 0.0
    %837 = vmatpush.msra.mxu0 0.0
    %v838 = vand.u32 %v76, 4294901760
    %839 = vmatpush.msra.mxu0 %v838
    %v840 = vand.u32 %v91, 4294901760
    %v841 = vsub.f32 %v91, %v840
    %v842 = vand.u32 %v841, 4294901760
    %v843 = vsub.f32 %v841, %v842
    %v844 = vand.u32 %v843, 4294901760
    %845 = vmatmul.f32.gmra.mxu0 %v844
    %v846 = vpop.f32.mrf.mxu0
    %v847 = vadd.f32 0.0, %v846
    %848 = vdwg.mxu0
    %849 = vmatpush.msra.mxu0 0.0
    %850 = vmatpush.msra.mxu0 0.0
    %851 = vmatpush.msra.mxu0 0.0
    %852 = vmatpush.msra.mxu0 0.0
    %853 = vmatpush.msra.mxu0 0.0
    %854 = vmatpush.msra.mxu0 0.0
    %855 = vmatpush.msra.mxu0 0.0
    %856 = vmatpush.msra.mxu0 0.0
    %857 = vmatpush.msra.mxu0 0.0
    %858 = vmatpush.msra.mxu0 0.0
    %859 = vmatpush.msra.mxu0 0.0
    %860 = vmatpush.msra.mxu0 0.0
    %861 = vmatpush.msra.mxu0 0.0
    %862 = vmatpush.msra.mxu0 0.0
    %863 = vmatpush.msra.mxu0 0.0
    %v864 = vand.u32 %v76, 4294901760
    %v865 = vsub.f32 %v76, %v864
    %v866 = vand.u32 %v865, 4294901760
    %v867 = vsub.f32 %v865, %v866
    %v868 = vand.u32 %v867, 4294901760
    %869 = vmatpush.msra.mxu0 %v868
    %v870 = vand.u32 %v91, 4294901760
    %871 = vmatmul.f32.gmra.mxu0 %v870
    %v872 = vpop.f32.mrf.mxu0
    %v873 = vadd.f32 %v847, %v872
    %874 = vdwg.mxu0
    %875 = vmatpush.msra.mxu0 0.0
    %876 = vmatpush.msra.mxu0 0.0
    %877 = vmatpush.msra.mxu0 0.0
    %878 = vmatpush.msra.mxu0 0.0
    %879 = vmatpush.msra.mxu0 0.0
    %880 = vmatpush.msra.mxu0 0.0
    %881 = vmatpush.msra.mxu0 0.0
    %882 = vmatpush.msra.mxu0 0.0
    %883 = vmatpush.msra.mxu0 0.0
    %884 = vmatpush.msra.mxu0 0.0
    %885 = vmatpush.msra.mxu0 0.0
    %886 = vmatpush.msra.mxu0 0.0
    %887 = vmatpush.msra.mxu0 0.0
    %888 = vmatpush.msra.mxu0 0.0
    %889 = vmatpush.msra.mxu0 0.0
    %v890 = vand.u32 %v76, 4294901760
    %v891 = vsub.f32 %v76, %v890
    %892 = vmatpush.msra.mxu0 %v891
    %v893 = vand.u32 %v91, 4294901760
    %v894 = vsub.f32 %v91, %v893
    %895 = vmatmul.f32.gmra.mxu0 %v894
    %v896 = vpop.f32.mrf.mxu0
    %v897 = vadd.f32 %v873, %v896
    %898 = vdwg.mxu0
    %899 = vmatpush.msra.mxu0 0.0
    %900 = vmatpush.msra.mxu0 0.0
    %901 = vmatpush.msra.mxu0 0.0
    %902 = vmatpush.msra.mxu0 0.0
    %903 = vmatpush.msra.mxu0 0.0
    %904 = vmatpush.msra.mxu0 0.0
    %905 = vmatpush.msra.mxu0 0.0
    %906 = vmatpush.msra.mxu0 0.0
    %907 = vmatpush.msra.mxu0 0.0
    %908 = vmatpush.msra.mxu0 0.0
    %909 = vmatpush.msra.mxu0 0.0
    %910 = vmatpush.msra.mxu0 0.0
    %911 = vmatpush.msra.mxu0 0.0
    %912 = vmatpush.msra.mxu0 0.0
    %913 = vmatpush.msra.mxu0 0.0
    %v914 = vand.u32 %v76, 4294901760
    %915 = vmatpush.msra.mxu0 %v914
    %v916 = vand.u32 %v91, 4294901760
    %v917 = vsub.f32 %v91, %v916
    %v918 = vand.u32 %v917, 4294901760
    %919 = vmatmul.f32.gmra.mxu0 %v918
    %v920 = vpop.f32.mrf.mxu0
    %v921 = vadd.f32 %v897, %v920
    %922 = vdwg.mxu0
    %923 = vmatpush.msra.mxu0 0.0
    %924 = vmatpush.msra.mxu0 0.0
    %925 = vmatpush.msra.mxu0 0.0
    %926 = vmatpush.msra.mxu0 0.0
    %927 = vmatpush.msra.mxu0 0.0
    %928 = vmatpush.msra.mxu0 0.0
    %929 = vmatpush.msra.mxu0 0.0
    %930 = vmatpush.msra.mxu0 0.0
    %931 = vmatpush.msra.mxu0 0.0
    %932 = vmatpush.msra.mxu0 0.0
    %933 = vmatpush.msra.mxu0 0.0
    %934 = vmatpush.msra.mxu0 0.0
    %935 = vmatpush.msra.mxu0 0.0
    %936 = vmatpush.msra.mxu0 0.0
    %937 = vmatpush.msra.mxu0 0.0
    %v938 = vand.u32 %v76, 4294901760
    %v939 = vsub.f32 %v76, %v938
    %v940 = vand.u32 %v939, 4294901760
    %941 = vmatpush.msra.mxu0 %v940
    %v942 = vand.u32 %v91, 4294901760
    %943 = vmatmul.f32.gmra.mxu0 %v942
    %v944 = vpop.f32.mrf.mxu0
    %v945 = vadd.f32 %v921, %v944
    %946 = vdwg.mxu0
    %947 = vmatpush.msra.mxu0 0.0
    %948 = vmatpush.msra.mxu0 0.0
    %949 = vmatpush.msra.mxu0 0.0
    %950 = vmatpush.msra.mxu0 0.0
    %951 = vmatpush.msra.mxu0 0.0
    %952 = vmatpush.msra.mxu0 0.0
    %953 = vmatpush.msra.mxu0 0.0
    %954 = vmatpush.msra.mxu0 0.0
    %955 = vmatpush.msra.mxu0 0.0
    %956 = vmatpush.msra.mxu0 0.0
    %957 = vmatpush.msra.mxu0 0.0
    %958 = vmatpush.msra.mxu0 0.0
    %959 = vmatpush.msra.mxu0 0.0
    %960 = vmatpush.msra.mxu0 0.0
    %961 = vmatpush.msra.mxu0 0.0
    %v962 = vand.u32 %v76, 4294901760
    %963 = vmatpush.msra.mxu0 %v962
    %v964 = vand.u32 %v91, 4294901760
    %965 = vmatmul.f32.gmra.mxu0 %v964
    %v966 = vpop.f32.mrf.mxu0
    %v967 = vadd.f32 %v945, %v966
    %968 = vdwg.mxu0
    %969 = vmatpush.msra.mxu0 0.0
    %970 = vmatpush.msra.mxu0 0.0
    %971 = vmatpush.msra.mxu0 0.0
    %972 = vmatpush.msra.mxu0 0.0
    %973 = vmatpush.msra.mxu0 0.0
    %974 = vmatpush.msra.mxu0 0.0
    %975 = vmatpush.msra.mxu0 0.0
    %976 = vmatpush.msra.mxu0 0.0
    %977 = vmatpush.msra.mxu0 0.0
    %978 = vmatpush.msra.mxu0 0.0
    %979 = vmatpush.msra.mxu0 0.0
    %980 = vmatpush.msra.mxu0 0.0
    %981 = vmatpush.msra.mxu0 0.0
    %982 = vmatpush.msra.mxu0 0.0
    %983 = vmatpush.msra.mxu0 0.0
    %v984 = vand.u32 %v77, 4294901760
    %985 = vmatpush.msra.mxu0 %v984
    %v986 = vand.u32 %v91, 4294901760
    %v987 = vsub.f32 %v91, %v986
    %v988 = vand.u32 %v987, 4294901760
    %v989 = vsub.f32 %v987, %v988
    %v990 = vand.u32 %v989, 4294901760
    %991 = vmatmul.f32.gmra.mxu0 %v990
    %v992 = vpop.f32.mrf.mxu0
    %v993 = vadd.f32 0.0, %v992
    %994 = vdwg.mxu0
    %995 = vmatpush.msra.mxu0 0.0
    %996 = vmatpush.msra.mxu0 0.0
    %997 = vmatpush.msra.mxu0 0.0
    %998 = vmatpush.msra.mxu0 0.0
    %999 = vmatpush.msra.mxu0 0.0
    %1000 = vmatpush.msra.mxu0 0.0
    %1001 = vmatpush.msra.mxu0 0.0
    %1002 = vmatpush.msra.mxu0 0.0
    %1003 = vmatpush.msra.mxu0 0.0
    %1004 = vmatpush.msra.mxu0 0.0
    %1005 = vmatpush.msra.mxu0 0.0
    %1006 = vmatpush.msra.mxu0 0.0
    %1007 = vmatpush.msra.mxu0 0.0
    %1008 = vmatpush.msra.mxu0 0.0
    %1009 = vmatpush.msra.mxu0 0.0
    %v1010 = vand.u32 %v77, 4294901760
    %v1011 = vsub.f32 %v77, %v1010
    %v1012 = vand.u32 %v1011, 4294901760
    %v1013 = vsub.f32 %v1011, %v1012
    %v1014 = vand.u32 %v1013, 4294901760
    %1015 = vmatpush.msra.mxu0 %v1014
    %v1016 = vand.u32 %v91, 4294901760
    %1017 = vmatmul.f32.gmra.mxu0 %v1016
    %v1018 = vpop.f32.mrf.mxu0
    %v1019 = vadd.f32 %v993, %v1018
    %1020 = vdwg.mxu0
    %1021 = vmatpush.msra.mxu0 0.0
    %1022 = vmatpush.msra.mxu0 0.0
    %1023 = vmatpush.msra.mxu0 0.0
    %1024 = vmatpush.msra.mxu0 0.0
    %1025 = vmatpush.msra.mxu0 0.0
    %1026 = vmatpush.msra.mxu0 0.0
    %1027 = vmatpush.msra.mxu0 0.0
    %1028 = vmatpush.msra.mxu0 0.0
    %1029 = vmatpush.msra.mxu0 0.0
    %1030 = vmatpush.msra.mxu0 0.0
    %1031 = vmatpush.msra.mxu0 0.0
    %1032 = vmatpush.msra.mxu0 0.0
    %1033 = vmatpush.msra.mxu0 0.0
    %1034 = vmatpush.msra.mxu0 0.0
    %1035 = vmatpush.msra.mxu0 0.0
    %v1036 = vand.u32 %v77, 4294901760
    %v1037 = vsub.f32 %v77, %v1036
    %1038 = vmatpush.msra.mxu0 %v1037
    %v1039 = vand.u32 %v91, 4294901760
    %v1040 = vsub.f32 %v91, %v1039
    %1041 = vmatmul.f32.gmra.mxu0 %v1040
    %v1042 = vpop.f32.mrf.mxu0
    %v1043 = vadd.f32 %v1019, %v1042
    %1044 = vdwg.mxu0
    %1045 = vmatpush.msra.mxu0 0.0
    %1046 = vmatpush.msra.mxu0 0.0
    %1047 = vmatpush.msra.mxu0 0.0
    %1048 = vmatpush.msra.mxu0 0.0
    %1049 = vmatpush.msra.mxu0 0.0
    %1050 = vmatpush.msra.mxu0 0.0
    %1051 = vmatpush.msra.mxu0 0.0
    %1052 = vmatpush.msra.mxu0 0.0
    %1053 = vmatpush.msra.mxu0 0.0
    %1054 = vmatpush.msra.mxu0 0.0
    %1055 = vmatpush.msra.mxu0 0.0
    %1056 = vmatpush.msra.mxu0 0.0
    %1057 = vmatpush.msra.mxu0 0.0
    %1058 = vmatpush.msra.mxu0 0.0
    %1059 = vmatpush.msra.mxu0 0.0
    %v1060 = vand.u32 %v77, 4294901760
    %1061 = vmatpush.msra.mxu0 %v1060
    %v1062 = vand.u32 %v91, 4294901760
    %v1063 = vsub.f32 %v91, %v1062
    %v1064 = vand.u32 %v1063, 4294901760
    %1065 = vmatmul.f32.gmra.mxu0 %v1064
    %v1066 = vpop.f32.mrf.mxu0
    %v1067 = vadd.f32 %v1043, %v1066
    %1068 = vdwg.mxu0
    %1069 = vmatpush.msra.mxu0 0.0
    %1070 = vmatpush.msra.mxu0 0.0
    %1071 = vmatpush.msra.mxu0 0.0
    %1072 = vmatpush.msra.mxu0 0.0
    %1073 = vmatpush.msra.mxu0 0.0
    %1074 = vmatpush.msra.mxu0 0.0
    %1075 = vmatpush.msra.mxu0 0.0
    %1076 = vmatpush.msra.mxu0 0.0
    %1077 = vmatpush.msra.mxu0 0.0
    %1078 = vmatpush.msra.mxu0 0.0
    %1079 = vmatpush.msra.mxu0 0.0
    %1080 = vmatpush.msra.mxu0 0.0
    %1081 = vmatpush.msra.mxu0 0.0
    %1082 = vmatpush.msra.mxu0 0.0
    %1083 = vmatpush.msra.mxu0 0.0
    %v1084 = vand.u32 %v77, 4294901760
    %v1085 = vsub.f32 %v77, %v1084
    %v1086 = vand.u32 %v1085, 4294901760
    %1087 = vmatpush.msra.mxu0 %v1086
    %v1088 = vand.u32 %v91, 4294901760
    %1089 = vmatmul.f32.gmra.mxu0 %v1088
    %v1090 = vpop.f32.mrf.mxu0
    %v1091 = vadd.f32 %v1067, %v1090
    %1092 = vdwg.mxu0
    %1093 = vmatpush.msra.mxu0 0.0
    %1094 = vmatpush.msra.mxu0 0.0
    %1095 = vmatpush.msra.mxu0 0.0
    %1096 = vmatpush.msra.mxu0 0.0
    %1097 = vmatpush.msra.mxu0 0.0
    %1098 = vmatpush.msra.mxu0 0.0
    %1099 = vmatpush.msra.mxu0 0.0
    %1100 = vmatpush.msra.mxu0 0.0
    %1101 = vmatpush.msra.mxu0 0.0
    %1102 = vmatpush.msra.mxu0 0.0
    %1103 = vmatpush.msra.mxu0 0.0
    %1104 = vmatpush.msra.mxu0 0.0
    %1105 = vmatpush.msra.mxu0 0.0
    %1106 = vmatpush.msra.mxu0 0.0
    %1107 = vmatpush.msra.mxu0 0.0
    %v1108 = vand.u32 %v77, 4294901760
    %1109 = vmatpush.msra.mxu0 %v1108
    %v1110 = vand.u32 %v91, 4294901760
    %1111 = vmatmul.f32.gmra.mxu0 %v1110
    %v1112 = vpop.f32.mrf.mxu0
    %v1113 = vadd.f32 %v1091, %v1112
    %1114 = vdwg.mxu0
    %1115 = vmatpush.msra.mxu0 0.0
    %1116 = vmatpush.msra.mxu0 0.0
    %1117 = vmatpush.msra.mxu0 0.0
    %1118 = vmatpush.msra.mxu0 0.0
    %1119 = vmatpush.msra.mxu0 0.0
    %1120 = vmatpush.msra.mxu0 0.0
    %1121 = vmatpush.msra.mxu0 0.0
    %1122 = vmatpush.msra.mxu0 0.0
    %1123 = vmatpush.msra.mxu0 0.0
    %1124 = vmatpush.msra.mxu0 0.0
    %1125 = vmatpush.msra.mxu0 0.0
    %1126 = vmatpush.msra.mxu0 0.0
    %1127 = vmatpush.msra.mxu0 0.0
    %1128 = vmatpush.msra.mxu0 0.0
    %1129 = vmatpush.msra.mxu0 0.0
    %v1130 = vand.u32 %v78, 4294901760
    %1131 = vmatpush.msra.mxu0 %v1130
    %v1132 = vand.u32 %v91, 4294901760
    %v1133 = vsub.f32 %v91, %v1132
    %v1134 = vand.u32 %v1133, 4294901760
    %v1135 = vsub.f32 %v1133, %v1134
    %v1136 = vand.u32 %v1135, 4294901760
    %1137 = vmatmul.f32.gmra.mxu0 %v1136
    %v1138 = vpop.f32.mrf.mxu0
    %v1139 = vadd.f32 0.0, %v1138
    %1140 = vdwg.mxu0
    %1141 = vmatpush.msra.mxu0 0.0
    %1142 = vmatpush.msra.mxu0 0.0
    %1143 = vmatpush.msra.mxu0 0.0
    %1144 = vmatpush.msra.mxu0 0.0
    %1145 = vmatpush.msra.mxu0 0.0
    %1146 = vmatpush.msra.mxu0 0.0
    %1147 = vmatpush.msra.mxu0 0.0
    %1148 = vmatpush.msra.mxu0 0.0
    %1149 = vmatpush.msra.mxu0 0.0
    %1150 = vmatpush.msra.mxu0 0.0
    %1151 = vmatpush.msra.mxu0 0.0
    %1152 = vmatpush.msra.mxu0 0.0
    %1153 = vmatpush.msra.mxu0 0.0
    %1154 = vmatpush.msra.mxu0 0.0
    %1155 = vmatpush.msra.mxu0 0.0
    %v1156 = vand.u32 %v78, 4294901760
    %v1157 = vsub.f32 %v78, %v1156
    %v1158 = vand.u32 %v1157, 4294901760
    %v1159 = vsub.f32 %v1157, %v1158
    %v1160 = vand.u32 %v1159, 4294901760
    %1161 = vmatpush.msra.mxu0 %v1160
    %v1162 = vand.u32 %v91, 4294901760
    %1163 = vmatmul.f32.gmra.mxu0 %v1162
    %v1164 = vpop.f32.mrf.mxu0
    %v1165 = vadd.f32 %v1139, %v1164
    %1166 = vdwg.mxu0
    %1167 = vmatpush.msra.mxu0 0.0
    %1168 = vmatpush.msra.mxu0 0.0
    %1169 = vmatpush.msra.mxu0 0.0
    %1170 = vmatpush.msra.mxu0 0.0
    %1171 = vmatpush.msra.mxu0 0.0
    %1172 = vmatpush.msra.mxu0 0.0
    %1173 = vmatpush.msra.mxu0 0.0
    %1174 = vmatpush.msra.mxu0 0.0
    %1175 = vmatpush.msra.mxu0 0.0
    %1176 = vmatpush.msra.mxu0 0.0
    %1177 = vmatpush.msra.mxu0 0.0
    %1178 = vmatpush.msra.mxu0 0.0
    %1179 = vmatpush.msra.mxu0 0.0
    %1180 = vmatpush.msra.mxu0 0.0
    %1181 = vmatpush.msra.mxu0 0.0
    %v1182 = vand.u32 %v78, 4294901760
    %v1183 = vsub.f32 %v78, %v1182
    %1184 = vmatpush.msra.mxu0 %v1183
    %v1185 = vand.u32 %v91, 4294901760
    %v1186 = vsub.f32 %v91, %v1185
    %1187 = vmatmul.f32.gmra.mxu0 %v1186
    %v1188 = vpop.f32.mrf.mxu0
    %v1189 = vadd.f32 %v1165, %v1188
    %1190 = vdwg.mxu0
    %1191 = vmatpush.msra.mxu0 0.0
    %1192 = vmatpush.msra.mxu0 0.0
    %1193 = vmatpush.msra.mxu0 0.0
    %1194 = vmatpush.msra.mxu0 0.0
    %1195 = vmatpush.msra.mxu0 0.0
    %1196 = vmatpush.msra.mxu0 0.0
    %1197 = vmatpush.msra.mxu0 0.0
    %1198 = vmatpush.msra.mxu0 0.0
    %1199 = vmatpush.msra.mxu0 0.0
    %1200 = vmatpush.msra.mxu0 0.0
    %1201 = vmatpush.msra.mxu0 0.0
    %1202 = vmatpush.msra.mxu0 0.0
    %1203 = vmatpush.msra.mxu0 0.0
    %1204 = vmatpush.msra.mxu0 0.0
    %1205 = vmatpush.msra.mxu0 0.0
    %v1206 = vand.u32 %v78, 4294901760
    %1207 = vmatpush.msra.mxu0 %v1206
    %v1208 = vand.u32 %v91, 4294901760
    %v1209 = vsub.f32 %v91, %v1208
    %v1210 = vand.u32 %v1209, 4294901760
    %1211 = vmatmul.f32.gmra.mxu0 %v1210
    %v1212 = vpop.f32.mrf.mxu0
    %v1213 = vadd.f32 %v1189, %v1212
    %1214 = vdwg.mxu0
    %1215 = vmatpush.msra.mxu0 0.0
    %1216 = vmatpush.msra.mxu0 0.0
    %1217 = vmatpush.msra.mxu0 0.0
    %1218 = vmatpush.msra.mxu0 0.0
    %1219 = vmatpush.msra.mxu0 0.0
    %1220 = vmatpush.msra.mxu0 0.0
    %1221 = vmatpush.msra.mxu0 0.0
    %1222 = vmatpush.msra.mxu0 0.0
    %1223 = vmatpush.msra.mxu0 0.0
    %1224 = vmatpush.msra.mxu0 0.0
    %1225 = vmatpush.msra.mxu0 0.0
    %1226 = vmatpush.msra.mxu0 0.0
    %1227 = vmatpush.msra.mxu0 0.0
    %1228 = vmatpush.msra.mxu0 0.0
    %1229 = vmatpush.msra.mxu0 0.0
    %v1230 = vand.u32 %v78, 4294901760
    %v1231 = vsub.f32 %v78, %v1230
    %v1232 = vand.u32 %v1231, 4294901760
    %1233 = vmatpush.msra.mxu0 %v1232
    %v1234 = vand.u32 %v91, 4294901760
    %1235 = vmatmul.f32.gmra.mxu0 %v1234
    %v1236 = vpop.f32.mrf.mxu0
    %v1237 = vadd.f32 %v1213, %v1236
    %1238 = vdwg.mxu0
    %1239 = vmatpush.msra.mxu0 0.0
    %1240 = vmatpush.msra.mxu0 0.0
    %1241 = vmatpush.msra.mxu0 0.0
    %1242 = vmatpush.msra.mxu0 0.0
    %1243 = vmatpush.msra.mxu0 0.0
    %1244 = vmatpush.msra.mxu0 0.0
    %1245 = vmatpush.msra.mxu0 0.0
    %1246 = vmatpush.msra.mxu0 0.0
    %1247 = vmatpush.msra.mxu0 0.0
    %1248 = vmatpush.msra.mxu0 0.0
    %1249 = vmatpush.msra.mxu0 0.0
    %1250 = vmatpush.msra.mxu0 0.0
    %1251 = vmatpush.msra.mxu0 0.0
    %1252 = vmatpush.msra.mxu0 0.0
    %1253 = vmatpush.msra.mxu0 0.0
    %v1254 = vand.u32 %v78, 4294901760
    %1255 = vmatpush.msra.mxu0 %v1254
    %v1256 = vand.u32 %v91, 4294901760
    %1257 = vmatmul.f32.gmra.mxu0 %v1256
    %v1258 = vpop.f32.mrf.mxu0
    %v1259 = vadd.f32 %v1237, %v1258
    %1260 = vdwg.mxu0
    %v1261 = vsel %vm90, %v89, 0
    %1263 = vmatpush.msra.mxu0 0.0
    %1264 = vmatpush.msra.mxu0 0.0
    %1265 = vmatpush.msra.mxu0 0.0
    %1266 = vmatpush.msra.mxu0 0.0
    %1267 = vmatpush.msra.mxu0 0.0
    %1268 = vmatpush.msra.mxu0 0.0
    %1269 = vmatpush.msra.mxu0 0.0
    %1270 = vmatpush.msra.mxu0 0.0
    %1271 = vmatpush.msra.mxu0 0.0
    %1272 = vmatpush.msra.mxu0 0.0
    %1273 = vmatpush.msra.mxu0 0.0
    %1274 = vmatpush.msra.mxu0 0.0
    %1275 = vmatpush.msra.mxu0 0.0
    %1276 = vmatpush.msra.mxu0 0.0
    %1277 = vmatpush.msra.mxu0 0.0
    %v1278 = vand.u32 %v79, 4294901760
    %1279 = vmatpush.msra.mxu0 %v1278
    %v1280 = vand.u32 %v1261, 4294901760
    %v1281 = vsub.f32 %v1261, %v1280
    %v1282 = vand.u32 %v1281, 4294901760
    %v1283 = vsub.f32 %v1281, %v1282
    %v1284 = vand.u32 %v1283, 4294901760
    %1285 = vmatmul.f32.gmra.mxu0 %v1284
    %v1286 = vpop.f32.mrf.mxu0
    %v1287 = vadd.f32 0.0, %v1286
    %1288 = vdwg.mxu0
    %1289 = vmatpush.msra.mxu0 0.0
    %1290 = vmatpush.msra.mxu0 0.0
    %1291 = vmatpush.msra.mxu0 0.0
    %1292 = vmatpush.msra.mxu0 0.0
    %1293 = vmatpush.msra.mxu0 0.0
    %1294 = vmatpush.msra.mxu0 0.0
    %1295 = vmatpush.msra.mxu0 0.0
    %1296 = vmatpush.msra.mxu0 0.0
    %1297 = vmatpush.msra.mxu0 0.0
    %1298 = vmatpush.msra.mxu0 0.0
    %1299 = vmatpush.msra.mxu0 0.0
    %1300 = vmatpush.msra.mxu0 0.0
    %1301 = vmatpush.msra.mxu0 0.0
    %1302 = vmatpush.msra.mxu0 0.0
    %1303 = vmatpush.msra.mxu0 0.0
    %v1304 = vand.u32 %v79, 4294901760
    %v1305 = vsub.f32 %v79, %v1304
    %v1306 = vand.u32 %v1305, 4294901760
    %v1307 = vsub.f32 %v1305, %v1306
    %v1308 = vand.u32 %v1307, 4294901760
    %1309 = vmatpush.msra.mxu0 %v1308
    %v1310 = vand.u32 %v1261, 4294901760
    %1311 = vmatmul.f32.gmra.mxu0 %v1310
    %v1312 = vpop.f32.mrf.mxu0
    %v1313 = vadd.f32 %v1287, %v1312
    %1314 = vdwg.mxu0
    %1315 = vmatpush.msra.mxu0 0.0
    %1316 = vmatpush.msra.mxu0 0.0
    %1317 = vmatpush.msra.mxu0 0.0
    %1318 = vmatpush.msra.mxu0 0.0
    %1319 = vmatpush.msra.mxu0 0.0
    %1320 = vmatpush.msra.mxu0 0.0
    %1321 = vmatpush.msra.mxu0 0.0
    %1322 = vmatpush.msra.mxu0 0.0
    %1323 = vmatpush.msra.mxu0 0.0
    %1324 = vmatpush.msra.mxu0 0.0
    %1325 = vmatpush.msra.mxu0 0.0
    %1326 = vmatpush.msra.mxu0 0.0
    %1327 = vmatpush.msra.mxu0 0.0
    %1328 = vmatpush.msra.mxu0 0.0
    %1329 = vmatpush.msra.mxu0 0.0
    %v1330 = vand.u32 %v79, 4294901760
    %v1331 = vsub.f32 %v79, %v1330
    %1332 = vmatpush.msra.mxu0 %v1331
    %v1333 = vand.u32 %v1261, 4294901760
    %v1334 = vsub.f32 %v1261, %v1333
    %1335 = vmatmul.f32.gmra.mxu0 %v1334
    %v1336 = vpop.f32.mrf.mxu0
    %v1337 = vadd.f32 %v1313, %v1336
    %1338 = vdwg.mxu0
    %1339 = vmatpush.msra.mxu0 0.0
    %1340 = vmatpush.msra.mxu0 0.0
    %1341 = vmatpush.msra.mxu0 0.0
    %1342 = vmatpush.msra.mxu0 0.0
    %1343 = vmatpush.msra.mxu0 0.0
    %1344 = vmatpush.msra.mxu0 0.0
    %1345 = vmatpush.msra.mxu0 0.0
    %1346 = vmatpush.msra.mxu0 0.0
    %1347 = vmatpush.msra.mxu0 0.0
    %1348 = vmatpush.msra.mxu0 0.0
    %1349 = vmatpush.msra.mxu0 0.0
    %1350 = vmatpush.msra.mxu0 0.0
    %1351 = vmatpush.msra.mxu0 0.0
    %1352 = vmatpush.msra.mxu0 0.0
    %1353 = vmatpush.msra.mxu0 0.0
    %v1354 = vand.u32 %v79, 4294901760
    %1355 = vmatpush.msra.mxu0 %v1354
    %v1356 = vand.u32 %v1261, 4294901760
    %v1357 = vsub.f32 %v1261, %v1356
    %v1358 = vand.u32 %v1357, 4294901760
    %1359 = vmatmul.f32.gmra.mxu0 %v1358
    %v1360 = vpop.f32.mrf.mxu0
    %v1361 = vadd.f32 %v1337, %v1360
    %1362 = vdwg.mxu0
    %1363 = vmatpush.msra.mxu0 0.0
    %1364 = vmatpush.msra.mxu0 0.0
    %1365 = vmatpush.msra.mxu0 0.0
    %1366 = vmatpush.msra.mxu0 0.0
    %1367 = vmatpush.msra.mxu0 0.0
    %1368 = vmatpush.msra.mxu0 0.0
    %1369 = vmatpush.msra.mxu0 0.0
    %1370 = vmatpush.msra.mxu0 0.0
    %1371 = vmatpush.msra.mxu0 0.0
    %1372 = vmatpush.msra.mxu0 0.0
    %1373 = vmatpush.msra.mxu0 0.0
    %1374 = vmatpush.msra.mxu0 0.0
    %1375 = vmatpush.msra.mxu0 0.0
    %1376 = vmatpush.msra.mxu0 0.0
    %1377 = vmatpush.msra.mxu0 0.0
    %v1378 = vand.u32 %v79, 4294901760
    %v1379 = vsub.f32 %v79, %v1378
    %v1380 = vand.u32 %v1379, 4294901760
    %1381 = vmatpush.msra.mxu0 %v1380
    %v1382 = vand.u32 %v1261, 4294901760
    %1383 = vmatmul.f32.gmra.mxu0 %v1382
    %v1384 = vpop.f32.mrf.mxu0
    %v1385 = vadd.f32 %v1361, %v1384
    %1386 = vdwg.mxu0
    %1387 = vmatpush.msra.mxu0 0.0
    %1388 = vmatpush.msra.mxu0 0.0
    %1389 = vmatpush.msra.mxu0 0.0
    %1390 = vmatpush.msra.mxu0 0.0
    %1391 = vmatpush.msra.mxu0 0.0
    %1392 = vmatpush.msra.mxu0 0.0
    %1393 = vmatpush.msra.mxu0 0.0
    %1394 = vmatpush.msra.mxu0 0.0
    %1395 = vmatpush.msra.mxu0 0.0
    %1396 = vmatpush.msra.mxu0 0.0
    %1397 = vmatpush.msra.mxu0 0.0
    %1398 = vmatpush.msra.mxu0 0.0
    %1399 = vmatpush.msra.mxu0 0.0
    %1400 = vmatpush.msra.mxu0 0.0
    %1401 = vmatpush.msra.mxu0 0.0
    %v1402 = vand.u32 %v79, 4294901760
    %1403 = vmatpush.msra.mxu0 %v1402
    %v1404 = vand.u32 %v1261, 4294901760
    %1405 = vmatmul.f32.gmra.mxu0 %v1404
    %v1406 = vpop.f32.mrf.mxu0
    %v1407 = vadd.f32 %v1385, %v1406
    %1408 = vdwg.mxu0
    %1409 = vmatpush.msra.mxu0 0.0
    %1410 = vmatpush.msra.mxu0 0.0
    %1411 = vmatpush.msra.mxu0 0.0
    %1412 = vmatpush.msra.mxu0 0.0
    %1413 = vmatpush.msra.mxu0 0.0
    %1414 = vmatpush.msra.mxu0 0.0
    %1415 = vmatpush.msra.mxu0 0.0
    %1416 = vmatpush.msra.mxu0 0.0
    %1417 = vmatpush.msra.mxu0 0.0
    %1418 = vmatpush.msra.mxu0 0.0
    %1419 = vmatpush.msra.mxu0 0.0
    %1420 = vmatpush.msra.mxu0 0.0
    %1421 = vmatpush.msra.mxu0 0.0
    %1422 = vmatpush.msra.mxu0 0.0
    %1423 = vmatpush.msra.mxu0 0.0
    %v1424 = vand.u32 %v80, 4294901760
    %1425 = vmatpush.msra.mxu0 %v1424
    %v1426 = vand.u32 %v1261, 4294901760
    %v1427 = vsub.f32 %v1261, %v1426
    %v1428 = vand.u32 %v1427, 4294901760
    %v1429 = vsub.f32 %v1427, %v1428
    %v1430 = vand.u32 %v1429, 4294901760
    %1431 = vmatmul.f32.gmra.mxu0 %v1430
    %v1432 = vpop.f32.mrf.mxu0
    %v1433 = vadd.f32 0.0, %v1432
    %1434 = vdwg.mxu0
    %1435 = vmatpush.msra.mxu0 0.0
    %1436 = vmatpush.msra.mxu0 0.0
    %1437 = vmatpush.msra.mxu0 0.0
    %1438 = vmatpush.msra.mxu0 0.0
    %1439 = vmatpush.msra.mxu0 0.0
    %1440 = vmatpush.msra.mxu0 0.0
    %1441 = vmatpush.msra.mxu0 0.0
    %1442 = vmatpush.msra.mxu0 0.0
    %1443 = vmatpush.msra.mxu0 0.0
    %1444 = vmatpush.msra.mxu0 0.0
    %1445 = vmatpush.msra.mxu0 0.0
    %1446 = vmatpush.msra.mxu0 0.0
    %1447 = vmatpush.msra.mxu0 0.0
    %1448 = vmatpush.msra.mxu0 0.0
    %1449 = vmatpush.msra.mxu0 0.0
    %v1450 = vand.u32 %v80, 4294901760
    %v1451 = vsub.f32 %v80, %v1450
    %v1452 = vand.u32 %v1451, 4294901760
    %v1453 = vsub.f32 %v1451, %v1452
    %v1454 = vand.u32 %v1453, 4294901760
    %1455 = vmatpush.msra.mxu0 %v1454
    %v1456 = vand.u32 %v1261, 4294901760
    %1457 = vmatmul.f32.gmra.mxu0 %v1456
    %v1458 = vpop.f32.mrf.mxu0
    %v1459 = vadd.f32 %v1433, %v1458
    %1460 = vdwg.mxu0
    %1461 = vmatpush.msra.mxu0 0.0
    %1462 = vmatpush.msra.mxu0 0.0
    %1463 = vmatpush.msra.mxu0 0.0
    %1464 = vmatpush.msra.mxu0 0.0
    %1465 = vmatpush.msra.mxu0 0.0
    %1466 = vmatpush.msra.mxu0 0.0
    %1467 = vmatpush.msra.mxu0 0.0
    %1468 = vmatpush.msra.mxu0 0.0
    %1469 = vmatpush.msra.mxu0 0.0
    %1470 = vmatpush.msra.mxu0 0.0
    %1471 = vmatpush.msra.mxu0 0.0
    %1472 = vmatpush.msra.mxu0 0.0
    %1473 = vmatpush.msra.mxu0 0.0
    %1474 = vmatpush.msra.mxu0 0.0
    %1475 = vmatpush.msra.mxu0 0.0
    %v1476 = vand.u32 %v80, 4294901760
    %v1477 = vsub.f32 %v80, %v1476
    %1478 = vmatpush.msra.mxu0 %v1477
    %v1479 = vand.u32 %v1261, 4294901760
    %v1480 = vsub.f32 %v1261, %v1479
    %1481 = vmatmul.f32.gmra.mxu0 %v1480
    %v1482 = vpop.f32.mrf.mxu0
    %v1483 = vadd.f32 %v1459, %v1482
    %1484 = vdwg.mxu0
    %1485 = vmatpush.msra.mxu0 0.0
    %1486 = vmatpush.msra.mxu0 0.0
    %1487 = vmatpush.msra.mxu0 0.0
    %1488 = vmatpush.msra.mxu0 0.0
    %1489 = vmatpush.msra.mxu0 0.0
    %1490 = vmatpush.msra.mxu0 0.0
    %1491 = vmatpush.msra.mxu0 0.0
    %1492 = vmatpush.msra.mxu0 0.0
    %1493 = vmatpush.msra.mxu0 0.0
    %1494 = vmatpush.msra.mxu0 0.0
    %1495 = vmatpush.msra.mxu0 0.0
    %1496 = vmatpush.msra.mxu0 0.0
    %1497 = vmatpush.msra.mxu0 0.0
    %1498 = vmatpush.msra.mxu0 0.0
    %1499 = vmatpush.msra.mxu0 0.0
    %v1500 = vand.u32 %v80, 4294901760
    %1501 = vmatpush.msra.mxu0 %v1500
    %v1502 = vand.u32 %v1261, 4294901760
    %v1503 = vsub.f32 %v1261, %v1502
    %v1504 = vand.u32 %v1503, 4294901760
    %1505 = vmatmul.f32.gmra.mxu0 %v1504
    %v1506 = vpop.f32.mrf.mxu0
    %v1507 = vadd.f32 %v1483, %v1506
    %1508 = vdwg.mxu0
    %1509 = vmatpush.msra.mxu0 0.0
    %1510 = vmatpush.msra.mxu0 0.0
    %1511 = vmatpush.msra.mxu0 0.0
    %1512 = vmatpush.msra.mxu0 0.0
    %1513 = vmatpush.msra.mxu0 0.0
    %1514 = vmatpush.msra.mxu0 0.0
    %1515 = vmatpush.msra.mxu0 0.0
    %1516 = vmatpush.msra.mxu0 0.0
    %1517 = vmatpush.msra.mxu0 0.0
    %1518 = vmatpush.msra.mxu0 0.0
    %1519 = vmatpush.msra.mxu0 0.0
    %1520 = vmatpush.msra.mxu0 0.0
    %1521 = vmatpush.msra.mxu0 0.0
    %1522 = vmatpush.msra.mxu0 0.0
    %1523 = vmatpush.msra.mxu0 0.0
    %v1524 = vand.u32 %v80, 4294901760
    %v1525 = vsub.f32 %v80, %v1524
    %v1526 = vand.u32 %v1525, 4294901760
    %1527 = vmatpush.msra.mxu0 %v1526
    %v1528 = vand.u32 %v1261, 4294901760
    %1529 = vmatmul.f32.gmra.mxu0 %v1528
    %v1530 = vpop.f32.mrf.mxu0
    %v1531 = vadd.f32 %v1507, %v1530
    %1532 = vdwg.mxu0
    %1533 = vmatpush.msra.mxu0 0.0
    %1534 = vmatpush.msra.mxu0 0.0
    %1535 = vmatpush.msra.mxu0 0.0
    %1536 = vmatpush.msra.mxu0 0.0
    %1537 = vmatpush.msra.mxu0 0.0
    %1538 = vmatpush.msra.mxu0 0.0
    %1539 = vmatpush.msra.mxu0 0.0
    %1540 = vmatpush.msra.mxu0 0.0
    %1541 = vmatpush.msra.mxu0 0.0
    %1542 = vmatpush.msra.mxu0 0.0
    %1543 = vmatpush.msra.mxu0 0.0
    %1544 = vmatpush.msra.mxu0 0.0
    %1545 = vmatpush.msra.mxu0 0.0
    %1546 = vmatpush.msra.mxu0 0.0
    %1547 = vmatpush.msra.mxu0 0.0
    %v1548 = vand.u32 %v80, 4294901760
    %1549 = vmatpush.msra.mxu0 %v1548
    %v1550 = vand.u32 %v1261, 4294901760
    %1551 = vmatmul.f32.gmra.mxu0 %v1550
    %v1552 = vpop.f32.mrf.mxu0
    %v1553 = vadd.f32 %v1531, %v1552
    %1554 = vdwg.mxu0
    %1555 = vmatpush.msra.mxu0 0.0
    %1556 = vmatpush.msra.mxu0 0.0
    %1557 = vmatpush.msra.mxu0 0.0
    %1558 = vmatpush.msra.mxu0 0.0
    %1559 = vmatpush.msra.mxu0 0.0
    %1560 = vmatpush.msra.mxu0 0.0
    %1561 = vmatpush.msra.mxu0 0.0
    %1562 = vmatpush.msra.mxu0 0.0
    %1563 = vmatpush.msra.mxu0 0.0
    %1564 = vmatpush.msra.mxu0 0.0
    %1565 = vmatpush.msra.mxu0 0.0
    %1566 = vmatpush.msra.mxu0 0.0
    %1567 = vmatpush.msra.mxu0 0.0
    %1568 = vmatpush.msra.mxu0 0.0
    %1569 = vmatpush.msra.mxu0 0.0
    %v1570 = vand.u32 %v81, 4294901760
    %1571 = vmatpush.msra.mxu0 %v1570
    %v1572 = vand.u32 %v1261, 4294901760
    %v1573 = vsub.f32 %v1261, %v1572
    %v1574 = vand.u32 %v1573, 4294901760
    %v1575 = vsub.f32 %v1573, %v1574
    %v1576 = vand.u32 %v1575, 4294901760
    %1577 = vmatmul.f32.gmra.mxu0 %v1576
    %v1578 = vpop.f32.mrf.mxu0
    %v1579 = vadd.f32 0.0, %v1578
    %1580 = vdwg.mxu0
    %1581 = vmatpush.msra.mxu0 0.0
    %1582 = vmatpush.msra.mxu0 0.0
    %1583 = vmatpush.msra.mxu0 0.0
    %1584 = vmatpush.msra.mxu0 0.0
    %1585 = vmatpush.msra.mxu0 0.0
    %1586 = vmatpush.msra.mxu0 0.0
    %1587 = vmatpush.msra.mxu0 0.0
    %1588 = vmatpush.msra.mxu0 0.0
    %1589 = vmatpush.msra.mxu0 0.0
    %1590 = vmatpush.msra.mxu0 0.0
    %1591 = vmatpush.msra.mxu0 0.0
    %1592 = vmatpush.msra.mxu0 0.0
    %1593 = vmatpush.msra.mxu0 0.0
    %1594 = vmatpush.msra.mxu0 0.0
    %1595 = vmatpush.msra.mxu0 0.0
    %v1596 = vand.u32 %v81, 4294901760
    %v1597 = vsub.f32 %v81, %v1596
    %v1598 = vand.u32 %v1597, 4294901760
    %v1599 = vsub.f32 %v1597, %v1598
    %v1600 = vand.u32 %v1599, 4294901760
    %1601 = vmatpush.msra.mxu0 %v1600
    %v1602 = vand.u32 %v1261, 4294901760
    %1603 = vmatmul.f32.gmra.mxu0 %v1602
    %v1604 = vpop.f32.mrf.mxu0
    %v1605 = vadd.f32 %v1579, %v1604
    %1606 = vdwg.mxu0
    %1607 = vmatpush.msra.mxu0 0.0
    %1608 = vmatpush.msra.mxu0 0.0
    %1609 = vmatpush.msra.mxu0 0.0
    %1610 = vmatpush.msra.mxu0 0.0
    %1611 = vmatpush.msra.mxu0 0.0
    %1612 = vmatpush.msra.mxu0 0.0
    %1613 = vmatpush.msra.mxu0 0.0
    %1614 = vmatpush.msra.mxu0 0.0
    %1615 = vmatpush.msra.mxu0 0.0
    %1616 = vmatpush.msra.mxu0 0.0
    %1617 = vmatpush.msra.mxu0 0.0
    %1618 = vmatpush.msra.mxu0 0.0
    %1619 = vmatpush.msra.mxu0 0.0
    %1620 = vmatpush.msra.mxu0 0.0
    %1621 = vmatpush.msra.mxu0 0.0
    %v1622 = vand.u32 %v81, 4294901760
    %v1623 = vsub.f32 %v81, %v1622
    %1624 = vmatpush.msra.mxu0 %v1623
    %v1625 = vand.u32 %v1261, 4294901760
    %v1626 = vsub.f32 %v1261, %v1625
    %1627 = vmatmul.f32.gmra.mxu0 %v1626
    %v1628 = vpop.f32.mrf.mxu0
    %v1629 = vadd.f32 %v1605, %v1628
    %1630 = vdwg.mxu0
    %1631 = vmatpush.msra.mxu0 0.0
    %1632 = vmatpush.msra.mxu0 0.0
    %1633 = vmatpush.msra.mxu0 0.0
    %1634 = vmatpush.msra.mxu0 0.0
    %1635 = vmatpush.msra.mxu0 0.0
    %1636 = vmatpush.msra.mxu0 0.0
    %1637 = vmatpush.msra.mxu0 0.0
    %1638 = vmatpush.msra.mxu0 0.0
    %1639 = vmatpush.msra.mxu0 0.0
    %1640 = vmatpush.msra.mxu0 0.0
    %1641 = vmatpush.msra.mxu0 0.0
    %1642 = vmatpush.msra.mxu0 0.0
    %1643 = vmatpush.msra.mxu0 0.0
    %1644 = vmatpush.msra.mxu0 0.0
    %1645 = vmatpush.msra.mxu0 0.0
    %v1646 = vand.u32 %v81, 4294901760
    %1647 = vmatpush.msra.mxu0 %v1646
    %v1648 = vand.u32 %v1261, 4294901760
    %v1649 = vsub.f32 %v1261, %v1648
    %v1650 = vand.u32 %v1649, 4294901760
    %1651 = vmatmul.f32.gmra.mxu0 %v1650
    %v1652 = vpop.f32.mrf.mxu0
    %v1653 = vadd.f32 %v1629, %v1652
    %1654 = vdwg.mxu0
    %1655 = vmatpush.msra.mxu0 0.0
    %1656 = vmatpush.msra.mxu0 0.0
    %1657 = vmatpush.msra.mxu0 0.0
    %1658 = vmatpush.msra.mxu0 0.0
    %1659 = vmatpush.msra.mxu0 0.0
    %1660 = vmatpush.msra.mxu0 0.0
    %1661 = vmatpush.msra.mxu0 0.0
    %1662 = vmatpush.msra.mxu0 0.0
    %1663 = vmatpush.msra.mxu0 0.0
    %1664 = vmatpush.msra.mxu0 0.0
    %1665 = vmatpush.msra.mxu0 0.0
    %1666 = vmatpush.msra.mxu0 0.0
    %1667 = vmatpush.msra.mxu0 0.0
    %1668 = vmatpush.msra.mxu0 0.0
    %1669 = vmatpush.msra.mxu0 0.0
    %v1670 = vand.u32 %v81, 4294901760
    %v1671 = vsub.f32 %v81, %v1670
    %v1672 = vand.u32 %v1671, 4294901760
    %1673 = vmatpush.msra.mxu0 %v1672
    %v1674 = vand.u32 %v1261, 4294901760
    %1675 = vmatmul.f32.gmra.mxu0 %v1674
    %v1676 = vpop.f32.mrf.mxu0
    %v1677 = vadd.f32 %v1653, %v1676
    %1678 = vdwg.mxu0
    %1679 = vmatpush.msra.mxu0 0.0
    %1680 = vmatpush.msra.mxu0 0.0
    %1681 = vmatpush.msra.mxu0 0.0
    %1682 = vmatpush.msra.mxu0 0.0
    %1683 = vmatpush.msra.mxu0 0.0
    %1684 = vmatpush.msra.mxu0 0.0
    %1685 = vmatpush.msra.mxu0 0.0
    %1686 = vmatpush.msra.mxu0 0.0
    %1687 = vmatpush.msra.mxu0 0.0
    %1688 = vmatpush.msra.mxu0 0.0
    %1689 = vmatpush.msra.mxu0 0.0
    %1690 = vmatpush.msra.mxu0 0.0
    %1691 = vmatpush.msra.mxu0 0.0
    %1692 = vmatpush.msra.mxu0 0.0
    %1693 = vmatpush.msra.mxu0 0.0
    %v1694 = vand.u32 %v81, 4294901760
    %1695 = vmatpush.msra.mxu0 %v1694
    %v1696 = vand.u32 %v1261, 4294901760
    %1697 = vmatmul.f32.gmra.mxu0 %v1696
    %v1698 = vpop.f32.mrf.mxu0
    %v1699 = vadd.f32 %v1677, %v1698
    %1700 = vdwg.mxu0
    %1701 = vmatpush.msra.mxu0 0.0
    %1702 = vmatpush.msra.mxu0 0.0
    %1703 = vmatpush.msra.mxu0 0.0
    %1704 = vmatpush.msra.mxu0 0.0
    %1705 = vmatpush.msra.mxu0 0.0
    %1706 = vmatpush.msra.mxu0 0.0
    %1707 = vmatpush.msra.mxu0 0.0
    %1708 = vmatpush.msra.mxu0 0.0
    %1709 = vmatpush.msra.mxu0 0.0
    %1710 = vmatpush.msra.mxu0 0.0
    %1711 = vmatpush.msra.mxu0 0.0
    %1712 = vmatpush.msra.mxu0 0.0
    %1713 = vmatpush.msra.mxu0 0.0
    %1714 = vmatpush.msra.mxu0 0.0
    %1715 = vmatpush.msra.mxu0 0.0
    %v1716 = vand.u32 %v82, 4294901760
    %1717 = vmatpush.msra.mxu0 %v1716
    %v1718 = vand.u32 %v1261, 4294901760
    %v1719 = vsub.f32 %v1261, %v1718
    %v1720 = vand.u32 %v1719, 4294901760
    %v1721 = vsub.f32 %v1719, %v1720
    %v1722 = vand.u32 %v1721, 4294901760
    %1723 = vmatmul.f32.gmra.mxu0 %v1722
    %v1724 = vpop.f32.mrf.mxu0
    %v1725 = vadd.f32 0.0, %v1724
    %1726 = vdwg.mxu0
    %1727 = vmatpush.msra.mxu0 0.0
    %1728 = vmatpush.msra.mxu0 0.0
    %1729 = vmatpush.msra.mxu0 0.0
    %1730 = vmatpush.msra.mxu0 0.0
    %1731 = vmatpush.msra.mxu0 0.0
    %1732 = vmatpush.msra.mxu0 0.0
    %1733 = vmatpush.msra.mxu0 0.0
    %1734 = vmatpush.msra.mxu0 0.0
    %1735 = vmatpush.msra.mxu0 0.0
    %1736 = vmatpush.msra.mxu0 0.0
    %1737 = vmatpush.msra.mxu0 0.0
    %1738 = vmatpush.msra.mxu0 0.0
    %1739 = vmatpush.msra.mxu0 0.0
    %1740 = vmatpush.msra.mxu0 0.0
    %1741 = vmatpush.msra.mxu0 0.0
    %v1742 = vand.u32 %v82, 4294901760
    %v1743 = vsub.f32 %v82, %v1742
    %v1744 = vand.u32 %v1743, 4294901760
    %v1745 = vsub.f32 %v1743, %v1744
    %v1746 = vand.u32 %v1745, 4294901760
    %1747 = vmatpush.msra.mxu0 %v1746
    %v1748 = vand.u32 %v1261, 4294901760
    %1749 = vmatmul.f32.gmra.mxu0 %v1748
    %v1750 = vpop.f32.mrf.mxu0
    %v1751 = vadd.f32 %v1725, %v1750
    %1752 = vdwg.mxu0
    %1753 = vmatpush.msra.mxu0 0.0
    %1754 = vmatpush.msra.mxu0 0.0
    %1755 = vmatpush.msra.mxu0 0.0
    %1756 = vmatpush.msra.mxu0 0.0
    %1757 = vmatpush.msra.mxu0 0.0
    %1758 = vmatpush.msra.mxu0 0.0
    %1759 = vmatpush.msra.mxu0 0.0
    %1760 = vmatpush.msra.mxu0 0.0
    %1761 = vmatpush.msra.mxu0 0.0
    %1762 = vmatpush.msra.mxu0 0.0
    %1763 = vmatpush.msra.mxu0 0.0
    %1764 = vmatpush.msra.mxu0 0.0
    %1765 = vmatpush.msra.mxu0 0.0
    %1766 = vmatpush.msra.mxu0 0.0
    %1767 = vmatpush.msra.mxu0 0.0
    %v1768 = vand.u32 %v82, 4294901760
    %v1769 = vsub.f32 %v82, %v1768
    %1770 = vmatpush.msra.mxu0 %v1769
    %v1771 = vand.u32 %v1261, 4294901760
    %v1772 = vsub.f32 %v1261, %v1771
    %1773 = vmatmul.f32.gmra.mxu0 %v1772
    %v1774 = vpop.f32.mrf.mxu0
    %v1775 = vadd.f32 %v1751, %v1774
    %1776 = vdwg.mxu0
    %1777 = vmatpush.msra.mxu0 0.0
    %1778 = vmatpush.msra.mxu0 0.0
    %1779 = vmatpush.msra.mxu0 0.0
    %1780 = vmatpush.msra.mxu0 0.0
    %1781 = vmatpush.msra.mxu0 0.0
    %1782 = vmatpush.msra.mxu0 0.0
    %1783 = vmatpush.msra.mxu0 0.0
    %1784 = vmatpush.msra.mxu0 0.0
    %1785 = vmatpush.msra.mxu0 0.0
    %1786 = vmatpush.msra.mxu0 0.0
    %1787 = vmatpush.msra.mxu0 0.0
    %1788 = vmatpush.msra.mxu0 0.0
    %1789 = vmatpush.msra.mxu0 0.0
    %1790 = vmatpush.msra.mxu0 0.0
    %1791 = vmatpush.msra.mxu0 0.0
    %v1792 = vand.u32 %v82, 4294901760
    %1793 = vmatpush.msra.mxu0 %v1792
    %v1794 = vand.u32 %v1261, 4294901760
    %v1795 = vsub.f32 %v1261, %v1794
    %v1796 = vand.u32 %v1795, 4294901760
    %1797 = vmatmul.f32.gmra.mxu0 %v1796
    %v1798 = vpop.f32.mrf.mxu0
    %v1799 = vadd.f32 %v1775, %v1798
    %1800 = vdwg.mxu0
    %1801 = vmatpush.msra.mxu0 0.0
    %1802 = vmatpush.msra.mxu0 0.0
    %1803 = vmatpush.msra.mxu0 0.0
    %1804 = vmatpush.msra.mxu0 0.0
    %1805 = vmatpush.msra.mxu0 0.0
    %1806 = vmatpush.msra.mxu0 0.0
    %1807 = vmatpush.msra.mxu0 0.0
    %1808 = vmatpush.msra.mxu0 0.0
    %1809 = vmatpush.msra.mxu0 0.0
    %1810 = vmatpush.msra.mxu0 0.0
    %1811 = vmatpush.msra.mxu0 0.0
    %1812 = vmatpush.msra.mxu0 0.0
    %1813 = vmatpush.msra.mxu0 0.0
    %1814 = vmatpush.msra.mxu0 0.0
    %1815 = vmatpush.msra.mxu0 0.0
    %v1816 = vand.u32 %v82, 4294901760
    %v1817 = vsub.f32 %v82, %v1816
    %v1818 = vand.u32 %v1817, 4294901760
    %1819 = vmatpush.msra.mxu0 %v1818
    %v1820 = vand.u32 %v1261, 4294901760
    %1821 = vmatmul.f32.gmra.mxu0 %v1820
    %v1822 = vpop.f32.mrf.mxu0
    %v1823 = vadd.f32 %v1799, %v1822
    %1824 = vdwg.mxu0
    %1825 = vmatpush.msra.mxu0 0.0
    %1826 = vmatpush.msra.mxu0 0.0
    %1827 = vmatpush.msra.mxu0 0.0
    %1828 = vmatpush.msra.mxu0 0.0
    %1829 = vmatpush.msra.mxu0 0.0
    %1830 = vmatpush.msra.mxu0 0.0
    %1831 = vmatpush.msra.mxu0 0.0
    %1832 = vmatpush.msra.mxu0 0.0
    %1833 = vmatpush.msra.mxu0 0.0
    %1834 = vmatpush.msra.mxu0 0.0
    %1835 = vmatpush.msra.mxu0 0.0
    %1836 = vmatpush.msra.mxu0 0.0
    %1837 = vmatpush.msra.mxu0 0.0
    %1838 = vmatpush.msra.mxu0 0.0
    %1839 = vmatpush.msra.mxu0 0.0
    %v1840 = vand.u32 %v82, 4294901760
    %1841 = vmatpush.msra.mxu0 %v1840
    %v1842 = vand.u32 %v1261, 4294901760
    %1843 = vmatmul.f32.gmra.mxu0 %v1842
    %v1844 = vpop.f32.mrf.mxu0
    %v1845 = vadd.f32 %v1823, %v1844
    %1846 = vdwg.mxu0
    %1847 = vmatpush.msra.mxu0 0.0
    %1848 = vmatpush.msra.mxu0 0.0
    %1849 = vmatpush.msra.mxu0 0.0
    %1850 = vmatpush.msra.mxu0 0.0
    %1851 = vmatpush.msra.mxu0 0.0
    %1852 = vmatpush.msra.mxu0 0.0
    %1853 = vmatpush.msra.mxu0 0.0
    %1854 = vmatpush.msra.mxu0 0.0
    %1855 = vmatpush.msra.mxu0 0.0
    %1856 = vmatpush.msra.mxu0 0.0
    %1857 = vmatpush.msra.mxu0 0.0
    %1858 = vmatpush.msra.mxu0 0.0
    %1859 = vmatpush.msra.mxu0 0.0
    %1860 = vmatpush.msra.mxu0 0.0
    %1861 = vmatpush.msra.mxu0 0.0
    %v1862 = vand.u32 %v83, 4294901760
    %1863 = vmatpush.msra.mxu0 %v1862
    %v1864 = vand.u32 %v1261, 4294901760
    %v1865 = vsub.f32 %v1261, %v1864
    %v1866 = vand.u32 %v1865, 4294901760
    %v1867 = vsub.f32 %v1865, %v1866
    %v1868 = vand.u32 %v1867, 4294901760
    %1869 = vmatmul.f32.gmra.mxu0 %v1868
    %v1870 = vpop.f32.mrf.mxu0
    %v1871 = vadd.f32 0.0, %v1870
    %1872 = vdwg.mxu0
    %1873 = vmatpush.msra.mxu0 0.0
    %1874 = vmatpush.msra.mxu0 0.0
    %1875 = vmatpush.msra.mxu0 0.0
    %1876 = vmatpush.msra.mxu0 0.0
    %1877 = vmatpush.msra.mxu0 0.0
    %1878 = vmatpush.msra.mxu0 0.0
    %1879 = vmatpush.msra.mxu0 0.0
    %1880 = vmatpush.msra.mxu0 0.0
    %1881 = vmatpush.msra.mxu0 0.0
    %1882 = vmatpush.msra.mxu0 0.0
    %1883 = vmatpush.msra.mxu0 0.0
    %1884 = vmatpush.msra.mxu0 0.0
    %1885 = vmatpush.msra.mxu0 0.0
    %1886 = vmatpush.msra.mxu0 0.0
    %1887 = vmatpush.msra.mxu0 0.0
    %v1888 = vand.u32 %v83, 4294901760
    %v1889 = vsub.f32 %v83, %v1888
    %v1890 = vand.u32 %v1889, 4294901760
    %v1891 = vsub.f32 %v1889, %v1890
    %v1892 = vand.u32 %v1891, 4294901760
    %1893 = vmatpush.msra.mxu0 %v1892
    %v1894 = vand.u32 %v1261, 4294901760
    %1895 = vmatmul.f32.gmra.mxu0 %v1894
    %v1896 = vpop.f32.mrf.mxu0
    %v1897 = vadd.f32 %v1871, %v1896
    %1898 = vdwg.mxu0
    %1899 = vmatpush.msra.mxu0 0.0
    %1900 = vmatpush.msra.mxu0 0.0
    %1901 = vmatpush.msra.mxu0 0.0
    %1902 = vmatpush.msra.mxu0 0.0
    %1903 = vmatpush.msra.mxu0 0.0
    %1904 = vmatpush.msra.mxu0 0.0
    %1905 = vmatpush.msra.mxu0 0.0
    %1906 = vmatpush.msra.mxu0 0.0
    %1907 = vmatpush.msra.mxu0 0.0
    %1908 = vmatpush.msra.mxu0 0.0
    %1909 = vmatpush.msra.mxu0 0.0
    %1910 = vmatpush.msra.mxu0 0.0
    %1911 = vmatpush.msra.mxu0 0.0
    %1912 = vmatpush.msra.mxu0 0.0
    %1913 = vmatpush.msra.mxu0 0.0
    %v1914 = vand.u32 %v83, 4294901760
    %v1915 = vsub.f32 %v83, %v1914
    %1916 = vmatpush.msra.mxu0 %v1915
    %v1917 = vand.u32 %v1261, 4294901760
    %v1918 = vsub.f32 %v1261, %v1917
    %1919 = vmatmul.f32.gmra.mxu0 %v1918
    %v1920 = vpop.f32.mrf.mxu0
    %v1921 = vadd.f32 %v1897, %v1920
    %1922 = vdwg.mxu0
    %1923 = vmatpush.msra.mxu0 0.0
    %1924 = vmatpush.msra.mxu0 0.0
    %1925 = vmatpush.msra.mxu0 0.0
    %1926 = vmatpush.msra.mxu0 0.0
    %1927 = vmatpush.msra.mxu0 0.0
    %1928 = vmatpush.msra.mxu0 0.0
    %1929 = vmatpush.msra.mxu0 0.0
    %1930 = vmatpush.msra.mxu0 0.0
    %1931 = vmatpush.msra.mxu0 0.0
    %1932 = vmatpush.msra.mxu0 0.0
    %1933 = vmatpush.msra.mxu0 0.0
    %1934 = vmatpush.msra.mxu0 0.0
    %1935 = vmatpush.msra.mxu0 0.0
    %1936 = vmatpush.msra.mxu0 0.0
    %1937 = vmatpush.msra.mxu0 0.0
    %v1938 = vand.u32 %v83, 4294901760
    %1939 = vmatpush.msra.mxu0 %v1938
    %v1940 = vand.u32 %v1261, 4294901760
    %v1941 = vsub.f32 %v1261, %v1940
    %v1942 = vand.u32 %v1941, 4294901760
    %1943 = vmatmul.f32.gmra.mxu0 %v1942
    %v1944 = vpop.f32.mrf.mxu0
    %v1945 = vadd.f32 %v1921, %v1944
    %1946 = vdwg.mxu0
    %1947 = vmatpush.msra.mxu0 0.0
    %1948 = vmatpush.msra.mxu0 0.0
    %1949 = vmatpush.msra.mxu0 0.0
    %1950 = vmatpush.msra.mxu0 0.0
    %1951 = vmatpush.msra.mxu0 0.0
    %1952 = vmatpush.msra.mxu0 0.0
    %1953 = vmatpush.msra.mxu0 0.0
    %1954 = vmatpush.msra.mxu0 0.0
    %1955 = vmatpush.msra.mxu0 0.0
    %1956 = vmatpush.msra.mxu0 0.0
    %1957 = vmatpush.msra.mxu0 0.0
    %1958 = vmatpush.msra.mxu0 0.0
    %1959 = vmatpush.msra.mxu0 0.0
    %1960 = vmatpush.msra.mxu0 0.0
    %1961 = vmatpush.msra.mxu0 0.0
    %v1962 = vand.u32 %v83, 4294901760
    %v1963 = vsub.f32 %v83, %v1962
    %v1964 = vand.u32 %v1963, 4294901760
    %1965 = vmatpush.msra.mxu0 %v1964
    %v1966 = vand.u32 %v1261, 4294901760
    %1967 = vmatmul.f32.gmra.mxu0 %v1966
    %v1968 = vpop.f32.mrf.mxu0
    %v1969 = vadd.f32 %v1945, %v1968
    %1970 = vdwg.mxu0
    %1971 = vmatpush.msra.mxu0 0.0
    %1972 = vmatpush.msra.mxu0 0.0
    %1973 = vmatpush.msra.mxu0 0.0
    %1974 = vmatpush.msra.mxu0 0.0
    %1975 = vmatpush.msra.mxu0 0.0
    %1976 = vmatpush.msra.mxu0 0.0
    %1977 = vmatpush.msra.mxu0 0.0
    %1978 = vmatpush.msra.mxu0 0.0
    %1979 = vmatpush.msra.mxu0 0.0
    %1980 = vmatpush.msra.mxu0 0.0
    %1981 = vmatpush.msra.mxu0 0.0
    %1982 = vmatpush.msra.mxu0 0.0
    %1983 = vmatpush.msra.mxu0 0.0
    %1984 = vmatpush.msra.mxu0 0.0
    %1985 = vmatpush.msra.mxu0 0.0
    %v1986 = vand.u32 %v83, 4294901760
    %1987 = vmatpush.msra.mxu0 %v1986
    %v1988 = vand.u32 %v1261, 4294901760
    %1989 = vmatmul.f32.gmra.mxu0 %v1988
    %v1990 = vpop.f32.mrf.mxu0
    %v1991 = vadd.f32 %v1969, %v1990
    %1992 = vdwg.mxu0
    %1993 = vmatpush.msra.mxu0 0.0
    %1994 = vmatpush.msra.mxu0 0.0
    %1995 = vmatpush.msra.mxu0 0.0
    %1996 = vmatpush.msra.mxu0 0.0
    %1997 = vmatpush.msra.mxu0 0.0
    %1998 = vmatpush.msra.mxu0 0.0
    %1999 = vmatpush.msra.mxu0 0.0
    %2000 = vmatpush.msra.mxu0 0.0
    %2001 = vmatpush.msra.mxu0 0.0
    %2002 = vmatpush.msra.mxu0 0.0
    %2003 = vmatpush.msra.mxu0 0.0
    %2004 = vmatpush.msra.mxu0 0.0
    %2005 = vmatpush.msra.mxu0 0.0
    %2006 = vmatpush.msra.mxu0 0.0
    %2007 = vmatpush.msra.mxu0 0.0
    %v2008 = vand.u32 %v84, 4294901760
    %2009 = vmatpush.msra.mxu0 %v2008
    %v2010 = vand.u32 %v1261, 4294901760
    %v2011 = vsub.f32 %v1261, %v2010
    %v2012 = vand.u32 %v2011, 4294901760
    %v2013 = vsub.f32 %v2011, %v2012
    %v2014 = vand.u32 %v2013, 4294901760
    %2015 = vmatmul.f32.gmra.mxu0 %v2014
    %v2016 = vpop.f32.mrf.mxu0
    %v2017 = vadd.f32 0.0, %v2016
    %2018 = vdwg.mxu0
    %2019 = vmatpush.msra.mxu0 0.0
    %2020 = vmatpush.msra.mxu0 0.0
    %2021 = vmatpush.msra.mxu0 0.0
    %2022 = vmatpush.msra.mxu0 0.0
    %2023 = vmatpush.msra.mxu0 0.0
    %2024 = vmatpush.msra.mxu0 0.0
    %2025 = vmatpush.msra.mxu0 0.0
    %2026 = vmatpush.msra.mxu0 0.0
    %2027 = vmatpush.msra.mxu0 0.0
    %2028 = vmatpush.msra.mxu0 0.0
    %2029 = vmatpush.msra.mxu0 0.0
    %2030 = vmatpush.msra.mxu0 0.0
    %2031 = vmatpush.msra.mxu0 0.0
    %2032 = vmatpush.msra.mxu0 0.0
    %2033 = vmatpush.msra.mxu0 0.0
    %v2034 = vand.u32 %v84, 4294901760
    %v2035 = vsub.f32 %v84, %v2034
    %v2036 = vand.u32 %v2035, 4294901760
    %v2037 = vsub.f32 %v2035, %v2036
    %v2038 = vand.u32 %v2037, 4294901760
    %2039 = vmatpush.msra.mxu0 %v2038
    %v2040 = vand.u32 %v1261, 4294901760
    %2041 = vmatmul.f32.gmra.mxu0 %v2040
    %v2042 = vpop.f32.mrf.mxu0
    %v2043 = vadd.f32 %v2017, %v2042
    %2044 = vdwg.mxu0
    %2045 = vmatpush.msra.mxu0 0.0
    %2046 = vmatpush.msra.mxu0 0.0
    %2047 = vmatpush.msra.mxu0 0.0
    %2048 = vmatpush.msra.mxu0 0.0
    %2049 = vmatpush.msra.mxu0 0.0
    %2050 = vmatpush.msra.mxu0 0.0
    %2051 = vmatpush.msra.mxu0 0.0
    %2052 = vmatpush.msra.mxu0 0.0
    %2053 = vmatpush.msra.mxu0 0.0
    %2054 = vmatpush.msra.mxu0 0.0
    %2055 = vmatpush.msra.mxu0 0.0
    %2056 = vmatpush.msra.mxu0 0.0
    %2057 = vmatpush.msra.mxu0 0.0
    %2058 = vmatpush.msra.mxu0 0.0
    %2059 = vmatpush.msra.mxu0 0.0
    %v2060 = vand.u32 %v84, 4294901760
    %v2061 = vsub.f32 %v84, %v2060
    %2062 = vmatpush.msra.mxu0 %v2061
    %v2063 = vand.u32 %v1261, 4294901760
    %v2064 = vsub.f32 %v1261, %v2063
    %2065 = vmatmul.f32.gmra.mxu0 %v2064
    %v2066 = vpop.f32.mrf.mxu0
    %v2067 = vadd.f32 %v2043, %v2066
    %2068 = vdwg.mxu0
    %2069 = vmatpush.msra.mxu0 0.0
    %2070 = vmatpush.msra.mxu0 0.0
    %2071 = vmatpush.msra.mxu0 0.0
    %2072 = vmatpush.msra.mxu0 0.0
    %2073 = vmatpush.msra.mxu0 0.0
    %2074 = vmatpush.msra.mxu0 0.0
    %2075 = vmatpush.msra.mxu0 0.0
    %2076 = vmatpush.msra.mxu0 0.0
    %2077 = vmatpush.msra.mxu0 0.0
    %2078 = vmatpush.msra.mxu0 0.0
    %2079 = vmatpush.msra.mxu0 0.0
    %2080 = vmatpush.msra.mxu0 0.0
    %2081 = vmatpush.msra.mxu0 0.0
    %2082 = vmatpush.msra.mxu0 0.0
    %2083 = vmatpush.msra.mxu0 0.0
    %v2084 = vand.u32 %v84, 4294901760
    %2085 = vmatpush.msra.mxu0 %v2084
    %v2086 = vand.u32 %v1261, 4294901760
    %v2087 = vsub.f32 %v1261, %v2086
    %v2088 = vand.u32 %v2087, 4294901760
    %2089 = vmatmul.f32.gmra.mxu0 %v2088
    %v2090 = vpop.f32.mrf.mxu0
    %v2091 = vadd.f32 %v2067, %v2090
    %2092 = vdwg.mxu0
    %2093 = vmatpush.msra.mxu0 0.0
    %2094 = vmatpush.msra.mxu0 0.0
    %2095 = vmatpush.msra.mxu0 0.0
    %2096 = vmatpush.msra.mxu0 0.0
    %2097 = vmatpush.msra.mxu0 0.0
    %2098 = vmatpush.msra.mxu0 0.0
    %2099 = vmatpush.msra.mxu0 0.0
    %2100 = vmatpush.msra.mxu0 0.0
    %2101 = vmatpush.msra.mxu0 0.0
    %2102 = vmatpush.msra.mxu0 0.0
    %2103 = vmatpush.msra.mxu0 0.0
    %2104 = vmatpush.msra.mxu0 0.0
    %2105 = vmatpush.msra.mxu0 0.0
    %2106 = vmatpush.msra.mxu0 0.0
    %2107 = vmatpush.msra.mxu0 0.0
    %v2108 = vand.u32 %v84, 4294901760
    %v2109 = vsub.f32 %v84, %v2108
    %v2110 = vand.u32 %v2109, 4294901760
    %2111 = vmatpush.msra.mxu0 %v2110
    %v2112 = vand.u32 %v1261, 4294901760
    %2113 = vmatmul.f32.gmra.mxu0 %v2112
    %v2114 = vpop.f32.mrf.mxu0
    %v2115 = vadd.f32 %v2091, %v2114
    %2116 = vdwg.mxu0
    %2117 = vmatpush.msra.mxu0 0.0
    %2118 = vmatpush.msra.mxu0 0.0
    %2119 = vmatpush.msra.mxu0 0.0
    %2120 = vmatpush.msra.mxu0 0.0
    %2121 = vmatpush.msra.mxu0 0.0
    %2122 = vmatpush.msra.mxu0 0.0
    %2123 = vmatpush.msra.mxu0 0.0
    %2124 = vmatpush.msra.mxu0 0.0
    %2125 = vmatpush.msra.mxu0 0.0
    %2126 = vmatpush.msra.mxu0 0.0
    %2127 = vmatpush.msra.mxu0 0.0
    %2128 = vmatpush.msra.mxu0 0.0
    %2129 = vmatpush.msra.mxu0 0.0
    %2130 = vmatpush.msra.mxu0 0.0
    %2131 = vmatpush.msra.mxu0 0.0
    %v2132 = vand.u32 %v84, 4294901760
    %2133 = vmatpush.msra.mxu0 %v2132
    %v2134 = vand.u32 %v1261, 4294901760
    %2135 = vmatmul.f32.gmra.mxu0 %v2134
    %v2136 = vpop.f32.mrf.mxu0
    %v2137 = vadd.f32 %v2115, %v2136
    %2138 = vdwg.mxu0
    %2139 = vmatpush.msra.mxu0 0.0
    %2140 = vmatpush.msra.mxu0 0.0
    %2141 = vmatpush.msra.mxu0 0.0
    %2142 = vmatpush.msra.mxu0 0.0
    %2143 = vmatpush.msra.mxu0 0.0
    %2144 = vmatpush.msra.mxu0 0.0
    %2145 = vmatpush.msra.mxu0 0.0
    %2146 = vmatpush.msra.mxu0 0.0
    %2147 = vmatpush.msra.mxu0 0.0
    %2148 = vmatpush.msra.mxu0 0.0
    %2149 = vmatpush.msra.mxu0 0.0
    %2150 = vmatpush.msra.mxu0 0.0
    %2151 = vmatpush.msra.mxu0 0.0
    %2152 = vmatpush.msra.mxu0 0.0
    %2153 = vmatpush.msra.mxu0 0.0
    %v2154 = vand.u32 %v85, 4294901760
    %2155 = vmatpush.msra.mxu0 %v2154
    %v2156 = vand.u32 %v1261, 4294901760
    %v2157 = vsub.f32 %v1261, %v2156
    %v2158 = vand.u32 %v2157, 4294901760
    %v2159 = vsub.f32 %v2157, %v2158
    %v2160 = vand.u32 %v2159, 4294901760
    %2161 = vmatmul.f32.gmra.mxu0 %v2160
    %v2162 = vpop.f32.mrf.mxu0
    %v2163 = vadd.f32 0.0, %v2162
    %2164 = vdwg.mxu0
    %2165 = vmatpush.msra.mxu0 0.0
    %2166 = vmatpush.msra.mxu0 0.0
    %2167 = vmatpush.msra.mxu0 0.0
    %2168 = vmatpush.msra.mxu0 0.0
    %2169 = vmatpush.msra.mxu0 0.0
    %2170 = vmatpush.msra.mxu0 0.0
    %2171 = vmatpush.msra.mxu0 0.0
    %2172 = vmatpush.msra.mxu0 0.0
    %2173 = vmatpush.msra.mxu0 0.0
    %2174 = vmatpush.msra.mxu0 0.0
    %2175 = vmatpush.msra.mxu0 0.0
    %2176 = vmatpush.msra.mxu0 0.0
    %2177 = vmatpush.msra.mxu0 0.0
    %2178 = vmatpush.msra.mxu0 0.0
    %2179 = vmatpush.msra.mxu0 0.0
    %v2180 = vand.u32 %v85, 4294901760
    %v2181 = vsub.f32 %v85, %v2180
    %v2182 = vand.u32 %v2181, 4294901760
    %v2183 = vsub.f32 %v2181, %v2182
    %v2184 = vand.u32 %v2183, 4294901760
    %2185 = vmatpush.msra.mxu0 %v2184
    %v2186 = vand.u32 %v1261, 4294901760
    %2187 = vmatmul.f32.gmra.mxu0 %v2186
    %v2188 = vpop.f32.mrf.mxu0
    %v2189 = vadd.f32 %v2163, %v2188
    %2190 = vdwg.mxu0
    %2191 = vmatpush.msra.mxu0 0.0
    %2192 = vmatpush.msra.mxu0 0.0
    %2193 = vmatpush.msra.mxu0 0.0
    %2194 = vmatpush.msra.mxu0 0.0
    %2195 = vmatpush.msra.mxu0 0.0
    %2196 = vmatpush.msra.mxu0 0.0
    %2197 = vmatpush.msra.mxu0 0.0
    %2198 = vmatpush.msra.mxu0 0.0
    %2199 = vmatpush.msra.mxu0 0.0
    %2200 = vmatpush.msra.mxu0 0.0
    %2201 = vmatpush.msra.mxu0 0.0
    %2202 = vmatpush.msra.mxu0 0.0
    %2203 = vmatpush.msra.mxu0 0.0
    %2204 = vmatpush.msra.mxu0 0.0
    %2205 = vmatpush.msra.mxu0 0.0
    %v2206 = vand.u32 %v85, 4294901760
    %v2207 = vsub.f32 %v85, %v2206
    %2208 = vmatpush.msra.mxu0 %v2207
    %v2209 = vand.u32 %v1261, 4294901760
    %v2210 = vsub.f32 %v1261, %v2209
    %2211 = vmatmul.f32.gmra.mxu0 %v2210
    %v2212 = vpop.f32.mrf.mxu0
    %v2213 = vadd.f32 %v2189, %v2212
    %2214 = vdwg.mxu0
    %2215 = vmatpush.msra.mxu0 0.0
    %2216 = vmatpush.msra.mxu0 0.0
    %2217 = vmatpush.msra.mxu0 0.0
    %2218 = vmatpush.msra.mxu0 0.0
    %2219 = vmatpush.msra.mxu0 0.0
    %2220 = vmatpush.msra.mxu0 0.0
    %2221 = vmatpush.msra.mxu0 0.0
    %2222 = vmatpush.msra.mxu0 0.0
    %2223 = vmatpush.msra.mxu0 0.0
    %2224 = vmatpush.msra.mxu0 0.0
    %2225 = vmatpush.msra.mxu0 0.0
    %2226 = vmatpush.msra.mxu0 0.0
    %2227 = vmatpush.msra.mxu0 0.0
    %2228 = vmatpush.msra.mxu0 0.0
    %2229 = vmatpush.msra.mxu0 0.0
    %v2230 = vand.u32 %v85, 4294901760
    %2231 = vmatpush.msra.mxu0 %v2230
    %v2232 = vand.u32 %v1261, 4294901760
    %v2233 = vsub.f32 %v1261, %v2232
    %v2234 = vand.u32 %v2233, 4294901760
    %2235 = vmatmul.f32.gmra.mxu0 %v2234
    %v2236 = vpop.f32.mrf.mxu0
    %v2237 = vadd.f32 %v2213, %v2236
    %2238 = vdwg.mxu0
    %2239 = vmatpush.msra.mxu0 0.0
    %2240 = vmatpush.msra.mxu0 0.0
    %2241 = vmatpush.msra.mxu0 0.0
    %2242 = vmatpush.msra.mxu0 0.0
    %2243 = vmatpush.msra.mxu0 0.0
    %2244 = vmatpush.msra.mxu0 0.0
    %2245 = vmatpush.msra.mxu0 0.0
    %2246 = vmatpush.msra.mxu0 0.0
    %2247 = vmatpush.msra.mxu0 0.0
    %2248 = vmatpush.msra.mxu0 0.0
    %2249 = vmatpush.msra.mxu0 0.0
    %2250 = vmatpush.msra.mxu0 0.0
    %2251 = vmatpush.msra.mxu0 0.0
    %2252 = vmatpush.msra.mxu0 0.0
    %2253 = vmatpush.msra.mxu0 0.0
    %v2254 = vand.u32 %v85, 4294901760
    %v2255 = vsub.f32 %v85, %v2254
    %v2256 = vand.u32 %v2255, 4294901760
    %2257 = vmatpush.msra.mxu0 %v2256
    %v2258 = vand.u32 %v1261, 4294901760
    %2259 = vmatmul.f32.gmra.mxu0 %v2258
    %v2260 = vpop.f32.mrf.mxu0
    %v2261 = vadd.f32 %v2237, %v2260
    %2262 = vdwg.mxu0
    %2263 = vmatpush.msra.mxu0 0.0
    %2264 = vmatpush.msra.mxu0 0.0
    %2265 = vmatpush.msra.mxu0 0.0
    %2266 = vmatpush.msra.mxu0 0.0
    %2267 = vmatpush.msra.mxu0 0.0
    %2268 = vmatpush.msra.mxu0 0.0
    %2269 = vmatpush.msra.mxu0 0.0
    %2270 = vmatpush.msra.mxu0 0.0
    %2271 = vmatpush.msra.mxu0 0.0
    %2272 = vmatpush.msra.mxu0 0.0
    %2273 = vmatpush.msra.mxu0 0.0
    %2274 = vmatpush.msra.mxu0 0.0
    %2275 = vmatpush.msra.mxu0 0.0
    %2276 = vmatpush.msra.mxu0 0.0
    %2277 = vmatpush.msra.mxu0 0.0
    %v2278 = vand.u32 %v85, 4294901760
    %2279 = vmatpush.msra.mxu0 %v2278
    %v2280 = vand.u32 %v1261, 4294901760
    %2281 = vmatmul.f32.gmra.mxu0 %v2280
    %v2282 = vpop.f32.mrf.mxu0
    %v2283 = vadd.f32 %v2261, %v2282
    %2284 = vdwg.mxu0
    %2285 = vmatpush.msra.mxu0 0.0
    %2286 = vmatpush.msra.mxu0 0.0
    %2287 = vmatpush.msra.mxu0 0.0
    %2288 = vmatpush.msra.mxu0 0.0
    %2289 = vmatpush.msra.mxu0 0.0
    %2290 = vmatpush.msra.mxu0 0.0
    %2291 = vmatpush.msra.mxu0 0.0
    %2292 = vmatpush.msra.mxu0 0.0
    %2293 = vmatpush.msra.mxu0 0.0
    %2294 = vmatpush.msra.mxu0 0.0
    %2295 = vmatpush.msra.mxu0 0.0
    %2296 = vmatpush.msra.mxu0 0.0
    %2297 = vmatpush.msra.mxu0 0.0
    %2298 = vmatpush.msra.mxu0 0.0
    %2299 = vmatpush.msra.mxu0 0.0
    %v2300 = vand.u32 %v86, 4294901760
    %2301 = vmatpush.msra.mxu0 %v2300
    %v2302 = vand.u32 %v1261, 4294901760
    %v2303 = vsub.f32 %v1261, %v2302
    %v2304 = vand.u32 %v2303, 4294901760
    %v2305 = vsub.f32 %v2303, %v2304
    %v2306 = vand.u32 %v2305, 4294901760
    %2307 = vmatmul.f32.gmra.mxu0 %v2306
    %v2308 = vpop.f32.mrf.mxu0
    %v2309 = vadd.f32 0.0, %v2308
    %2310 = vdwg.mxu0
    %2311 = vmatpush.msra.mxu0 0.0
    %2312 = vmatpush.msra.mxu0 0.0
    %2313 = vmatpush.msra.mxu0 0.0
    %2314 = vmatpush.msra.mxu0 0.0
    %2315 = vmatpush.msra.mxu0 0.0
    %2316 = vmatpush.msra.mxu0 0.0
    %2317 = vmatpush.msra.mxu0 0.0
    %2318 = vmatpush.msra.mxu0 0.0
    %2319 = vmatpush.msra.mxu0 0.0
    %2320 = vmatpush.msra.mxu0 0.0
    %2321 = vmatpush.msra.mxu0 0.0
    %2322 = vmatpush.msra.mxu0 0.0
    %2323 = vmatpush.msra.mxu0 0.0
    %2324 = vmatpush.msra.mxu0 0.0
    %2325 = vmatpush.msra.mxu0 0.0
    %v2326 = vand.u32 %v86, 4294901760
    %v2327 = vsub.f32 %v86, %v2326
    %v2328 = vand.u32 %v2327, 4294901760
    %v2329 = vsub.f32 %v2327, %v2328
    %v2330 = vand.u32 %v2329, 4294901760
    %2331 = vmatpush.msra.mxu0 %v2330
    %v2332 = vand.u32 %v1261, 4294901760
    %2333 = vmatmul.f32.gmra.mxu0 %v2332
    %v2334 = vpop.f32.mrf.mxu0
    %v2335 = vadd.f32 %v2309, %v2334
    %2336 = vdwg.mxu0
    %2337 = vmatpush.msra.mxu0 0.0
    %2338 = vmatpush.msra.mxu0 0.0
    %2339 = vmatpush.msra.mxu0 0.0
    %2340 = vmatpush.msra.mxu0 0.0
    %2341 = vmatpush.msra.mxu0 0.0
    %2342 = vmatpush.msra.mxu0 0.0
    %2343 = vmatpush.msra.mxu0 0.0
    %2344 = vmatpush.msra.mxu0 0.0
    %2345 = vmatpush.msra.mxu0 0.0
    %2346 = vmatpush.msra.mxu0 0.0
    %2347 = vmatpush.msra.mxu0 0.0
    %2348 = vmatpush.msra.mxu0 0.0
    %2349 = vmatpush.msra.mxu0 0.0
    %2350 = vmatpush.msra.mxu0 0.0
    %2351 = vmatpush.msra.mxu0 0.0
    %v2352 = vand.u32 %v86, 4294901760
    %v2353 = vsub.f32 %v86, %v2352
    %2354 = vmatpush.msra.mxu0 %v2353
    %v2355 = vand.u32 %v1261, 4294901760
    %v2356 = vsub.f32 %v1261, %v2355
    %2357 = vmatmul.f32.gmra.mxu0 %v2356
    %v2358 = vpop.f32.mrf.mxu0
    %v2359 = vadd.f32 %v2335, %v2358
    %2360 = vdwg.mxu0
    %2361 = vmatpush.msra.mxu0 0.0
    %2362 = vmatpush.msra.mxu0 0.0
    %2363 = vmatpush.msra.mxu0 0.0
    %2364 = vmatpush.msra.mxu0 0.0
    %2365 = vmatpush.msra.mxu0 0.0
    %2366 = vmatpush.msra.mxu0 0.0
    %2367 = vmatpush.msra.mxu0 0.0
    %2368 = vmatpush.msra.mxu0 0.0
    %2369 = vmatpush.msra.mxu0 0.0
    %2370 = vmatpush.msra.mxu0 0.0
    %2371 = vmatpush.msra.mxu0 0.0
    %2372 = vmatpush.msra.mxu0 0.0
    %2373 = vmatpush.msra.mxu0 0.0
    %2374 = vmatpush.msra.mxu0 0.0
    %2375 = vmatpush.msra.mxu0 0.0
    %v2376 = vand.u32 %v86, 4294901760
    %2377 = vmatpush.msra.mxu0 %v2376
    %v2378 = vand.u32 %v1261, 4294901760
    %v2379 = vsub.f32 %v1261, %v2378
    %v2380 = vand.u32 %v2379, 4294901760
    %2381 = vmatmul.f32.gmra.mxu0 %v2380
    %v2382 = vpop.f32.mrf.mxu0
    %v2383 = vadd.f32 %v2359, %v2382
    %2384 = vdwg.mxu0
    %2385 = vmatpush.msra.mxu0 0.0
    %2386 = vmatpush.msra.mxu0 0.0
    %2387 = vmatpush.msra.mxu0 0.0
    %2388 = vmatpush.msra.mxu0 0.0
    %2389 = vmatpush.msra.mxu0 0.0
    %2390 = vmatpush.msra.mxu0 0.0
    %2391 = vmatpush.msra.mxu0 0.0
    %2392 = vmatpush.msra.mxu0 0.0
    %2393 = vmatpush.msra.mxu0 0.0
    %2394 = vmatpush.msra.mxu0 0.0
    %2395 = vmatpush.msra.mxu0 0.0
    %2396 = vmatpush.msra.mxu0 0.0
    %2397 = vmatpush.msra.mxu0 0.0
    %2398 = vmatpush.msra.mxu0 0.0
    %2399 = vmatpush.msra.mxu0 0.0
    %v2400 = vand.u32 %v86, 4294901760
    %v2401 = vsub.f32 %v86, %v2400
    %v2402 = vand.u32 %v2401, 4294901760
    %2403 = vmatpush.msra.mxu0 %v2402
    %v2404 = vand.u32 %v1261, 4294901760
    %2405 = vmatmul.f32.gmra.mxu0 %v2404
    %v2406 = vpop.f32.mrf.mxu0
    %v2407 = vadd.f32 %v2383, %v2406
    %2408 = vdwg.mxu0
    %2409 = vmatpush.msra.mxu0 0.0
    %2410 = vmatpush.msra.mxu0 0.0
    %2411 = vmatpush.msra.mxu0 0.0
    %2412 = vmatpush.msra.mxu0 0.0
    %2413 = vmatpush.msra.mxu0 0.0
    %2414 = vmatpush.msra.mxu0 0.0
    %2415 = vmatpush.msra.mxu0 0.0
    %2416 = vmatpush.msra.mxu0 0.0
    %2417 = vmatpush.msra.mxu0 0.0
    %2418 = vmatpush.msra.mxu0 0.0
    %2419 = vmatpush.msra.mxu0 0.0
    %2420 = vmatpush.msra.mxu0 0.0
    %2421 = vmatpush.msra.mxu0 0.0
    %2422 = vmatpush.msra.mxu0 0.0
    %2423 = vmatpush.msra.mxu0 0.0
    %v2424 = vand.u32 %v86, 4294901760
    %2425 = vmatpush.msra.mxu0 %v2424
    %v2426 = vand.u32 %v1261, 4294901760
    %2427 = vmatmul.f32.gmra.mxu0 %v2426
    %v2428 = vpop.f32.mrf.mxu0
    %v2429 = vadd.f32 %v2407, %v2428
    %2430 = vdwg.mxu0
    %v2431 = vld [vmem:[#allocation2] sm:$0xff]
    %v2432 = vld [vmem:[#allocation2 + $0x8] sm:$0xff]
    %v2449 = vrot.slane %v383, 6
    %v2450 = vrot.slane %v529, 4
    %v2451 = vrot.slane %v675, 2
    %v2452 = vrot.slane %v967, 6
    %v2453 = vrot.slane %v1113, 4
    %v2454 = vrot.slane %v1259, 2
    %v2455 = vrot.slane %v1553, 6
    %v2456 = vrot.slane %v1699, 4
    %v2457 = vrot.slane %v1845, 2
    %v2458 = vrot.slane %v2137, 6
    %v2459 = vrot.slane %v2283, 4
    %v2460 = vrot.slane %v2429, 2
    %vm2461 = vcmask 1041408
    %v2462 = vsel %vm2461, %v237, %v2449
    %vm2463 = vcmask 1045508
    %v2464 = vsel %vm2463, %v2450, %v2451
    %vm2465 = vcmask 1043456
    %v2466 = vsel %vm2465, %v2462, %v2464
    %v2467 = vsel %vm2461, %v821, %v2452
    %v2468 = vsel %vm2463, %v2453, %v2454
    %v2469 = vsel %vm2465, %v2467, %v2468
    %v2470 = vsel %vm2461, %v1407, %v2455
    %v2471 = vsel %vm2463, %v2456, %v2457
    %v2472 = vsel %vm2465, %v2470, %v2471
    %v2473 = vsel %vm2461, %v1991, %v2458
    %v2474 = vsel %vm2463, %v2459, %v2460
    %v2475 = vsel %vm2465, %v2473, %v2474
    %vm2476 = vcmask 1044484
    %v2477 = vsel %vm2476, %v2466, %v2466
    %vm2478 = vcmask 1046534
    %v2479 = vsel %vm2478, %v2466, %v2477
    %v2480 = vrot.slane %v2472, 7
    %vm2481 = vcmask 1041409
    %v2482 = vsel %vm2481, %v2480, %v2479
    %vm2483 = vcmask 1043459
    %v2484 = vsel %vm2483, %v2480, %v2482
    %vm2485 = vcmask 1045509
    %v2486 = vsel %vm2485, %v2480, %v2484
    %vm2487 = vcmask 1047559
    %v2488 = vsel %vm2487, %v2480, %v2486
    %v2489 = vsel %vm2476, %v2469, %v2469
    %v2490 = vsel %vm2478, %v2469, %v2489
    %v2491 = vrot.slane %v2475, 7
    %v2492 = vsel %vm2481, %v2491, %v2490
    %v2493 = vsel %vm2483, %v2491, %v2492
    %v2494 = vsel %vm2485, %v2491, %v2493
    %v2495 = vsel %vm2487, %v2491, %v2494
    %v2498 = vadd.f32 %v2431, %v2488
    %v2499 = vadd.f32 %v2432, %v2495
    %2500 = vst [vmem:[#allocation2] sm:$0xff] %v2498
    %2501 = vst [vmem:[#allocation2 + $0x8] sm:$0xff] %v2499
    %v2502 = vld [vmem:[#allocation3] sm:$0x3]
    %vm2503 = vcmask 58368
    %v2504 = vsel %vm2503, %v87, 0.0
    %2505 = vadd.xlane.f32.xlu0 %v2504
    %v2506 = vpop.xlane.xlu0 %2505
    %v2507 = vadd.f32 %v2502, %v2506
    %vm2508 = vcmask 1024
    %2509 = vst.msk [vmem:[#allocation3] sm:$0x3] %vm2508, %v2507
    // Predicated region
    $region34: #{tpu_custom_call.1} parent=1 // pred_check
      %p2510 = pneg %p63
    $region35: #{tpu_custom_call.1} parent=1 // pred_check_branch
      %2512 = sbr.rel (%p2510) target = $region37
    $region36: #{tpu_custom_call.1} parent=1 // pred_region
      %v2513 = vld [vmem:[#allocation3] sm:$0x3]
      %v2514 = vmax.f32 %v2513, 1e-09
      %v2515 = vld [vmem:[#allocation2] sm:$0xff]
      %v2516 = vld [vmem:[#allocation2 + $0x8] sm:$0xff]
      %2518 = vset.pattern.permute.xlu0 0
      %2519 = vperm.xlu0 %2518, %v2514
      %v2520 = vpop.permute.xlu0 %2519
      %v2522 = vunpack.c.l.s4 269488144
      %v2523 = vunpack.c.0.s8 %v2522
      %v2524 = vperm.slane %v2520, %v2523
      %v2526 = vrcp.pop %v2524
      %v2527 = vmul.f32 %v2524, %v2526
      %v2528 = vsub.f32 1.0, %v2527
      %v2529 = vmul.f32 %v2526, %v2528
      %v2530 = vadd.f32 %v2526, %v2529
      %vm2531 = vweird.f32 %v2524
      %vm2532 = vweird.f32 %v2526
      %vm2533 = vmor %vm2531, %vm2532
      %v2534 = vsel %vm2533, %v2526, %v2530
      %v2535 = vand.u32 2147483647, %v2524
      %vm2536 = vcmp.eq.f32.partialorder %v2535, 8.507059e+37
      %v2537 = vand.u32 %v2524, 2147483648
      %v2538 = vor.u32 1.1754944e-38, %v2537
      %v2539 = vsel %vm2536, %v2538, %v2534
      %v2540 = vmul.f32 %v2515, %v2539
      %v2541 = vmul.f32 %v2516, %v2539
      %v2542 = vld [vmem:[#allocation9] sm:$0xff]
      %v2543 = vld [vmem:[#allocation9 + $0x8] sm:$0xff]
      %v2544 = vld [vmem:[#allocation9 + $0x10] sm:$0xff]
      %v2545 = vld [vmem:[#allocation9 + $0x18] sm:$0xff]
      %v2546 = vld [vmem:[#allocation9 + $0x20] sm:$0xff]
      %v2547 = vld [vmem:[#allocation9 + $0x28] sm:$0xff]
      %v2548 = vld [vmem:[#allocation9 + $0x30] sm:$0xff]
      %v2549 = vld [vmem:[#allocation9 + $0x38] sm:$0xff]
      %v2550 = vld [vmem:[#allocation9 + $0x40] sm:$0xff]
      %v2551 = vld [vmem:[#allocation9 + $0x48] sm:$0xff]
      %v2552 = vld [vmem:[#allocation9 + $0x50] sm:$0xff]
      %v2553 = vld [vmem:[#allocation9 + $0x58] sm:$0xff]
      %v2554 = vld [vmem:[#allocation9 + $0x60] sm:$0xff]
      %v2555 = vld [vmem:[#allocation9 + $0x68] sm:$0xff]
      %v2556 = vld [vmem:[#allocation9 + $0x70] sm:$0xff]
      %v2557 = vld [vmem:[#allocation9 + $0x78] sm:$0xff]
      %v2558 = vld [vmem:[#allocation9 + $0x80] sm:$0xff]
      %v2559 = vld [vmem:[#allocation9 + $0x88] sm:$0xff]
      %v2560 = vld [vmem:[#allocation9 + $0x90] sm:$0xff]
      %v2561 = vld [vmem:[#allocation9 + $0x98] sm:$0xff]
      %v2562 = vld [vmem:[#allocation9 + $0xa0] sm:$0xff]
      %v2563 = vld [vmem:[#allocation9 + $0xa8] sm:$0xff]
      %v2564 = vld [vmem:[#allocation9 + $0xb0] sm:$0xff]
      %v2565 = vld [vmem:[#allocation9 + $0xb8] sm:$0xff]
      %v2566 = vld [vmem:[#allocation9 + $0xc0] sm:$0xff]
      %v2567 = vld [vmem:[#allocation9 + $0xc8] sm:$0xff]
      %v2568 = vld [vmem:[#allocation9 + $0xd0] sm:$0xff]
      %v2569 = vld [vmem:[#allocation9 + $0xd8] sm:$0xff]
      %v2570 = vld [vmem:[#allocation9 + $0xe0] sm:$0xff]
      %v2571 = vld [vmem:[#allocation9 + $0xe8] sm:$0xff]
      %v2572 = vld [vmem:[#allocation9 + $0xf0] sm:$0xff]
      %v2573 = vld [vmem:[#allocation9 + $0xf8] sm:$0xff]
      %v2574 = vld [vmem:[#allocation9 + $0x100] sm:$0xff]
      %v2575 = vld [vmem:[#allocation9 + $0x108] sm:$0xff]
      %v2576 = vld [vmem:[#allocation9 + $0x110] sm:$0xff]
      %v2577 = vld [vmem:[#allocation9 + $0x118] sm:$0xff]
      %v2578 = vld [vmem:[#allocation9 + $0x120] sm:$0xff]
      %v2579 = vld [vmem:[#allocation9 + $0x128] sm:$0xff]
      %v2580 = vld [vmem:[#allocation9 + $0x130] sm:$0xff]
      %v2581 = vld [vmem:[#allocation9 + $0x138] sm:$0xff]
      %v2582 = vld [vmem:[#allocation9 + $0x140] sm:$0xff]
      %v2583 = vld [vmem:[#allocation9 + $0x148] sm:$0xff]
      %v2584 = vld [vmem:[#allocation9 + $0x150] sm:$0xff]
      %v2585 = vld [vmem:[#allocation9 + $0x158] sm:$0xff]
      %v2586 = vld [vmem:[#allocation9 + $0x160] sm:$0xff]
      %v2587 = vld [vmem:[#allocation9 + $0x168] sm:$0xff]
      %v2588 = vld [vmem:[#allocation9 + $0x170] sm:$0xff]
      %v2589 = vld [vmem:[#allocation9 + $0x178] sm:$0xff]
      %v2590 = vld [vmem:[#allocation9 + $0x180] sm:$0xff]
      %v2591 = vld [vmem:[#allocation9 + $0x188] sm:$0xff]
      %v2592 = vld [vmem:[#allocation9 + $0x190] sm:$0xff]
      %v2593 = vld [vmem:[#allocation9 + $0x198] sm:$0xff]
      %v2594 = vld [vmem:[#allocation9 + $0x1a0] sm:$0xff]
      %v2595 = vld [vmem:[#allocation9 + $0x1a8] sm:$0xff]
      %v2596 = vld [vmem:[#allocation9 + $0x1b0] sm:$0xff]
      %v2597 = vld [vmem:[#allocation9 + $0x1b8] sm:$0xff]
      %v2598 = vld [vmem:[#allocation9 + $0x1c0] sm:$0xff]
      %v2599 = vld [vmem:[#allocation9 + $0x1c8] sm:$0xff]
      %v2600 = vld [vmem:[#allocation9 + $0x1d0] sm:$0xff]
      %v2601 = vld [vmem:[#allocation9 + $0x1d8] sm:$0xff]
      %v2602 = vld [vmem:[#allocation9 + $0x1e0] sm:$0xff]
      %v2603 = vld [vmem:[#allocation9 + $0x1e8] sm:$0xff]
      %v2604 = vld [vmem:[#allocation9 + $0x1f0] sm:$0xff]
      %v2605 = vld [vmem:[#allocation9 + $0x1f8] sm:$0xff]
      %v2606 = vld [vmem:[#allocation9 + $0x200] sm:$0xff]
      %v2607 = vld [vmem:[#allocation9 + $0x208] sm:$0xff]
      %v2608 = vld [vmem:[#allocation9 + $0x210] sm:$0xff]
      %v2609 = vld [vmem:[#allocation9 + $0x218] sm:$0xff]
      %v2610 = vld [vmem:[#allocation9 + $0x220] sm:$0xff]
      %v2611 = vld [vmem:[#allocation9 + $0x228] sm:$0xff]
      %v2612 = vld [vmem:[#allocation9 + $0x230] sm:$0xff]
      %v2613 = vld [vmem:[#allocation9 + $0x238] sm:$0xff]
      %v2614 = vld [vmem:[#allocation9 + $0x240] sm:$0xff]
      %v2615 = vld [vmem:[#allocation9 + $0x248] sm:$0xff]
      %v2616 = vld [vmem:[#allocation9 + $0x250] sm:$0xff]
      %v2617 = vld [vmem:[#allocation9 + $0x258] sm:$0xff]
      %v2618 = vld [vmem:[#allocation9 + $0x260] sm:$0xff]
      %v2619 = vld [vmem:[#allocation9 + $0x268] sm:$0xff]
      %v2620 = vld [vmem:[#allocation9 + $0x270] sm:$0xff]
      %v2621 = vld [vmem:[#allocation9 + $0x278] sm:$0xff]
      %v2622 = vld [vmem:[#allocation9 + $0x280] sm:$0xff]
      %v2623 = vld [vmem:[#allocation9 + $0x288] sm:$0xff]
      %v2624 = vld [vmem:[#allocation9 + $0x290] sm:$0xff]
      %v2625 = vld [vmem:[#allocation9 + $0x298] sm:$0xff]
      %v2626 = vld [vmem:[#allocation9 + $0x2a0] sm:$0xff]
      %v2627 = vld [vmem:[#allocation9 + $0x2a8] sm:$0xff]
      %v2628 = vld [vmem:[#allocation9 + $0x2b0] sm:$0xff]
      %v2629 = vld [vmem:[#allocation9 + $0x2b8] sm:$0xff]
      %v2630 = vld [vmem:[#allocation9 + $0x2c0] sm:$0xff]
      %v2631 = vld [vmem:[#allocation9 + $0x2c8] sm:$0xff]
      %v2632 = vld [vmem:[#allocation9 + $0x2d0] sm:$0xff]
      %v2633 = vld [vmem:[#allocation9 + $0x2d8] sm:$0xff]
      %v2634 = vld [vmem:[#allocation9 + $0x2e0] sm:$0xff]
      %v2635 = vld [vmem:[#allocation9 + $0x2e8] sm:$0xff]
      %v2636 = vld [vmem:[#allocation9 + $0x2f0] sm:$0xff]
      %v2637 = vld [vmem:[#allocation9 + $0x2f8] sm:$0xff]
      %v2638 = vld [vmem:[#allocation9 + $0x300] sm:$0xff]
      %v2639 = vld [vmem:[#allocation9 + $0x308] sm:$0xff]
      %v2640 = vld [vmem:[#allocation9 + $0x310] sm:$0xff]
      %v2641 = vld [vmem:[#allocation9 + $0x318] sm:$0xff]
      %v2642 = vld [vmem:[#allocation9 + $0x320] sm:$0xff]
      %v2643 = vld [vmem:[#allocation9 + $0x328] sm:$0xff]
      %v2644 = vld [vmem:[#allocation9 + $0x330] sm:$0xff]
      %v2645 = vld [vmem:[#allocation9 + $0x338] sm:$0xff]
      %v2646 = vld [vmem:[#allocation9 + $0x340] sm:$0xff]
      %v2647 = vld [vmem:[#allocation9 + $0x348] sm:$0xff]
      %v2648 = vld [vmem:[#allocation9 + $0x350] sm:$0xff]
      %v2649 = vld [vmem:[#allocation9 + $0x358] sm:$0xff]
      %v2650 = vld [vmem:[#allocation9 + $0x360] sm:$0xff]
      %v2651 = vld [vmem:[#allocation9 + $0x368] sm:$0xff]
      %v2652 = vld [vmem:[#allocation9 + $0x370] sm:$0xff]
      %v2653 = vld [vmem:[#allocation9 + $0x378] sm:$0xff]
      %v2654 = vld [vmem:[#allocation9 + $0x380] sm:$0xff]
      %v2655 = vld [vmem:[#allocation9 + $0x388] sm:$0xff]
      %v2656 = vld [vmem:[#allocation9 + $0x390] sm:$0xff]
      %v2657 = vld [vmem:[#allocation9 + $0x398] sm:$0xff]
      %v2658 = vld [vmem:[#allocation9 + $0x3a0] sm:$0xff]
      %v2659 = vld [vmem:[#allocation9 + $0x3a8] sm:$0xff]
      %v2660 = vld [vmem:[#allocation9 + $0x3b0] sm:$0xff]
      %v2661 = vld [vmem:[#allocation9 + $0x3b8] sm:$0xff]
      %v2662 = vld [vmem:[#allocation9 + $0x3c0] sm:$0xff]
      %v2663 = vld [vmem:[#allocation9 + $0x3c8] sm:$0xff]
      %v2664 = vld [vmem:[#allocation9 + $0x3d0] sm:$0xff]
      %v2665 = vld [vmem:[#allocation9 + $0x3d8] sm:$0xff]
      %v2666 = vld [vmem:[#allocation9 + $0x3e0] sm:$0xff]
      %v2667 = vld [vmem:[#allocation9 + $0x3e8] sm:$0xff]
      %v2668 = vld [vmem:[#allocation9 + $0x3f0] sm:$0xff]
      %v2669 = vld [vmem:[#allocation9 + $0x3f8] sm:$0xff]
      %v2670 = vld [vmem:[%s3] sm:$0x1]
      %v2672 = vperm.slane %v2670, 0
      %2676 = vst [vmem:[#allocation1] ss:$4 sm:$0xff] %v2540
      %s2677 = scalar_lea.vmem [#allocation1], 32
      %2678 = vst [vmem:[%s2677] ss:$4 sm:$0xff] %v2541
      %v2679 = vld.sshfl [vmem:[#allocation1] sm:$0xff pattern:$0x73625140]
      %v2680 = vld.sshfl [vmem:[#allocation1 + $0x8] sm:$0xff pattern:$0x73625140]
      %v2681 = vld.sshfl [vmem:[#allocation1 + $0x10] sm:$0xff pattern:$0x73625140]
      %v2682 = vld.sshfl [vmem:[#allocation1 + $0x18] sm:$0xff pattern:$0x73625140]
      %v2683 = vld.sshfl [vmem:[#allocation1 + $0x20] sm:$0xff pattern:$0x73625140]
      %v2684 = vld.sshfl [vmem:[#allocation1 + $0x28] sm:$0xff pattern:$0x73625140]
      %v2685 = vld.sshfl [vmem:[#allocation1 + $0x30] sm:$0xff pattern:$0x73625140]
      %v2686 = vld.sshfl [vmem:[#allocation1 + $0x38] sm:$0xff pattern:$0x73625140]
      %v2695 = vand.u32 %v2557, 4294901760
      %2696 = vmatpush.msra.mxu0 %v2695
      %v2697 = vand.u32 %v2556, 4294901760
      %2698 = vmatpush.msra.mxu0 %v2697
      %v2699 = vand.u32 %v2555, 4294901760
      %2700 = vmatpush.msra.mxu0 %v2699
      %v2701 = vand.u32 %v2554, 4294901760
      %2702 = vmatpush.msra.mxu0 %v2701
      %v2703 = vand.u32 %v2553, 4294901760
      %2704 = vmatpush.msra.mxu0 %v2703
      %v2705 = vand.u32 %v2552, 4294901760
      %2706 = vmatpush.msra.mxu0 %v2705
      %v2707 = vand.u32 %v2551, 4294901760
      %2708 = vmatpush.msra.mxu0 %v2707
      %v2709 = vand.u32 %v2550, 4294901760
      %2710 = vmatpush.msra.mxu0 %v2709
      %v2711 = vand.u32 %v2549, 4294901760
      %2712 = vmatpush.msra.mxu0 %v2711
      %v2713 = vand.u32 %v2548, 4294901760
      %2714 = vmatpush.msra.mxu0 %v2713
      %v2715 = vand.u32 %v2547, 4294901760
      %2716 = vmatpush.msra.mxu0 %v2715
      %v2717 = vand.u32 %v2546, 4294901760
      %2718 = vmatpush.msra.mxu0 %v2717
      %v2719 = vand.u32 %v2545, 4294901760
      %2720 = vmatpush.msra.mxu0 %v2719
      %v2721 = vand.u32 %v2544, 4294901760
      %2722 = vmatpush.msra.mxu0 %v2721
      %v2723 = vand.u32 %v2543, 4294901760
      %2724 = vmatpush.msra.mxu0 %v2723
      %v2725 = vand.u32 %v2542, 4294901760
      %2726 = vmatpush.msra.mxu0 %v2725
      %v2727 = vand.u32 %v2679, 4294901760
      %v2728 = vsub.f32 %v2679, %v2727
      %v2729 = vand.u32 %v2728, 4294901760
      %v2730 = vsub.f32 %v2728, %v2729
      %v2731 = vand.u32 %v2730, 4294901760
      %2732 = vmatmul.f32.gmra.mxu0 %v2731
      %v2733 = vpop.f32.mrf.mxu0
      %v2734 = vadd.f32 %v2672, %v2733
      %2735 = vdwg.mxu0
      %v2736 = vand.u32 %v2557, 4294901760
      %v2737 = vsub.f32 %v2557, %v2736
      %v2738 = vand.u32 %v2737, 4294901760
      %v2739 = vsub.f32 %v2737, %v2738
      %v2740 = vand.u32 %v2739, 4294901760
      %2741 = vmatpush.msra.mxu0 %v2740
      %v2742 = vand.u32 %v2556, 4294901760
      %v2743 = vsub.f32 %v2556, %v2742
      %v2744 = vand.u32 %v2743, 4294901760
      %v2745 = vsub.f32 %v2743, %v2744
      %v2746 = vand.u32 %v2745, 4294901760
      %2747 = vmatpush.msra.mxu0 %v2746
      %v2748 = vand.u32 %v2555, 4294901760
      %v2749 = vsub.f32 %v2555, %v2748
      %v2750 = vand.u32 %v2749, 4294901760
      %v2751 = vsub.f32 %v2749, %v2750
      %v2752 = vand.u32 %v2751, 4294901760
      %2753 = vmatpush.msra.mxu0 %v2752
      %v2754 = vand.u32 %v2554, 4294901760
      %v2755 = vsub.f32 %v2554, %v2754
      %v2756 = vand.u32 %v2755, 4294901760
      %v2757 = vsub.f32 %v2755, %v2756
      %v2758 = vand.u32 %v2757, 4294901760
      %2759 = vmatpush.msra.mxu0 %v2758
      %v2760 = vand.u32 %v2553, 4294901760
      %v2761 = vsub.f32 %v2553, %v2760
      %v2762 = vand.u32 %v2761, 4294901760
      %v2763 = vsub.f32 %v2761, %v2762
      %v2764 = vand.u32 %v2763, 4294901760
      %2765 = vmatpush.msra.mxu0 %v2764
      %v2766 = vand.u32 %v2552, 4294901760
      %v2767 = vsub.f32 %v2552, %v2766
      %v2768 = vand.u32 %v2767, 4294901760
      %v2769 = vsub.f32 %v2767, %v2768
      %v2770 = vand.u32 %v2769, 4294901760
      %2771 = vmatpush.msra.mxu0 %v2770
      %v2772 = vand.u32 %v2551, 4294901760
      %v2773 = vsub.f32 %v2551, %v2772
      %v2774 = vand.u32 %v2773, 4294901760
      %v2775 = vsub.f32 %v2773, %v2774
      %v2776 = vand.u32 %v2775, 4294901760
      %2777 = vmatpush.msra.mxu0 %v2776
      %v2778 = vand.u32 %v2550, 4294901760
      %v2779 = vsub.f32 %v2550, %v2778
      %v2780 = vand.u32 %v2779, 4294901760
      %v2781 = vsub.f32 %v2779, %v2780
      %v2782 = vand.u32 %v2781, 4294901760
      %2783 = vmatpush.msra.mxu0 %v2782
      %v2784 = vand.u32 %v2549, 4294901760
      %v2785 = vsub.f32 %v2549, %v2784
      %v2786 = vand.u32 %v2785, 4294901760
      %v2787 = vsub.f32 %v2785, %v2786
      %v2788 = vand.u32 %v2787, 4294901760
      %2789 = vmatpush.msra.mxu0 %v2788
      %v2790 = vand.u32 %v2548, 4294901760
      %v2791 = vsub.f32 %v2548, %v2790
      %v2792 = vand.u32 %v2791, 4294901760
      %v2793 = vsub.f32 %v2791, %v2792
      %v2794 = vand.u32 %v2793, 4294901760
      %2795 = vmatpush.msra.mxu0 %v2794
      %v2796 = vand.u32 %v2547, 4294901760
      %v2797 = vsub.f32 %v2547, %v2796
      %v2798 = vand.u32 %v2797, 4294901760
      %v2799 = vsub.f32 %v2797, %v2798
      %v2800 = vand.u32 %v2799, 4294901760
      %2801 = vmatpush.msra.mxu0 %v2800
      %v2802 = vand.u32 %v2546, 4294901760
      %v2803 = vsub.f32 %v2546, %v2802
      %v2804 = vand.u32 %v2803, 4294901760
      %v2805 = vsub.f32 %v2803, %v2804
      %v2806 = vand.u32 %v2805, 4294901760
      %2807 = vmatpush.msra.mxu0 %v2806
      %v2808 = vand.u32 %v2545, 4294901760
      %v2809 = vsub.f32 %v2545, %v2808
      %v2810 = vand.u32 %v2809, 4294901760
      %v2811 = vsub.f32 %v2809, %v2810
      %v2812 = vand.u32 %v2811, 4294901760
      %2813 = vmatpush.msra.mxu0 %v2812
      %v2814 = vand.u32 %v2544, 4294901760
      %v2815 = vsub.f32 %v2544, %v2814
      %v2816 = vand.u32 %v2815, 4294901760
      %v2817 = vsub.f32 %v2815, %v2816
      %v2818 = vand.u32 %v2817, 4294901760
      %2819 = vmatpush.msra.mxu0 %v2818
      %v2820 = vand.u32 %v2543, 4294901760
      %v2821 = vsub.f32 %v2543, %v2820
      %v2822 = vand.u32 %v2821, 4294901760
      %v2823 = vsub.f32 %v2821, %v2822
      %v2824 = vand.u32 %v2823, 4294901760
      %2825 = vmatpush.msra.mxu0 %v2824
      %v2826 = vand.u32 %v2542, 4294901760
      %v2827 = vsub.f32 %v2542, %v2826
      %v2828 = vand.u32 %v2827, 4294901760
      %v2829 = vsub.f32 %v2827, %v2828
      %v2830 = vand.u32 %v2829, 4294901760
      %2831 = vmatpush.msra.mxu0 %v2830
      %v2832 = vand.u32 %v2679, 4294901760
      %2833 = vmatmul.f32.gmra.mxu0 %v2832
      %v2834 = vpop.f32.mrf.mxu0
      %v2835 = vadd.f32 %v2734, %v2834
      %2836 = vdwg.mxu0
      %v2837 = vand.u32 %v2557, 4294901760
      %v2838 = vsub.f32 %v2557, %v2837
      %2839 = vmatpush.msra.mxu0 %v2838
      %v2840 = vand.u32 %v2556, 4294901760
      %v2841 = vsub.f32 %v2556, %v2840
      %2842 = vmatpush.msra.mxu0 %v2841
      %v2843 = vand.u32 %v2555, 4294901760
      %v2844 = vsub.f32 %v2555, %v2843
      %2845 = vmatpush.msra.mxu0 %v2844
      %v2846 = vand.u32 %v2554, 4294901760
      %v2847 = vsub.f32 %v2554, %v2846
      %2848 = vmatpush.msra.mxu0 %v2847
      %v2849 = vand.u32 %v2553, 4294901760
      %v2850 = vsub.f32 %v2553, %v2849
      %2851 = vmatpush.msra.mxu0 %v2850
      %v2852 = vand.u32 %v2552, 4294901760
      %v2853 = vsub.f32 %v2552, %v2852
      %2854 = vmatpush.msra.mxu0 %v2853
      %v2855 = vand.u32 %v2551, 4294901760
      %v2856 = vsub.f32 %v2551, %v2855
      %2857 = vmatpush.msra.mxu0 %v2856
      %v2858 = vand.u32 %v2550, 4294901760
      %v2859 = vsub.f32 %v2550, %v2858
      %2860 = vmatpush.msra.mxu0 %v2859
      %v2861 = vand.u32 %v2549, 4294901760
      %v2862 = vsub.f32 %v2549, %v2861
      %2863 = vmatpush.msra.mxu0 %v2862
      %v2864 = vand.u32 %v2548, 4294901760
      %v2865 = vsub.f32 %v2548, %v2864
      %2866 = vmatpush.msra.mxu0 %v2865
      %v2867 = vand.u32 %v2547, 4294901760
      %v2868 = vsub.f32 %v2547, %v2867
      %2869 = vmatpush.msra.mxu0 %v2868
      %v2870 = vand.u32 %v2546, 4294901760
      %v2871 = vsub.f32 %v2546, %v2870
      %2872 = vmatpush.msra.mxu0 %v2871
      %v2873 = vand.u32 %v2545, 4294901760
      %v2874 = vsub.f32 %v2545, %v2873
      %2875 = vmatpush.msra.mxu0 %v2874
      %v2876 = vand.u32 %v2544, 4294901760
      %v2877 = vsub.f32 %v2544, %v2876
      %2878 = vmatpush.msra.mxu0 %v2877
      %v2879 = vand.u32 %v2543, 4294901760
      %v2880 = vsub.f32 %v2543, %v2879
      %2881 = vmatpush.msra.mxu0 %v2880
      %v2882 = vand.u32 %v2542, 4294901760
      %v2883 = vsub.f32 %v2542, %v2882
      %2884 = vmatpush.msra.mxu0 %v2883
      %v2885 = vand.u32 %v2679, 4294901760
      %v2886 = vsub.f32 %v2679, %v2885
      %2887 = vmatmul.f32.gmra.mxu0 %v2886
      %v2888 = vpop.f32.mrf.mxu0
      %v2889 = vadd.f32 %v2835, %v2888
      %2890 = vdwg.mxu0
      %v2891 = vand.u32 %v2557, 4294901760
      %2892 = vmatpush.msra.mxu0 %v2891
      %v2893 = vand.u32 %v2556, 4294901760
      %2894 = vmatpush.msra.mxu0 %v2893
      %v2895 = vand.u32 %v2555, 4294901760
      %2896 = vmatpush.msra.mxu0 %v2895
      %v2897 = vand.u32 %v2554, 4294901760
      %2898 = vmatpush.msra.mxu0 %v2897
      %v2899 = vand.u32 %v2553, 4294901760
      %2900 = vmatpush.msra.mxu0 %v2899
      %v2901 = vand.u32 %v2552, 4294901760
      %2902 = vmatpush.msra.mxu0 %v2901
      %v2903 = vand.u32 %v2551, 4294901760
      %2904 = vmatpush.msra.mxu0 %v2903
      %v2905 = vand.u32 %v2550, 4294901760
      %2906 = vmatpush.msra.mxu0 %v2905
      %v2907 = vand.u32 %v2549, 4294901760
      %2908 = vmatpush.msra.mxu0 %v2907
      %v2909 = vand.u32 %v2548, 4294901760
      %2910 = vmatpush.msra.mxu0 %v2909
      %v2911 = vand.u32 %v2547, 4294901760
      %2912 = vmatpush.msra.mxu0 %v2911
      %v2913 = vand.u32 %v2546, 4294901760
      %2914 = vmatpush.msra.mxu0 %v2913
      %v2915 = vand.u32 %v2545, 4294901760
      %2916 = vmatpush.msra.mxu0 %v2915
      %v2917 = vand.u32 %v2544, 4294901760
      %2918 = vmatpush.msra.mxu0 %v2917
      %v2919 = vand.u32 %v2543, 4294901760
      %2920 = vmatpush.msra.mxu0 %v2919
      %v2921 = vand.u32 %v2542, 4294901760
      %2922 = vmatpush.msra.mxu0 %v2921
      %v2923 = vand.u32 %v2679, 4294901760
      %v2924 = vsub.f32 %v2679, %v2923
      %v2925 = vand.u32 %v2924, 4294901760
      %2926 = vmatmul.f32.gmra.mxu0 %v2925
      %v2927 = vpop.f32.mrf.mxu0
      %v2928 = vadd.f32 %v2889, %v2927
      %2929 = vdwg.mxu0
      %v2930 = vand.u32 %v2557, 4294901760
      %v2931 = vsub.f32 %v2557, %v2930
      %v2932 = vand.u32 %v2931, 4294901760
      %2933 = vmatpush.msra.mxu0 %v2932
      %v2934 = vand.u32 %v2556, 4294901760
      %v2935 = vsub.f32 %v2556, %v2934
      %v2936 = vand.u32 %v2935, 4294901760
      %2937 = vmatpush.msra.mxu0 %v2936
      %v2938 = vand.u32 %v2555, 4294901760
      %v2939 = vsub.f32 %v2555, %v2938
      %v2940 = vand.u32 %v2939, 4294901760
      %2941 = vmatpush.msra.mxu0 %v2940
      %v2942 = vand.u32 %v2554, 4294901760
      %v2943 = vsub.f32 %v2554, %v2942
      %v2944 = vand.u32 %v2943, 4294901760
      %2945 = vmatpush.msra.mxu0 %v2944
      %v2946 = vand.u32 %v2553, 4294901760
      %v2947 = vsub.f32 %v2553, %v2946
      %v2948 = vand.u32 %v2947, 4294901760
      %2949 = vmatpush.msra.mxu0 %v2948
      %v2950 = vand.u32 %v2552, 4294901760
      %v2951 = vsub.f32 %v2552, %v2950
      %v2952 = vand.u32 %v2951, 4294901760
      %2953 = vmatpush.msra.mxu0 %v2952
      %v2954 = vand.u32 %v2551, 4294901760
      %v2955 = vsub.f32 %v2551, %v2954
      %v2956 = vand.u32 %v2955, 4294901760
      %2957 = vmatpush.msra.mxu0 %v2956
      %v2958 = vand.u32 %v2550, 4294901760
      %v2959 = vsub.f32 %v2550, %v2958
      %v2960 = vand.u32 %v2959, 4294901760
      %2961 = vmatpush.msra.mxu0 %v2960
      %v2962 = vand.u32 %v2549, 4294901760
      %v2963 = vsub.f32 %v2549, %v2962
      %v2964 = vand.u32 %v2963, 4294901760
      %2965 = vmatpush.msra.mxu0 %v2964
      %v2966 = vand.u32 %v2548, 4294901760
      %v2967 = vsub.f32 %v2548, %v2966
      %v2968 = vand.u32 %v2967, 4294901760
      %2969 = vmatpush.msra.mxu0 %v2968
      %v2970 = vand.u32 %v2547, 4294901760
      %v2971 = vsub.f32 %v2547, %v2970
      %v2972 = vand.u32 %v2971, 4294901760
      %2973 = vmatpush.msra.mxu0 %v2972
      %v2974 = vand.u32 %v2546, 4294901760
      %v2975 = vsub.f32 %v2546, %v2974
      %v2976 = vand.u32 %v2975, 4294901760
      %2977 = vmatpush.msra.mxu0 %v2976
      %v2978 = vand.u32 %v2545, 4294901760
      %v2979 = vsub.f32 %v2545, %v2978
      %v2980 = vand.u32 %v2979, 4294901760
      %2981 = vmatpush.msra.mxu0 %v2980
      %v2982 = vand.u32 %v2544, 4294901760
      %v2983 = vsub.f32 %v2544, %v2982
      %v2984 = vand.u32 %v2983, 4294901760
      %2985 = vmatpush.msra.mxu0 %v2984
      %v2986 = vand.u32 %v2543, 4294901760
      %v2987 = vsub.f32 %v2543, %v2986
      %v2988 = vand.u32 %v2987, 4294901760
      %2989 = vmatpush.msra.mxu0 %v2988
      %v2990 = vand.u32 %v2542, 4294901760
      %v2991 = vsub.f32 %v2542, %v2990
      %v2992 = vand.u32 %v2991, 4294901760
      %2993 = vmatpush.msra.mxu0 %v2992
      %v2994 = vand.u32 %v2679, 4294901760
      %2995 = vmatmul.f32.gmra.mxu0 %v2994
      %v2996 = vpop.f32.mrf.mxu0
      %v2997 = vadd.f32 %v2928, %v2996
      %2998 = vdwg.mxu0
      %v2999 = vand.u32 %v2557, 4294901760
      %3000 = vmatpush.msra.mxu0 %v2999
      %v3001 = vand.u32 %v2556, 4294901760
      %3002 = vmatpush.msra.mxu0 %v3001
      %v3003 = vand.u32 %v2555, 4294901760
      %3004 = vmatpush.msra.mxu0 %v3003
      %v3005 = vand.u32 %v2554, 4294901760
      %3006 = vmatpush.msra.mxu0 %v3005
      %v3007 = vand.u32 %v2553, 4294901760
      %3008 = vmatpush.msra.mxu0 %v3007
      %v3009 = vand.u32 %v2552, 4294901760
      %3010 = vmatpush.msra.mxu0 %v3009
      %v3011 = vand.u32 %v2551, 4294901760
      %3012 = vmatpush.msra.mxu0 %v3011
      %v3013 = vand.u32 %v2550, 4294901760
      %3014 = vmatpush.msra.mxu0 %v3013
      %v3015 = vand.u32 %v2549, 4294901760
      %3016 = vmatpush.msra.mxu0 %v3015
      %v3017 = vand.u32 %v2548, 4294901760
      %3018 = vmatpush.msra.mxu0 %v3017
      %v3019 = vand.u32 %v2547, 4294901760
      %3020 = vmatpush.msra.mxu0 %v3019
      %v3021 = vand.u32 %v2546, 4294901760
      %3022 = vmatpush.msra.mxu0 %v3021
      %v3023 = vand.u32 %v2545, 4294901760
      %3024 = vmatpush.msra.mxu0 %v3023
      %v3025 = vand.u32 %v2544, 4294901760
      %3026 = vmatpush.msra.mxu0 %v3025
      %v3027 = vand.u32 %v2543, 4294901760
      %3028 = vmatpush.msra.mxu0 %v3027
      %v3029 = vand.u32 %v2542, 4294901760
      %3030 = vmatpush.msra.mxu0 %v3029
      %v3031 = vand.u32 %v2679, 4294901760
      %3032 = vmatmul.f32.gmra.mxu0 %v3031
      %v3033 = vpop.f32.mrf.mxu0
      %v3034 = vadd.f32 %v2997, %v3033
      %3035 = vdwg.mxu0
      %v3036 = vand.u32 %v2573, 4294901760
      %3037 = vmatpush.msra.mxu0 %v3036
      %v3038 = vand.u32 %v2572, 4294901760
      %3039 = vmatpush.msra.mxu0 %v3038
      %v3040 = vand.u32 %v2571, 4294901760
      %3041 = vmatpush.msra.mxu0 %v3040
      %v3042 = vand.u32 %v2570, 4294901760
      %3043 = vmatpush.msra.mxu0 %v3042
      %v3044 = vand.u32 %v2569, 4294901760
      %3045 = vmatpush.msra.mxu0 %v3044
      %v3046 = vand.u32 %v2568, 4294901760
      %3047 = vmatpush.msra.mxu0 %v3046
      %v3048 = vand.u32 %v2567, 4294901760
      %3049 = vmatpush.msra.mxu0 %v3048
      %v3050 = vand.u32 %v2566, 4294901760
      %3051 = vmatpush.msra.mxu0 %v3050
      %v3052 = vand.u32 %v2565, 4294901760
      %3053 = vmatpush.msra.mxu0 %v3052
      %v3054 = vand.u32 %v2564, 4294901760
      %3055 = vmatpush.msra.mxu0 %v3054
      %v3056 = vand.u32 %v2563, 4294901760
      %3057 = vmatpush.msra.mxu0 %v3056
      %v3058 = vand.u32 %v2562, 4294901760
      %3059 = vmatpush.msra.mxu0 %v3058
      %v3060 = vand.u32 %v2561, 4294901760
      %3061 = vmatpush.msra.mxu0 %v3060
      %v3062 = vand.u32 %v2560, 4294901760
      %3063 = vmatpush.msra.mxu0 %v3062
      %v3064 = vand.u32 %v2559, 4294901760
      %3065 = vmatpush.msra.mxu0 %v3064
      %v3066 = vand.u32 %v2558, 4294901760
      %3067 = vmatpush.msra.mxu0 %v3066
      %v3068 = vand.u32 %v2680, 4294901760
      %v3069 = vsub.f32 %v2680, %v3068
      %v3070 = vand.u32 %v3069, 4294901760
      %v3071 = vsub.f32 %v3069, %v3070
      %v3072 = vand.u32 %v3071, 4294901760
      %3073 = vmatmul.f32.gmra.mxu0 %v3072
      %v3074 = vpop.f32.mrf.mxu0
      %v3075 = vadd.f32 %v3034, %v3074
      %3076 = vdwg.mxu0
      %v3077 = vand.u32 %v2573, 4294901760
      %v3078 = vsub.f32 %v2573, %v3077
      %v3079 = vand.u32 %v3078, 4294901760
      %v3080 = vsub.f32 %v3078, %v3079
      %v3081 = vand.u32 %v3080, 4294901760
      %3082 = vmatpush.msra.mxu0 %v3081
      %v3083 = vand.u32 %v2572, 4294901760
      %v3084 = vsub.f32 %v2572, %v3083
      %v3085 = vand.u32 %v3084, 4294901760
      %v3086 = vsub.f32 %v3084, %v3085
      %v3087 = vand.u32 %v3086, 4294901760
      %3088 = vmatpush.msra.mxu0 %v3087
      %v3089 = vand.u32 %v2571, 4294901760
      %v3090 = vsub.f32 %v2571, %v3089
      %v3091 = vand.u32 %v3090, 4294901760
      %v3092 = vsub.f32 %v3090, %v3091
      %v3093 = vand.u32 %v3092, 4294901760
      %3094 = vmatpush.msra.mxu0 %v3093
      %v3095 = vand.u32 %v2570, 4294901760
      %v3096 = vsub.f32 %v2570, %v3095
      %v3097 = vand.u32 %v3096, 4294901760
      %v3098 = vsub.f32 %v3096, %v3097
      %v3099 = vand.u32 %v3098, 4294901760
      %3100 = vmatpush.msra.mxu0 %v3099
      %v3101 = vand.u32 %v2569, 4294901760
      %v3102 = vsub.f32 %v2569, %v3101
      %v3103 = vand.u32 %v3102, 4294901760
      %v3104 = vsub.f32 %v3102, %v3103
      %v3105 = vand.u32 %v3104, 4294901760
      %3106 = vmatpush.msra.mxu0 %v3105
      %v3107 = vand.u32 %v2568, 4294901760
      %v3108 = vsub.f32 %v2568, %v3107
      %v3109 = vand.u32 %v3108, 4294901760
      %v3110 = vsub.f32 %v3108, %v3109
      %v3111 = vand.u32 %v3110, 4294901760
      %3112 = vmatpush.msra.mxu0 %v3111
      %v3113 = vand.u32 %v2567, 4294901760
      %v3114 = vsub.f32 %v2567, %v3113
      %v3115 = vand.u32 %v3114, 4294901760
      %v3116 = vsub.f32 %v3114, %v3115
      %v3117 = vand.u32 %v3116, 4294901760
      %3118 = vmatpush.msra.mxu0 %v3117
      %v3119 = vand.u32 %v2566, 4294901760
      %v3120 = vsub.f32 %v2566, %v3119
      %v3121 = vand.u32 %v3120, 4294901760
      %v3122 = vsub.f32 %v3120, %v3121
      %v3123 = vand.u32 %v3122, 4294901760
      %3124 = vmatpush.msra.mxu0 %v3123
      %v3125 = vand.u32 %v2565, 4294901760
      %v3126 = vsub.f32 %v2565, %v3125
      %v3127 = vand.u32 %v3126, 4294901760
      %v3128 = vsub.f32 %v3126, %v3127
      %v3129 = vand.u32 %v3128, 4294901760
      %3130 = vmatpush.msra.mxu0 %v3129
      %v3131 = vand.u32 %v2564, 4294901760
      %v3132 = vsub.f32 %v2564, %v3131
      %v3133 = vand.u32 %v3132, 4294901760
      %v3134 = vsub.f32 %v3132, %v3133
      %v3135 = vand.u32 %v3134, 4294901760
      %3136 = vmatpush.msra.mxu0 %v3135
      %v3137 = vand.u32 %v2563, 4294901760
      %v3138 = vsub.f32 %v2563, %v3137
      %v3139 = vand.u32 %v3138, 4294901760
      %v3140 = vsub.f32 %v3138, %v3139
      %v3141 = vand.u32 %v3140, 4294901760
      %3142 = vmatpush.msra.mxu0 %v3141
      %v3143 = vand.u32 %v2562, 4294901760
      %v3144 = vsub.f32 %v2562, %v3143
      %v3145 = vand.u32 %v3144, 4294901760
      %v3146 = vsub.f32 %v3144, %v3145
      %v3147 = vand.u32 %v3146, 4294901760
      %3148 = vmatpush.msra.mxu0 %v3147
      %v3149 = vand.u32 %v2561, 4294901760
      %v3150 = vsub.f32 %v2561, %v3149
      %v3151 = vand.u32 %v3150, 4294901760
      %v3152 = vsub.f32 %v3150, %v3151
      %v3153 = vand.u32 %v3152, 4294901760
      %3154 = vmatpush.msra.mxu0 %v3153
      %v3155 = vand.u32 %v2560, 4294901760
      %v3156 = vsub.f32 %v2560, %v3155
      %v3157 = vand.u32 %v3156, 4294901760
      %v3158 = vsub.f32 %v3156, %v3157
      %v3159 = vand.u32 %v3158, 4294901760
      %3160 = vmatpush.msra.mxu0 %v3159
      %v3161 = vand.u32 %v2559, 4294901760
      %v3162 = vsub.f32 %v2559, %v3161
      %v3163 = vand.u32 %v3162, 4294901760
      %v3164 = vsub.f32 %v3162, %v3163
      %v3165 = vand.u32 %v3164, 4294901760
      %3166 = vmatpush.msra.mxu0 %v3165
      %v3167 = vand.u32 %v2558, 4294901760
      %v3168 = vsub.f32 %v2558, %v3167
      %v3169 = vand.u32 %v3168, 4294901760
      %v3170 = vsub.f32 %v3168, %v3169
      %v3171 = vand.u32 %v3170, 4294901760
      %3172 = vmatpush.msra.mxu0 %v3171
      %v3173 = vand.u32 %v2680, 4294901760
      %3174 = vmatmul.f32.gmra.mxu0 %v3173
      %v3175 = vpop.f32.mrf.mxu0
      %v3176 = vadd.f32 %v3075, %v3175
      %3177 = vdwg.mxu0
      %v3178 = vand.u32 %v2573, 4294901760
      %v3179 = vsub.f32 %v2573, %v3178
      %3180 = vmatpush.msra.mxu0 %v3179
      %v3181 = vand.u32 %v2572, 4294901760
      %v3182 = vsub.f32 %v2572, %v3181
      %3183 = vmatpush.msra.mxu0 %v3182
      %v3184 = vand.u32 %v2571, 4294901760
      %v3185 = vsub.f32 %v2571, %v3184
      %3186 = vmatpush.msra.mxu0 %v3185
      %v3187 = vand.u32 %v2570, 4294901760
      %v3188 = vsub.f32 %v2570, %v3187
      %3189 = vmatpush.msra.mxu0 %v3188
      %v3190 = vand.u32 %v2569, 4294901760
      %v3191 = vsub.f32 %v2569, %v3190
      %3192 = vmatpush.msra.mxu0 %v3191
      %v3193 = vand.u32 %v2568, 4294901760
      %v3194 = vsub.f32 %v2568, %v3193
      %3195 = vmatpush.msra.mxu0 %v3194
      %v3196 = vand.u32 %v2567, 4294901760
      %v3197 = vsub.f32 %v2567, %v3196
      %3198 = vmatpush.msra.mxu0 %v3197
      %v3199 = vand.u32 %v2566, 4294901760
      %v3200 = vsub.f32 %v2566, %v3199
      %3201 = vmatpush.msra.mxu0 %v3200
      %v3202 = vand.u32 %v2565, 4294901760
      %v3203 = vsub.f32 %v2565, %v3202
      %3204 = vmatpush.msra.mxu0 %v3203
      %v3205 = vand.u32 %v2564, 4294901760
      %v3206 = vsub.f32 %v2564, %v3205
      %3207 = vmatpush.msra.mxu0 %v3206
      %v3208 = vand.u32 %v2563, 4294901760
      %v3209 = vsub.f32 %v2563, %v3208
      %3210 = vmatpush.msra.mxu0 %v3209
      %v3211 = vand.u32 %v2562, 4294901760
      %v3212 = vsub.f32 %v2562, %v3211
      %3213 = vmatpush.msra.mxu0 %v3212
      %v3214 = vand.u32 %v2561, 4294901760
      %v3215 = vsub.f32 %v2561, %v3214
      %3216 = vmatpush.msra.mxu0 %v3215
      %v3217 = vand.u32 %v2560, 4294901760
      %v3218 = vsub.f32 %v2560, %v3217
      %3219 = vmatpush.msra.mxu0 %v3218
      %v3220 = vand.u32 %v2559, 4294901760
      %v3221 = vsub.f32 %v2559, %v3220
      %3222 = vmatpush.msra.mxu0 %v3221
      %v3223 = vand.u32 %v2558, 4294901760
      %v3224 = vsub.f32 %v2558, %v3223
      %3225 = vmatpush.msra.mxu0 %v3224
      %v3226 = vand.u32 %v2680, 4294901760
      %v3227 = vsub.f32 %v2680, %v3226
      %3228 = vmatmul.f32.gmra.mxu0 %v3227
      %v3229 = vpop.f32.mrf.mxu0
      %v3230 = vadd.f32 %v3176, %v3229
      %3231 = vdwg.mxu0
      %v3232 = vand.u32 %v2573, 4294901760
      %3233 = vmatpush.msra.mxu0 %v3232
      %v3234 = vand.u32 %v2572, 4294901760
      %3235 = vmatpush.msra.mxu0 %v3234
      %v3236 = vand.u32 %v2571, 4294901760
      %3237 = vmatpush.msra.mxu0 %v3236
      %v3238 = vand.u32 %v2570, 4294901760
      %3239 = vmatpush.msra.mxu0 %v3238
      %v3240 = vand.u32 %v2569, 4294901760
      %3241 = vmatpush.msra.mxu0 %v3240
      %v3242 = vand.u32 %v2568, 4294901760
      %3243 = vmatpush.msra.mxu0 %v3242
      %v3244 = vand.u32 %v2567, 4294901760
      %3245 = vmatpush.msra.mxu0 %v3244
      %v3246 = vand.u32 %v2566, 4294901760
      %3247 = vmatpush.msra.mxu0 %v3246
      %v3248 = vand.u32 %v2565, 4294901760
      %3249 = vmatpush.msra.mxu0 %v3248
      %v3250 = vand.u32 %v2564, 4294901760
      %3251 = vmatpush.msra.mxu0 %v3250
      %v3252 = vand.u32 %v2563, 4294901760
      %3253 = vmatpush.msra.mxu0 %v3252
      %v3254 = vand.u32 %v2562, 4294901760
      %3255 = vmatpush.msra.mxu0 %v3254
      %v3256 = vand.u32 %v2561, 4294901760
      %3257 = vmatpush.msra.mxu0 %v3256
      %v3258 = vand.u32 %v2560, 4294901760
      %3259 = vmatpush.msra.mxu0 %v3258
      %v3260 = vand.u32 %v2559, 4294901760
      %3261 = vmatpush.msra.mxu0 %v3260
      %v3262 = vand.u32 %v2558, 4294901760
      %3263 = vmatpush.msra.mxu0 %v3262
      %v3264 = vand.u32 %v2680, 4294901760
      %v3265 = vsub.f32 %v2680, %v3264
      %v3266 = vand.u32 %v3265, 4294901760
      %3267 = vmatmul.f32.gmra.mxu0 %v3266
      %v3268 = vpop.f32.mrf.mxu0
      %v3269 = vadd.f32 %v3230, %v3268
      %3270 = vdwg.mxu0
      %v3271 = vand.u32 %v2573, 4294901760
      %v3272 = vsub.f32 %v2573, %v3271
      %v3273 = vand.u32 %v3272, 4294901760
      %3274 = vmatpush.msra.mxu0 %v3273
      %v3275 = vand.u32 %v2572, 4294901760
      %v3276 = vsub.f32 %v2572, %v3275
      %v3277 = vand.u32 %v3276, 4294901760
      %3278 = vmatpush.msra.mxu0 %v3277
      %v3279 = vand.u32 %v2571, 4294901760
      %v3280 = vsub.f32 %v2571, %v3279
      %v3281 = vand.u32 %v3280, 4294901760
      %3282 = vmatpush.msra.mxu0 %v3281
      %v3283 = vand.u32 %v2570, 4294901760
      %v3284 = vsub.f32 %v2570, %v3283
      %v3285 = vand.u32 %v3284, 4294901760
      %3286 = vmatpush.msra.mxu0 %v3285
      %v3287 = vand.u32 %v2569, 4294901760
      %v3288 = vsub.f32 %v2569, %v3287
      %v3289 = vand.u32 %v3288, 4294901760
      %3290 = vmatpush.msra.mxu0 %v3289
      %v3291 = vand.u32 %v2568, 4294901760
      %v3292 = vsub.f32 %v2568, %v3291
      %v3293 = vand.u32 %v3292, 4294901760
      %3294 = vmatpush.msra.mxu0 %v3293
      %v3295 = vand.u32 %v2567, 4294901760
      %v3296 = vsub.f32 %v2567, %v3295
      %v3297 = vand.u32 %v3296, 4294901760
      %3298 = vmatpush.msra.mxu0 %v3297
      %v3299 = vand.u32 %v2566, 4294901760
      %v3300 = vsub.f32 %v2566, %v3299
      %v3301 = vand.u32 %v3300, 4294901760
      %3302 = vmatpush.msra.mxu0 %v3301
      %v3303 = vand.u32 %v2565, 4294901760
      %v3304 = vsub.f32 %v2565, %v3303
      %v3305 = vand.u32 %v3304, 4294901760
      %3306 = vmatpush.msra.mxu0 %v3305
      %v3307 = vand.u32 %v2564, 4294901760
      %v3308 = vsub.f32 %v2564, %v3307
      %v3309 = vand.u32 %v3308, 4294901760
      %3310 = vmatpush.msra.mxu0 %v3309
      %v3311 = vand.u32 %v2563, 4294901760
      %v3312 = vsub.f32 %v2563, %v3311
      %v3313 = vand.u32 %v3312, 4294901760
      %3314 = vmatpush.msra.mxu0 %v3313
      %v3315 = vand.u32 %v2562, 4294901760
      %v3316 = vsub.f32 %v2562, %v3315
      %v3317 = vand.u32 %v3316, 4294901760
      %3318 = vmatpush.msra.mxu0 %v3317
      %v3319 = vand.u32 %v2561, 4294901760
      %v3320 = vsub.f32 %v2561, %v3319
      %v3321 = vand.u32 %v3320, 4294901760
      %3322 = vmatpush.msra.mxu0 %v3321
      %v3323 = vand.u32 %v2560, 4294901760
      %v3324 = vsub.f32 %v2560, %v3323
      %v3325 = vand.u32 %v3324, 4294901760
      %3326 = vmatpush.msra.mxu0 %v3325
      %v3327 = vand.u32 %v2559, 4294901760
      %v3328 = vsub.f32 %v2559, %v3327
      %v3329 = vand.u32 %v3328, 4294901760
      %3330 = vmatpush.msra.mxu0 %v3329
      %v3331 = vand.u32 %v2558, 4294901760
      %v3332 = vsub.f32 %v2558, %v3331
      %v3333 = vand.u32 %v3332, 4294901760
      %3334 = vmatpush.msra.mxu0 %v3333
      %v3335 = vand.u32 %v2680, 4294901760
      %3336 = vmatmul.f32.gmra.mxu0 %v3335
      %v3337 = vpop.f32.mrf.mxu0
      %v3338 = vadd.f32 %v3269, %v3337
      %3339 = vdwg.mxu0
      %v3340 = vand.u32 %v2573, 4294901760
      %3341 = vmatpush.msra.mxu0 %v3340
      %v3342 = vand.u32 %v2572, 4294901760
      %3343 = vmatpush.msra.mxu0 %v3342
      %v3344 = vand.u32 %v2571, 4294901760
      %3345 = vmatpush.msra.mxu0 %v3344
      %v3346 = vand.u32 %v2570, 4294901760
      %3347 = vmatpush.msra.mxu0 %v3346
      %v3348 = vand.u32 %v2569, 4294901760
      %3349 = vmatpush.msra.mxu0 %v3348
      %v3350 = vand.u32 %v2568, 4294901760
      %3351 = vmatpush.msra.mxu0 %v3350
      %v3352 = vand.u32 %v2567, 4294901760
      %3353 = vmatpush.msra.mxu0 %v3352
      %v3354 = vand.u32 %v2566, 4294901760
      %3355 = vmatpush.msra.mxu0 %v3354
      %v3356 = vand.u32 %v2565, 4294901760
      %3357 = vmatpush.msra.mxu0 %v3356
      %v3358 = vand.u32 %v2564, 4294901760
      %3359 = vmatpush.msra.mxu0 %v3358
      %v3360 = vand.u32 %v2563, 4294901760
      %3361 = vmatpush.msra.mxu0 %v3360
      %v3362 = vand.u32 %v2562, 4294901760
      %3363 = vmatpush.msra.mxu0 %v3362
      %v3364 = vand.u32 %v2561, 4294901760
      %3365 = vmatpush.msra.mxu0 %v3364
      %v3366 = vand.u32 %v2560, 4294901760
      %3367 = vmatpush.msra.mxu0 %v3366
      %v3368 = vand.u32 %v2559, 4294901760
      %3369 = vmatpush.msra.mxu0 %v3368
      %v3370 = vand.u32 %v2558, 4294901760
      %3371 = vmatpush.msra.mxu0 %v3370
      %v3372 = vand.u32 %v2680, 4294901760
      %3373 = vmatmul.f32.gmra.mxu0 %v3372
      %v3374 = vpop.f32.mrf.mxu0
      %v3375 = vadd.f32 %v3338, %v3374
      %3376 = vdwg.mxu0
      %v3377 = vand.u32 %v2589, 4294901760
      %3378 = vmatpush.msra.mxu0 %v3377
      %v3379 = vand.u32 %v2588, 4294901760
      %3380 = vmatpush.msra.mxu0 %v3379
      %v3381 = vand.u32 %v2587, 4294901760
      %3382 = vmatpush.msra.mxu0 %v3381
      %v3383 = vand.u32 %v2586, 4294901760
      %3384 = vmatpush.msra.mxu0 %v3383
      %v3385 = vand.u32 %v2585, 4294901760
      %3386 = vmatpush.msra.mxu0 %v3385
      %v3387 = vand.u32 %v2584, 4294901760
      %3388 = vmatpush.msra.mxu0 %v3387
      %v3389 = vand.u32 %v2583, 4294901760
      %3390 = vmatpush.msra.mxu0 %v3389
      %v3391 = vand.u32 %v2582, 4294901760
      %3392 = vmatpush.msra.mxu0 %v3391
      %v3393 = vand.u32 %v2581, 4294901760
      %3394 = vmatpush.msra.mxu0 %v3393
      %v3395 = vand.u32 %v2580, 4294901760
      %3396 = vmatpush.msra.mxu0 %v3395
      %v3397 = vand.u32 %v2579, 4294901760
      %3398 = vmatpush.msra.mxu0 %v3397
      %v3399 = vand.u32 %v2578, 4294901760
      %3400 = vmatpush.msra.mxu0 %v3399
      %v3401 = vand.u32 %v2577, 4294901760
      %3402 = vmatpush.msra.mxu0 %v3401
      %v3403 = vand.u32 %v2576, 4294901760
      %3404 = vmatpush.msra.mxu0 %v3403
      %v3405 = vand.u32 %v2575, 4294901760
      %3406 = vmatpush.msra.mxu0 %v3405
      %v3407 = vand.u32 %v2574, 4294901760
      %3408 = vmatpush.msra.mxu0 %v3407
      %v3409 = vand.u32 %v2681, 4294901760
      %v3410 = vsub.f32 %v2681, %v3409
      %v3411 = vand.u32 %v3410, 4294901760
      %v3412 = vsub.f32 %v3410, %v3411
      %v3413 = vand.u32 %v3412, 4294901760
      %3414 = vmatmul.f32.gmra.mxu0 %v3413
      %v3415 = vpop.f32.mrf.mxu0
      %v3416 = vadd.f32 %v3375, %v3415
      %3417 = vdwg.mxu0
      %v3418 = vand.u32 %v2589, 4294901760
      %v3419 = vsub.f32 %v2589, %v3418
      %v3420 = vand.u32 %v3419, 4294901760
      %v3421 = vsub.f32 %v3419, %v3420
      %v3422 = vand.u32 %v3421, 4294901760
      %3423 = vmatpush.msra.mxu0 %v3422
      %v3424 = vand.u32 %v2588, 4294901760
      %v3425 = vsub.f32 %v2588, %v3424
      %v3426 = vand.u32 %v3425, 4294901760
      %v3427 = vsub.f32 %v3425, %v3426
      %v3428 = vand.u32 %v3427, 4294901760
      %3429 = vmatpush.msra.mxu0 %v3428
      %v3430 = vand.u32 %v2587, 4294901760
      %v3431 = vsub.f32 %v2587, %v3430
      %v3432 = vand.u32 %v3431, 4294901760
      %v3433 = vsub.f32 %v3431, %v3432
      %v3434 = vand.u32 %v3433, 4294901760
      %3435 = vmatpush.msra.mxu0 %v3434
      %v3436 = vand.u32 %v2586, 4294901760
      %v3437 = vsub.f32 %v2586, %v3436
      %v3438 = vand.u32 %v3437, 4294901760
      %v3439 = vsub.f32 %v3437, %v3438
      %v3440 = vand.u32 %v3439, 4294901760
      %3441 = vmatpush.msra.mxu0 %v3440
      %v3442 = vand.u32 %v2585, 4294901760
      %v3443 = vsub.f32 %v2585, %v3442
      %v3444 = vand.u32 %v3443, 4294901760
      %v3445 = vsub.f32 %v3443, %v3444
      %v3446 = vand.u32 %v3445, 4294901760
      %3447 = vmatpush.msra.mxu0 %v3446
      %v3448 = vand.u32 %v2584, 4294901760
      %v3449 = vsub.f32 %v2584, %v3448
      %v3450 = vand.u32 %v3449, 4294901760
      %v3451 = vsub.f32 %v3449, %v3450
      %v3452 = vand.u32 %v3451, 4294901760
      %3453 = vmatpush.msra.mxu0 %v3452
      %v3454 = vand.u32 %v2583, 4294901760
      %v3455 = vsub.f32 %v2583, %v3454
      %v3456 = vand.u32 %v3455, 4294901760
      %v3457 = vsub.f32 %v3455, %v3456
      %v3458 = vand.u32 %v3457, 4294901760
      %3459 = vmatpush.msra.mxu0 %v3458
      %v3460 = vand.u32 %v2582, 4294901760
      %v3461 = vsub.f32 %v2582, %v3460
      %v3462 = vand.u32 %v3461, 4294901760
      %v3463 = vsub.f32 %v3461, %v3462
      %v3464 = vand.u32 %v3463, 4294901760
      %3465 = vmatpush.msra.mxu0 %v3464
      %v3466 = vand.u32 %v2581, 4294901760
      %v3467 = vsub.f32 %v2581, %v3466
      %v3468 = vand.u32 %v3467, 4294901760
      %v3469 = vsub.f32 %v3467, %v3468
      %v3470 = vand.u32 %v3469, 4294901760
      %3471 = vmatpush.msra.mxu0 %v3470
      %v3472 = vand.u32 %v2580, 4294901760
      %v3473 = vsub.f32 %v2580, %v3472
      %v3474 = vand.u32 %v3473, 4294901760
      %v3475 = vsub.f32 %v3473, %v3474
      %v3476 = vand.u32 %v3475, 4294901760
      %3477 = vmatpush.msra.mxu0 %v3476
      %v3478 = vand.u32 %v2579, 4294901760
      %v3479 = vsub.f32 %v2579, %v3478
      %v3480 = vand.u32 %v3479, 4294901760
      %v3481 = vsub.f32 %v3479, %v3480
      %v3482 = vand.u32 %v3481, 4294901760
      %3483 = vmatpush.msra.mxu0 %v3482
      %v3484 = vand.u32 %v2578, 4294901760
      %v3485 = vsub.f32 %v2578, %v3484
      %v3486 = vand.u32 %v3485, 4294901760
      %v3487 = vsub.f32 %v3485, %v3486
      %v3488 = vand.u32 %v3487, 4294901760
      %3489 = vmatpush.msra.mxu0 %v3488
      %v3490 = vand.u32 %v2577, 4294901760
      %v3491 = vsub.f32 %v2577, %v3490
      %v3492 = vand.u32 %v3491, 4294901760
      %v3493 = vsub.f32 %v3491, %v3492
      %v3494 = vand.u32 %v3493, 4294901760
      %3495 = vmatpush.msra.mxu0 %v3494
      %v3496 = vand.u32 %v2576, 4294901760
      %v3497 = vsub.f32 %v2576, %v3496
      %v3498 = vand.u32 %v3497, 4294901760
      %v3499 = vsub.f32 %v3497, %v3498
      %v3500 = vand.u32 %v3499, 4294901760
      %3501 = vmatpush.msra.mxu0 %v3500
      %v3502 = vand.u32 %v2575, 4294901760
      %v3503 = vsub.f32 %v2575, %v3502
      %v3504 = vand.u32 %v3503, 4294901760
      %v3505 = vsub.f32 %v3503, %v3504
      %v3506 = vand.u32 %v3505, 4294901760
      %3507 = vmatpush.msra.mxu0 %v3506
      %v3508 = vand.u32 %v2574, 4294901760
      %v3509 = vsub.f32 %v2574, %v3508
      %v3510 = vand.u32 %v3509, 4294901760
      %v3511 = vsub.f32 %v3509, %v3510
      %v3512 = vand.u32 %v3511, 4294901760
      %3513 = vmatpush.msra.mxu0 %v3512
      %v3514 = vand.u32 %v2681, 4294901760
      %3515 = vmatmul.f32.gmra.mxu0 %v3514
      %v3516 = vpop.f32.mrf.mxu0
      %v3517 = vadd.f32 %v3416, %v3516
      %3518 = vdwg.mxu0
      %v3519 = vand.u32 %v2589, 4294901760
      %v3520 = vsub.f32 %v2589, %v3519
      %3521 = vmatpush.msra.mxu0 %v3520
      %v3522 = vand.u32 %v2588, 4294901760
      %v3523 = vsub.f32 %v2588, %v3522
      %3524 = vmatpush.msra.mxu0 %v3523
      %v3525 = vand.u32 %v2587, 4294901760
      %v3526 = vsub.f32 %v2587, %v3525
      %3527 = vmatpush.msra.mxu0 %v3526
      %v3528 = vand.u32 %v2586, 4294901760
      %v3529 = vsub.f32 %v2586, %v3528
      %3530 = vmatpush.msra.mxu0 %v3529
      %v3531 = vand.u32 %v2585, 4294901760
      %v3532 = vsub.f32 %v2585, %v3531
      %3533 = vmatpush.msra.mxu0 %v3532
      %v3534 = vand.u32 %v2584, 4294901760
      %v3535 = vsub.f32 %v2584, %v3534
      %3536 = vmatpush.msra.mxu0 %v3535
      %v3537 = vand.u32 %v2583, 4294901760
      %v3538 = vsub.f32 %v2583, %v3537
      %3539 = vmatpush.msra.mxu0 %v3538
      %v3540 = vand.u32 %v2582, 4294901760
      %v3541 = vsub.f32 %v2582, %v3540
      %3542 = vmatpush.msra.mxu0 %v3541
      %v3543 = vand.u32 %v2581, 4294901760
      %v3544 = vsub.f32 %v2581, %v3543
      %3545 = vmatpush.msra.mxu0 %v3544
      %v3546 = vand.u32 %v2580, 4294901760
      %v3547 = vsub.f32 %v2580, %v3546
      %3548 = vmatpush.msra.mxu0 %v3547
      %v3549 = vand.u32 %v2579, 4294901760
      %v3550 = vsub.f32 %v2579, %v3549
      %3551 = vmatpush.msra.mxu0 %v3550
      %v3552 = vand.u32 %v2578, 4294901760
      %v3553 = vsub.f32 %v2578, %v3552
      %3554 = vmatpush.msra.mxu0 %v3553
      %v3555 = vand.u32 %v2577, 4294901760
      %v3556 = vsub.f32 %v2577, %v3555
      %3557 = vmatpush.msra.mxu0 %v3556
      %v3558 = vand.u32 %v2576, 4294901760
      %v3559 = vsub.f32 %v2576, %v3558
      %3560 = vmatpush.msra.mxu0 %v3559
      %v3561 = vand.u32 %v2575, 4294901760
      %v3562 = vsub.f32 %v2575, %v3561
      %3563 = vmatpush.msra.mxu0 %v3562
      %v3564 = vand.u32 %v2574, 4294901760
      %v3565 = vsub.f32 %v2574, %v3564
      %3566 = vmatpush.msra.mxu0 %v3565
      %v3567 = vand.u32 %v2681, 4294901760
      %v3568 = vsub.f32 %v2681, %v3567
      %3569 = vmatmul.f32.gmra.mxu0 %v3568
      %v3570 = vpop.f32.mrf.mxu0
      %v3571 = vadd.f32 %v3517, %v3570
      %3572 = vdwg.mxu0
      %v3573 = vand.u32 %v2589, 4294901760
      %3574 = vmatpush.msra.mxu0 %v3573
      %v3575 = vand.u32 %v2588, 4294901760
      %3576 = vmatpush.msra.mxu0 %v3575
      %v3577 = vand.u32 %v2587, 4294901760
      %3578 = vmatpush.msra.mxu0 %v3577
      %v3579 = vand.u32 %v2586, 4294901760
      %3580 = vmatpush.msra.mxu0 %v3579
      %v3581 = vand.u32 %v2585, 4294901760
      %3582 = vmatpush.msra.mxu0 %v3581
      %v3583 = vand.u32 %v2584, 4294901760
      %3584 = vmatpush.msra.mxu0 %v3583
      %v3585 = vand.u32 %v2583, 4294901760
      %3586 = vmatpush.msra.mxu0 %v3585
      %v3587 = vand.u32 %v2582, 4294901760
      %3588 = vmatpush.msra.mxu0 %v3587
      %v3589 = vand.u32 %v2581, 4294901760
      %3590 = vmatpush.msra.mxu0 %v3589
      %v3591 = vand.u32 %v2580, 4294901760
      %3592 = vmatpush.msra.mxu0 %v3591
      %v3593 = vand.u32 %v2579, 4294901760
      %3594 = vmatpush.msra.mxu0 %v3593
      %v3595 = vand.u32 %v2578, 4294901760
      %3596 = vmatpush.msra.mxu0 %v3595
      %v3597 = vand.u32 %v2577, 4294901760
      %3598 = vmatpush.msra.mxu0 %v3597
      %v3599 = vand.u32 %v2576, 4294901760
      %3600 = vmatpush.msra.mxu0 %v3599
      %v3601 = vand.u32 %v2575, 4294901760
      %3602 = vmatpush.msra.mxu0 %v3601
      %v3603 = vand.u32 %v2574, 4294901760
      %3604 = vmatpush.msra.mxu0 %v3603
      %v3605 = vand.u32 %v2681, 4294901760
      %v3606 = vsub.f32 %v2681, %v3605
      %v3607 = vand.u32 %v3606, 4294901760
      %3608 = vmatmul.f32.gmra.mxu0 %v3607
      %v3609 = vpop.f32.mrf.mxu0
      %v3610 = vadd.f32 %v3571, %v3609
      %3611 = vdwg.mxu0
      %v3612 = vand.u32 %v2589, 4294901760
      %v3613 = vsub.f32 %v2589, %v3612
      %v3614 = vand.u32 %v3613, 4294901760
      %3615 = vmatpush.msra.mxu0 %v3614
      %v3616 = vand.u32 %v2588, 4294901760
      %v3617 = vsub.f32 %v2588, %v3616
      %v3618 = vand.u32 %v3617, 4294901760
      %3619 = vmatpush.msra.mxu0 %v3618
      %v3620 = vand.u32 %v2587, 4294901760
      %v3621 = vsub.f32 %v2587, %v3620
      %v3622 = vand.u32 %v3621, 4294901760
      %3623 = vmatpush.msra.mxu0 %v3622
      %v3624 = vand.u32 %v2586, 4294901760
      %v3625 = vsub.f32 %v2586, %v3624
      %v3626 = vand.u32 %v3625, 4294901760
      %3627 = vmatpush.msra.mxu0 %v3626
      %v3628 = vand.u32 %v2585, 4294901760
      %v3629 = vsub.f32 %v2585, %v3628
      %v3630 = vand.u32 %v3629, 4294901760
      %3631 = vmatpush.msra.mxu0 %v3630
      %v3632 = vand.u32 %v2584, 4294901760
      %v3633 = vsub.f32 %v2584, %v3632
      %v3634 = vand.u32 %v3633, 4294901760
      %3635 = vmatpush.msra.mxu0 %v3634
      %v3636 = vand.u32 %v2583, 4294901760
      %v3637 = vsub.f32 %v2583, %v3636
      %v3638 = vand.u32 %v3637, 4294901760
      %3639 = vmatpush.msra.mxu0 %v3638
      %v3640 = vand.u32 %v2582, 4294901760
      %v3641 = vsub.f32 %v2582, %v3640
      %v3642 = vand.u32 %v3641, 4294901760
      %3643 = vmatpush.msra.mxu0 %v3642
      %v3644 = vand.u32 %v2581, 4294901760
      %v3645 = vsub.f32 %v2581, %v3644
      %v3646 = vand.u32 %v3645, 4294901760
      %3647 = vmatpush.msra.mxu0 %v3646
      %v3648 = vand.u32 %v2580, 4294901760
      %v3649 = vsub.f32 %v2580, %v3648
      %v3650 = vand.u32 %v3649, 4294901760
      %3651 = vmatpush.msra.mxu0 %v3650
      %v3652 = vand.u32 %v2579, 4294901760
      %v3653 = vsub.f32 %v2579, %v3652
      %v3654 = vand.u32 %v3653, 4294901760
      %3655 = vmatpush.msra.mxu0 %v3654
      %v3656 = vand.u32 %v2578, 4294901760
      %v3657 = vsub.f32 %v2578, %v3656
      %v3658 = vand.u32 %v3657, 4294901760
      %3659 = vmatpush.msra.mxu0 %v3658
      %v3660 = vand.u32 %v2577, 4294901760
      %v3661 = vsub.f32 %v2577, %v3660
      %v3662 = vand.u32 %v3661, 4294901760
      %3663 = vmatpush.msra.mxu0 %v3662
      %v3664 = vand.u32 %v2576, 4294901760
      %v3665 = vsub.f32 %v2576, %v3664
      %v3666 = vand.u32 %v3665, 4294901760
      %3667 = vmatpush.msra.mxu0 %v3666
      %v3668 = vand.u32 %v2575, 4294901760
      %v3669 = vsub.f32 %v2575, %v3668
      %v3670 = vand.u32 %v3669, 4294901760
      %3671 = vmatpush.msra.mxu0 %v3670
      %v3672 = vand.u32 %v2574, 4294901760
      %v3673 = vsub.f32 %v2574, %v3672
      %v3674 = vand.u32 %v3673, 4294901760
      %3675 = vmatpush.msra.mxu0 %v3674
      %v3676 = vand.u32 %v2681, 4294901760
      %3677 = vmatmul.f32.gmra.mxu0 %v3676
      %v3678 = vpop.f32.mrf.mxu0
      %v3679 = vadd.f32 %v3610, %v3678
      %3680 = vdwg.mxu0
      %v3681 = vand.u32 %v2589, 4294901760
      %3682 = vmatpush.msra.mxu0 %v3681
      %v3683 = vand.u32 %v2588, 4294901760
      %3684 = vmatpush.msra.mxu0 %v3683
      %v3685 = vand.u32 %v2587, 4294901760
      %3686 = vmatpush.msra.mxu0 %v3685
      %v3687 = vand.u32 %v2586, 4294901760
      %3688 = vmatpush.msra.mxu0 %v3687
      %v3689 = vand.u32 %v2585, 4294901760
      %3690 = vmatpush.msra.mxu0 %v3689
      %v3691 = vand.u32 %v2584, 4294901760
      %3692 = vmatpush.msra.mxu0 %v3691
      %v3693 = vand.u32 %v2583, 4294901760
      %3694 = vmatpush.msra.mxu0 %v3693
      %v3695 = vand.u32 %v2582, 4294901760
      %3696 = vmatpush.msra.mxu0 %v3695
      %v3697 = vand.u32 %v2581, 4294901760
      %3698 = vmatpush.msra.mxu0 %v3697
      %v3699 = vand.u32 %v2580, 4294901760
      %3700 = vmatpush.msra.mxu0 %v3699
      %v3701 = vand.u32 %v2579, 4294901760
      %3702 = vmatpush.msra.mxu0 %v3701
      %v3703 = vand.u32 %v2578, 4294901760
      %3704 = vmatpush.msra.mxu0 %v3703
      %v3705 = vand.u32 %v2577, 4294901760
      %3706 = vmatpush.msra.mxu0 %v3705
      %v3707 = vand.u32 %v2576, 4294901760
      %3708 = vmatpush.msra.mxu0 %v3707
      %v3709 = vand.u32 %v2575, 4294901760
      %3710 = vmatpush.msra.mxu0 %v3709
      %v3711 = vand.u32 %v2574, 4294901760
      %3712 = vmatpush.msra.mxu0 %v3711
      %v3713 = vand.u32 %v2681, 4294901760
      %3714 = vmatmul.f32.gmra.mxu0 %v3713
      %v3715 = vpop.f32.mrf.mxu0
      %v3716 = vadd.f32 %v3679, %v3715
      %3717 = vdwg.mxu0
      %v3718 = vand.u32 %v2605, 4294901760
      %3719 = vmatpush.msra.mxu0 %v3718
      %v3720 = vand.u32 %v2604, 4294901760
      %3721 = vmatpush.msra.mxu0 %v3720
      %v3722 = vand.u32 %v2603, 4294901760
      %3723 = vmatpush.msra.mxu0 %v3722
      %v3724 = vand.u32 %v2602, 4294901760
      %3725 = vmatpush.msra.mxu0 %v3724
      %v3726 = vand.u32 %v2601, 4294901760
      %3727 = vmatpush.msra.mxu0 %v3726
      %v3728 = vand.u32 %v2600, 4294901760
      %3729 = vmatpush.msra.mxu0 %v3728
      %v3730 = vand.u32 %v2599, 4294901760
      %3731 = vmatpush.msra.mxu0 %v3730
      %v3732 = vand.u32 %v2598, 4294901760
      %3733 = vmatpush.msra.mxu0 %v3732
      %v3734 = vand.u32 %v2597, 4294901760
      %3735 = vmatpush.msra.mxu0 %v3734
      %v3736 = vand.u32 %v2596, 4294901760
      %3737 = vmatpush.msra.mxu0 %v3736
      %v3738 = vand.u32 %v2595, 4294901760
      %3739 = vmatpush.msra.mxu0 %v3738
      %v3740 = vand.u32 %v2594, 4294901760
      %3741 = vmatpush.msra.mxu0 %v3740
      %v3742 = vand.u32 %v2593, 4294901760
      %3743 = vmatpush.msra.mxu0 %v3742
      %v3744 = vand.u32 %v2592, 4294901760
      %3745 = vmatpush.msra.mxu0 %v3744
      %v3746 = vand.u32 %v2591, 4294901760
      %3747 = vmatpush.msra.mxu0 %v3746
      %v3748 = vand.u32 %v2590, 4294901760
      %3749 = vmatpush.msra.mxu0 %v3748
      %v3750 = vand.u32 %v2682, 4294901760
      %v3751 = vsub.f32 %v2682, %v3750
      %v3752 = vand.u32 %v3751, 4294901760
      %v3753 = vsub.f32 %v3751, %v3752
      %v3754 = vand.u32 %v3753, 4294901760
      %3755 = vmatmul.f32.gmra.mxu0 %v3754
      %v3756 = vpop.f32.mrf.mxu0
      %v3757 = vadd.f32 %v3716, %v3756
      %3758 = vdwg.mxu0
      %v3759 = vand.u32 %v2605, 4294901760
      %v3760 = vsub.f32 %v2605, %v3759
      %v3761 = vand.u32 %v3760, 4294901760
      %v3762 = vsub.f32 %v3760, %v3761
      %v3763 = vand.u32 %v3762, 4294901760
      %3764 = vmatpush.msra.mxu0 %v3763
      %v3765 = vand.u32 %v2604, 4294901760
      %v3766 = vsub.f32 %v2604, %v3765
      %v3767 = vand.u32 %v3766, 4294901760
      %v3768 = vsub.f32 %v3766, %v3767
      %v3769 = vand.u32 %v3768, 4294901760
      %3770 = vmatpush.msra.mxu0 %v3769
      %v3771 = vand.u32 %v2603, 4294901760
      %v3772 = vsub.f32 %v2603, %v3771
      %v3773 = vand.u32 %v3772, 4294901760
      %v3774 = vsub.f32 %v3772, %v3773
      %v3775 = vand.u32 %v3774, 4294901760
      %3776 = vmatpush.msra.mxu0 %v3775
      %v3777 = vand.u32 %v2602, 4294901760
      %v3778 = vsub.f32 %v2602, %v3777
      %v3779 = vand.u32 %v3778, 4294901760
      %v3780 = vsub.f32 %v3778, %v3779
      %v3781 = vand.u32 %v3780, 4294901760
      %3782 = vmatpush.msra.mxu0 %v3781
      %v3783 = vand.u32 %v2601, 4294901760
      %v3784 = vsub.f32 %v2601, %v3783
      %v3785 = vand.u32 %v3784, 4294901760
      %v3786 = vsub.f32 %v3784, %v3785
      %v3787 = vand.u32 %v3786, 4294901760
      %3788 = vmatpush.msra.mxu0 %v3787
      %v3789 = vand.u32 %v2600, 4294901760
      %v3790 = vsub.f32 %v2600, %v3789
      %v3791 = vand.u32 %v3790, 4294901760
      %v3792 = vsub.f32 %v3790, %v3791
      %v3793 = vand.u32 %v3792, 4294901760
      %3794 = vmatpush.msra.mxu0 %v3793
      %v3795 = vand.u32 %v2599, 4294901760
      %v3796 = vsub.f32 %v2599, %v3795
      %v3797 = vand.u32 %v3796, 4294901760
      %v3798 = vsub.f32 %v3796, %v3797
      %v3799 = vand.u32 %v3798, 4294901760
      %3800 = vmatpush.msra.mxu0 %v3799
      %v3801 = vand.u32 %v2598, 4294901760
      %v3802 = vsub.f32 %v2598, %v3801
      %v3803 = vand.u32 %v3802, 4294901760
      %v3804 = vsub.f32 %v3802, %v3803
      %v3805 = vand.u32 %v3804, 4294901760
      %3806 = vmatpush.msra.mxu0 %v3805
      %v3807 = vand.u32 %v2597, 4294901760
      %v3808 = vsub.f32 %v2597, %v3807
      %v3809 = vand.u32 %v3808, 4294901760
      %v3810 = vsub.f32 %v3808, %v3809
      %v3811 = vand.u32 %v3810, 4294901760
      %3812 = vmatpush.msra.mxu0 %v3811
      %v3813 = vand.u32 %v2596, 4294901760
      %v3814 = vsub.f32 %v2596, %v3813
      %v3815 = vand.u32 %v3814, 4294901760
      %v3816 = vsub.f32 %v3814, %v3815
      %v3817 = vand.u32 %v3816, 4294901760
      %3818 = vmatpush.msra.mxu0 %v3817
      %v3819 = vand.u32 %v2595, 4294901760
      %v3820 = vsub.f32 %v2595, %v3819
      %v3821 = vand.u32 %v3820, 4294901760
      %v3822 = vsub.f32 %v3820, %v3821
      %v3823 = vand.u32 %v3822, 4294901760
      %3824 = vmatpush.msra.mxu0 %v3823
      %v3825 = vand.u32 %v2594, 4294901760
      %v3826 = vsub.f32 %v2594, %v3825
      %v3827 = vand.u32 %v3826, 4294901760
      %v3828 = vsub.f32 %v3826, %v3827
      %v3829 = vand.u32 %v3828, 4294901760
      %3830 = vmatpush.msra.mxu0 %v3829
      %v3831 = vand.u32 %v2593, 4294901760
      %v3832 = vsub.f32 %v2593, %v3831
      %v3833 = vand.u32 %v3832, 4294901760
      %v3834 = vsub.f32 %v3832, %v3833
      %v3835 = vand.u32 %v3834, 4294901760
      %3836 = vmatpush.msra.mxu0 %v3835
      %v3837 = vand.u32 %v2592, 4294901760
      %v3838 = vsub.f32 %v2592, %v3837
      %v3839 = vand.u32 %v3838, 4294901760
      %v3840 = vsub.f32 %v3838, %v3839
      %v3841 = vand.u32 %v3840, 4294901760
      %3842 = vmatpush.msra.mxu0 %v3841
      %v3843 = vand.u32 %v2591, 4294901760
      %v3844 = vsub.f32 %v2591, %v3843
      %v3845 = vand.u32 %v3844, 4294901760
      %v3846 = vsub.f32 %v3844, %v3845
      %v3847 = vand.u32 %v3846, 4294901760
      %3848 = vmatpush.msra.mxu0 %v3847
      %v3849 = vand.u32 %v2590, 4294901760
      %v3850 = vsub.f32 %v2590, %v3849
      %v3851 = vand.u32 %v3850, 4294901760
      %v3852 = vsub.f32 %v3850, %v3851
      %v3853 = vand.u32 %v3852, 4294901760
      %3854 = vmatpush.msra.mxu0 %v3853
      %v3855 = vand.u32 %v2682, 4294901760
      %3856 = vmatmul.f32.gmra.mxu0 %v3855
      %v3857 = vpop.f32.mrf.mxu0
      %v3858 = vadd.f32 %v3757, %v3857
      %3859 = vdwg.mxu0
      %v3860 = vand.u32 %v2605, 4294901760
      %v3861 = vsub.f32 %v2605, %v3860
      %3862 = vmatpush.msra.mxu0 %v3861
      %v3863 = vand.u32 %v2604, 4294901760
      %v3864 = vsub.f32 %v2604, %v3863
      %3865 = vmatpush.msra.mxu0 %v3864
      %v3866 = vand.u32 %v2603, 4294901760
      %v3867 = vsub.f32 %v2603, %v3866
      %3868 = vmatpush.msra.mxu0 %v3867
      %v3869 = vand.u32 %v2602, 4294901760
      %v3870 = vsub.f32 %v2602, %v3869
      %3871 = vmatpush.msra.mxu0 %v3870
      %v3872 = vand.u32 %v2601, 4294901760
      %v3873 = vsub.f32 %v2601, %v3872
      %3874 = vmatpush.msra.mxu0 %v3873
      %v3875 = vand.u32 %v2600, 4294901760
      %v3876 = vsub.f32 %v2600, %v3875
      %3877 = vmatpush.msra.mxu0 %v3876
      %v3878 = vand.u32 %v2599, 4294901760
      %v3879 = vsub.f32 %v2599, %v3878
      %3880 = vmatpush.msra.mxu0 %v3879
      %v3881 = vand.u32 %v2598, 4294901760
      %v3882 = vsub.f32 %v2598, %v3881
      %3883 = vmatpush.msra.mxu0 %v3882
      %v3884 = vand.u32 %v2597, 4294901760
      %v3885 = vsub.f32 %v2597, %v3884
      %3886 = vmatpush.msra.mxu0 %v3885
      %v3887 = vand.u32 %v2596, 4294901760
      %v3888 = vsub.f32 %v2596, %v3887
      %3889 = vmatpush.msra.mxu0 %v3888
      %v3890 = vand.u32 %v2595, 4294901760
      %v3891 = vsub.f32 %v2595, %v3890
      %3892 = vmatpush.msra.mxu0 %v3891
      %v3893 = vand.u32 %v2594, 4294901760
      %v3894 = vsub.f32 %v2594, %v3893
      %3895 = vmatpush.msra.mxu0 %v3894
      %v3896 = vand.u32 %v2593, 4294901760
      %v3897 = vsub.f32 %v2593, %v3896
      %3898 = vmatpush.msra.mxu0 %v3897
      %v3899 = vand.u32 %v2592, 4294901760
      %v3900 = vsub.f32 %v2592, %v3899
      %3901 = vmatpush.msra.mxu0 %v3900
      %v3902 = vand.u32 %v2591, 4294901760
      %v3903 = vsub.f32 %v2591, %v3902
      %3904 = vmatpush.msra.mxu0 %v3903
      %v3905 = vand.u32 %v2590, 4294901760
      %v3906 = vsub.f32 %v2590, %v3905
      %3907 = vmatpush.msra.mxu0 %v3906
      %v3908 = vand.u32 %v2682, 4294901760
      %v3909 = vsub.f32 %v2682, %v3908
      %3910 = vmatmul.f32.gmra.mxu0 %v3909
      %v3911 = vpop.f32.mrf.mxu0
      %v3912 = vadd.f32 %v3858, %v3911
      %3913 = vdwg.mxu0
      %v3914 = vand.u32 %v2605, 4294901760
      %3915 = vmatpush.msra.mxu0 %v3914
      %v3916 = vand.u32 %v2604, 4294901760
      %3917 = vmatpush.msra.mxu0 %v3916
      %v3918 = vand.u32 %v2603, 4294901760
      %3919 = vmatpush.msra.mxu0 %v3918
      %v3920 = vand.u32 %v2602, 4294901760
      %3921 = vmatpush.msra.mxu0 %v3920
      %v3922 = vand.u32 %v2601, 4294901760
      %3923 = vmatpush.msra.mxu0 %v3922
      %v3924 = vand.u32 %v2600, 4294901760
      %3925 = vmatpush.msra.mxu0 %v3924
      %v3926 = vand.u32 %v2599, 4294901760
      %3927 = vmatpush.msra.mxu0 %v3926
      %v3928 = vand.u32 %v2598, 4294901760
      %3929 = vmatpush.msra.mxu0 %v3928
      %v3930 = vand.u32 %v2597, 4294901760
      %3931 = vmatpush.msra.mxu0 %v3930
      %v3932 = vand.u32 %v2596, 4294901760
      %3933 = vmatpush.msra.mxu0 %v3932
      %v3934 = vand.u32 %v2595, 4294901760
      %3935 = vmatpush.msra.mxu0 %v3934
      %v3936 = vand.u32 %v2594, 4294901760
      %3937 = vmatpush.msra.mxu0 %v3936
      %v3938 = vand.u32 %v2593, 4294901760
      %3939 = vmatpush.msra.mxu0 %v3938
      %v3940 = vand.u32 %v2592, 4294901760
      %3941 = vmatpush.msra.mxu0 %v3940
      %v3942 = vand.u32 %v2591, 4294901760
      %3943 = vmatpush.msra.mxu0 %v3942
      %v3944 = vand.u32 %v2590, 4294901760
      %3945 = vmatpush.msra.mxu0 %v3944
      %v3946 = vand.u32 %v2682, 4294901760
      %v3947 = vsub.f32 %v2682, %v3946
      %v3948 = vand.u32 %v3947, 4294901760
      %3949 = vmatmul.f32.gmra.mxu0 %v3948
      %v3950 = vpop.f32.mrf.mxu0
      %v3951 = vadd.f32 %v3912, %v3950
      %3952 = vdwg.mxu0
      %v3953 = vand.u32 %v2605, 4294901760
      %v3954 = vsub.f32 %v2605, %v3953
      %v3955 = vand.u32 %v3954, 4294901760
      %3956 = vmatpush.msra.mxu0 %v3955
      %v3957 = vand.u32 %v2604, 4294901760
      %v3958 = vsub.f32 %v2604, %v3957
      %v3959 = vand.u32 %v3958, 4294901760
      %3960 = vmatpush.msra.mxu0 %v3959
      %v3961 = vand.u32 %v2603, 4294901760
      %v3962 = vsub.f32 %v2603, %v3961
      %v3963 = vand.u32 %v3962, 4294901760
      %3964 = vmatpush.msra.mxu0 %v3963
      %v3965 = vand.u32 %v2602, 4294901760
      %v3966 = vsub.f32 %v2602, %v3965
      %v3967 = vand.u32 %v3966, 4294901760
      %3968 = vmatpush.msra.mxu0 %v3967
      %v3969 = vand.u32 %v2601, 4294901760
      %v3970 = vsub.f32 %v2601, %v3969
      %v3971 = vand.u32 %v3970, 4294901760
      %3972 = vmatpush.msra.mxu0 %v3971
      %v3973 = vand.u32 %v2600, 4294901760
      %v3974 = vsub.f32 %v2600, %v3973
      %v3975 = vand.u32 %v3974, 4294901760
      %3976 = vmatpush.msra.mxu0 %v3975
      %v3977 = vand.u32 %v2599, 4294901760
      %v3978 = vsub.f32 %v2599, %v3977
      %v3979 = vand.u32 %v3978, 4294901760
      %3980 = vmatpush.msra.mxu0 %v3979
      %v3981 = vand.u32 %v2598, 4294901760
      %v3982 = vsub.f32 %v2598, %v3981
      %v3983 = vand.u32 %v3982, 4294901760
      %3984 = vmatpush.msra.mxu0 %v3983
      %v3985 = vand.u32 %v2597, 4294901760
      %v3986 = vsub.f32 %v2597, %v3985
      %v3987 = vand.u32 %v3986, 4294901760
      %3988 = vmatpush.msra.mxu0 %v3987
      %v3989 = vand.u32 %v2596, 4294901760
      %v3990 = vsub.f32 %v2596, %v3989
      %v3991 = vand.u32 %v3990, 4294901760
      %3992 = vmatpush.msra.mxu0 %v3991
      %v3993 = vand.u32 %v2595, 4294901760
      %v3994 = vsub.f32 %v2595, %v3993
      %v3995 = vand.u32 %v3994, 4294901760
      %3996 = vmatpush.msra.mxu0 %v3995
      %v3997 = vand.u32 %v2594, 4294901760
      %v3998 = vsub.f32 %v2594, %v3997
      %v3999 = vand.u32 %v3998, 4294901760
      %4000 = vmatpush.msra.mxu0 %v3999
      %v4001 = vand.u32 %v2593, 4294901760
      %v4002 = vsub.f32 %v2593, %v4001
      %v4003 = vand.u32 %v4002, 4294901760
      %4004 = vmatpush.msra.mxu0 %v4003
      %v4005 = vand.u32 %v2592, 4294901760
      %v4006 = vsub.f32 %v2592, %v4005
      %v4007 = vand.u32 %v4006, 4294901760
      %4008 = vmatpush.msra.mxu0 %v4007
      %v4009 = vand.u32 %v2591, 4294901760
      %v4010 = vsub.f32 %v2591, %v4009
      %v4011 = vand.u32 %v4010, 4294901760
      %4012 = vmatpush.msra.mxu0 %v4011
      %v4013 = vand.u32 %v2590, 4294901760
      %v4014 = vsub.f32 %v2590, %v4013
      %v4015 = vand.u32 %v4014, 4294901760
      %4016 = vmatpush.msra.mxu0 %v4015
      %v4017 = vand.u32 %v2682, 4294901760
      %4018 = vmatmul.f32.gmra.mxu0 %v4017
      %v4019 = vpop.f32.mrf.mxu0
      %v4020 = vadd.f32 %v3951, %v4019
      %4021 = vdwg.mxu0
      %v4022 = vand.u32 %v2605, 4294901760
      %4023 = vmatpush.msra.mxu0 %v4022
      %v4024 = vand.u32 %v2604, 4294901760
      %4025 = vmatpush.msra.mxu0 %v4024
      %v4026 = vand.u32 %v2603, 4294901760
      %4027 = vmatpush.msra.mxu0 %v4026
      %v4028 = vand.u32 %v2602, 4294901760
      %4029 = vmatpush.msra.mxu0 %v4028
      %v4030 = vand.u32 %v2601, 4294901760
      %4031 = vmatpush.msra.mxu0 %v4030
      %v4032 = vand.u32 %v2600, 4294901760
      %4033 = vmatpush.msra.mxu0 %v4032
      %v4034 = vand.u32 %v2599, 4294901760
      %4035 = vmatpush.msra.mxu0 %v4034
      %v4036 = vand.u32 %v2598, 4294901760
      %4037 = vmatpush.msra.mxu0 %v4036
      %v4038 = vand.u32 %v2597, 4294901760
      %4039 = vmatpush.msra.mxu0 %v4038
      %v4040 = vand.u32 %v2596, 4294901760
      %4041 = vmatpush.msra.mxu0 %v4040
      %v4042 = vand.u32 %v2595, 4294901760
      %4043 = vmatpush.msra.mxu0 %v4042
      %v4044 = vand.u32 %v2594, 4294901760
      %4045 = vmatpush.msra.mxu0 %v4044
      %v4046 = vand.u32 %v2593, 4294901760
      %4047 = vmatpush.msra.mxu0 %v4046
      %v4048 = vand.u32 %v2592, 4294901760
      %4049 = vmatpush.msra.mxu0 %v4048
      %v4050 = vand.u32 %v2591, 4294901760
      %4051 = vmatpush.msra.mxu0 %v4050
      %v4052 = vand.u32 %v2590, 4294901760
      %4053 = vmatpush.msra.mxu0 %v4052
      %v4054 = vand.u32 %v2682, 4294901760
      %4055 = vmatmul.f32.gmra.mxu0 %v4054
      %v4056 = vpop.f32.mrf.mxu0
      %v4057 = vadd.f32 %v4020, %v4056
      %4058 = vdwg.mxu0
      %v4059 = vand.u32 %v2621, 4294901760
      %4060 = vmatpush.msra.mxu0 %v4059
      %v4061 = vand.u32 %v2620, 4294901760
      %4062 = vmatpush.msra.mxu0 %v4061
      %v4063 = vand.u32 %v2619, 4294901760
      %4064 = vmatpush.msra.mxu0 %v4063
      %v4065 = vand.u32 %v2618, 4294901760
      %4066 = vmatpush.msra.mxu0 %v4065
      %v4067 = vand.u32 %v2617, 4294901760
      %4068 = vmatpush.msra.mxu0 %v4067
      %v4069 = vand.u32 %v2616, 4294901760
      %4070 = vmatpush.msra.mxu0 %v4069
      %v4071 = vand.u32 %v2615, 4294901760
      %4072 = vmatpush.msra.mxu0 %v4071
      %v4073 = vand.u32 %v2614, 4294901760
      %4074 = vmatpush.msra.mxu0 %v4073
      %v4075 = vand.u32 %v2613, 4294901760
      %4076 = vmatpush.msra.mxu0 %v4075
      %v4077 = vand.u32 %v2612, 4294901760
      %4078 = vmatpush.msra.mxu0 %v4077
      %v4079 = vand.u32 %v2611, 4294901760
      %4080 = vmatpush.msra.mxu0 %v4079
      %v4081 = vand.u32 %v2610, 4294901760
      %4082 = vmatpush.msra.mxu0 %v4081
      %v4083 = vand.u32 %v2609, 4294901760
      %4084 = vmatpush.msra.mxu0 %v4083
      %v4085 = vand.u32 %v2608, 4294901760
      %4086 = vmatpush.msra.mxu0 %v4085
      %v4087 = vand.u32 %v2607, 4294901760
      %4088 = vmatpush.msra.mxu0 %v4087
      %v4089 = vand.u32 %v2606, 4294901760
      %4090 = vmatpush.msra.mxu0 %v4089
      %v4091 = vand.u32 %v2683, 4294901760
      %v4092 = vsub.f32 %v2683, %v4091
      %v4093 = vand.u32 %v4092, 4294901760
      %v4094 = vsub.f32 %v4092, %v4093
      %v4095 = vand.u32 %v4094, 4294901760
      %4096 = vmatmul.f32.gmra.mxu0 %v4095
      %v4097 = vpop.f32.mrf.mxu0
      %v4098 = vadd.f32 %v4057, %v4097
      %4099 = vdwg.mxu0
      %v4100 = vand.u32 %v2621, 4294901760
      %v4101 = vsub.f32 %v2621, %v4100
      %v4102 = vand.u32 %v4101, 4294901760
      %v4103 = vsub.f32 %v4101, %v4102
      %v4104 = vand.u32 %v4103, 4294901760
      %4105 = vmatpush.msra.mxu0 %v4104
      %v4106 = vand.u32 %v2620, 4294901760
      %v4107 = vsub.f32 %v2620, %v4106
      %v4108 = vand.u32 %v4107, 4294901760
      %v4109 = vsub.f32 %v4107, %v4108
      %v4110 = vand.u32 %v4109, 4294901760
      %4111 = vmatpush.msra.mxu0 %v4110
      %v4112 = vand.u32 %v2619, 4294901760
      %v4113 = vsub.f32 %v2619, %v4112
      %v4114 = vand.u32 %v4113, 4294901760
      %v4115 = vsub.f32 %v4113, %v4114
      %v4116 = vand.u32 %v4115, 4294901760
      %4117 = vmatpush.msra.mxu0 %v4116
      %v4118 = vand.u32 %v2618, 4294901760
      %v4119 = vsub.f32 %v2618, %v4118
      %v4120 = vand.u32 %v4119, 4294901760
      %v4121 = vsub.f32 %v4119, %v4120
      %v4122 = vand.u32 %v4121, 4294901760
      %4123 = vmatpush.msra.mxu0 %v4122
      %v4124 = vand.u32 %v2617, 4294901760
      %v4125 = vsub.f32 %v2617, %v4124
      %v4126 = vand.u32 %v4125, 4294901760
      %v4127 = vsub.f32 %v4125, %v4126
      %v4128 = vand.u32 %v4127, 4294901760
      %4129 = vmatpush.msra.mxu0 %v4128
      %v4130 = vand.u32 %v2616, 4294901760
      %v4131 = vsub.f32 %v2616, %v4130
      %v4132 = vand.u32 %v4131, 4294901760
      %v4133 = vsub.f32 %v4131, %v4132
      %v4134 = vand.u32 %v4133, 4294901760
      %4135 = vmatpush.msra.mxu0 %v4134
      %v4136 = vand.u32 %v2615, 4294901760
      %v4137 = vsub.f32 %v2615, %v4136
      %v4138 = vand.u32 %v4137, 4294901760
      %v4139 = vsub.f32 %v4137, %v4138
      %v4140 = vand.u32 %v4139, 4294901760
      %4141 = vmatpush.msra.mxu0 %v4140
      %v4142 = vand.u32 %v2614, 4294901760
      %v4143 = vsub.f32 %v2614, %v4142
      %v4144 = vand.u32 %v4143, 4294901760
      %v4145 = vsub.f32 %v4143, %v4144
      %v4146 = vand.u32 %v4145, 4294901760
      %4147 = vmatpush.msra.mxu0 %v4146
      %v4148 = vand.u32 %v2613, 4294901760
      %v4149 = vsub.f32 %v2613, %v4148
      %v4150 = vand.u32 %v4149, 4294901760
      %v4151 = vsub.f32 %v4149, %v4150
      %v4152 = vand.u32 %v4151, 4294901760
      %4153 = vmatpush.msra.mxu0 %v4152
      %v4154 = vand.u32 %v2612, 4294901760
      %v4155 = vsub.f32 %v2612, %v4154
      %v4156 = vand.u32 %v4155, 4294901760
      %v4157 = vsub.f32 %v4155, %v4156
      %v4158 = vand.u32 %v4157, 4294901760
      %4159 = vmatpush.msra.mxu0 %v4158
      %v4160 = vand.u32 %v2611, 4294901760
      %v4161 = vsub.f32 %v2611, %v4160
      %v4162 = vand.u32 %v4161, 4294901760
      %v4163 = vsub.f32 %v4161, %v4162
      %v4164 = vand.u32 %v4163, 4294901760
      %4165 = vmatpush.msra.mxu0 %v4164
      %v4166 = vand.u32 %v2610, 4294901760
      %v4167 = vsub.f32 %v2610, %v4166
      %v4168 = vand.u32 %v4167, 4294901760
      %v4169 = vsub.f32 %v4167, %v4168
      %v4170 = vand.u32 %v4169, 4294901760
      %4171 = vmatpush.msra.mxu0 %v4170
      %v4172 = vand.u32 %v2609, 4294901760
      %v4173 = vsub.f32 %v2609, %v4172
      %v4174 = vand.u32 %v4173, 4294901760
      %v4175 = vsub.f32 %v4173, %v4174
      %v4176 = vand.u32 %v4175, 4294901760
      %4177 = vmatpush.msra.mxu0 %v4176
      %v4178 = vand.u32 %v2608, 4294901760
      %v4179 = vsub.f32 %v2608, %v4178
      %v4180 = vand.u32 %v4179, 4294901760
      %v4181 = vsub.f32 %v4179, %v4180
      %v4182 = vand.u32 %v4181, 4294901760
      %4183 = vmatpush.msra.mxu0 %v4182
      %v4184 = vand.u32 %v2607, 4294901760
      %v4185 = vsub.f32 %v2607, %v4184
      %v4186 = vand.u32 %v4185, 4294901760
      %v4187 = vsub.f32 %v4185, %v4186
      %v4188 = vand.u32 %v4187, 4294901760
      %4189 = vmatpush.msra.mxu0 %v4188
      %v4190 = vand.u32 %v2606, 4294901760
      %v4191 = vsub.f32 %v2606, %v4190
      %v4192 = vand.u32 %v4191, 4294901760
      %v4193 = vsub.f32 %v4191, %v4192
      %v4194 = vand.u32 %v4193, 4294901760
      %4195 = vmatpush.msra.mxu0 %v4194
      %v4196 = vand.u32 %v2683, 4294901760
      %4197 = vmatmul.f32.gmra.mxu0 %v4196
      %v4198 = vpop.f32.mrf.mxu0
      %v4199 = vadd.f32 %v4098, %v4198
      %4200 = vdwg.mxu0
      %v4201 = vand.u32 %v2621, 4294901760
      %v4202 = vsub.f32 %v2621, %v4201
      %4203 = vmatpush.msra.mxu0 %v4202
      %v4204 = vand.u32 %v2620, 4294901760
      %v4205 = vsub.f32 %v2620, %v4204
      %4206 = vmatpush.msra.mxu0 %v4205
      %v4207 = vand.u32 %v2619, 4294901760
      %v4208 = vsub.f32 %v2619, %v4207
      %4209 = vmatpush.msra.mxu0 %v4208
      %v4210 = vand.u32 %v2618, 4294901760
      %v4211 = vsub.f32 %v2618, %v4210
      %4212 = vmatpush.msra.mxu0 %v4211
      %v4213 = vand.u32 %v2617, 4294901760
      %v4214 = vsub.f32 %v2617, %v4213
      %4215 = vmatpush.msra.mxu0 %v4214
      %v4216 = vand.u32 %v2616, 4294901760
      %v4217 = vsub.f32 %v2616, %v4216
      %4218 = vmatpush.msra.mxu0 %v4217
      %v4219 = vand.u32 %v2615, 4294901760
      %v4220 = vsub.f32 %v2615, %v4219
      %4221 = vmatpush.msra.mxu0 %v4220
      %v4222 = vand.u32 %v2614, 4294901760
      %v4223 = vsub.f32 %v2614, %v4222
      %4224 = vmatpush.msra.mxu0 %v4223
      %v4225 = vand.u32 %v2613, 4294901760
      %v4226 = vsub.f32 %v2613, %v4225
      %4227 = vmatpush.msra.mxu0 %v4226
      %v4228 = vand.u32 %v2612, 4294901760
      %v4229 = vsub.f32 %v2612, %v4228
      %4230 = vmatpush.msra.mxu0 %v4229
      %v4231 = vand.u32 %v2611, 4294901760
      %v4232 = vsub.f32 %v2611, %v4231
      %4233 = vmatpush.msra.mxu0 %v4232
      %v4234 = vand.u32 %v2610, 4294901760
      %v4235 = vsub.f32 %v2610, %v4234
      %4236 = vmatpush.msra.mxu0 %v4235
      %v4237 = vand.u32 %v2609, 4294901760
      %v4238 = vsub.f32 %v2609, %v4237
      %4239 = vmatpush.msra.mxu0 %v4238
      %v4240 = vand.u32 %v2608, 4294901760
      %v4241 = vsub.f32 %v2608, %v4240
      %4242 = vmatpush.msra.mxu0 %v4241
      %v4243 = vand.u32 %v2607, 4294901760
      %v4244 = vsub.f32 %v2607, %v4243
      %4245 = vmatpush.msra.mxu0 %v4244
      %v4246 = vand.u32 %v2606, 4294901760
      %v4247 = vsub.f32 %v2606, %v4246
      %4248 = vmatpush.msra.mxu0 %v4247
      %v4249 = vand.u32 %v2683, 4294901760
      %v4250 = vsub.f32 %v2683, %v4249
      %4251 = vmatmul.f32.gmra.mxu0 %v4250
      %v4252 = vpop.f32.mrf.mxu0
      %v4253 = vadd.f32 %v4199, %v4252
      %4254 = vdwg.mxu0
      %v4255 = vand.u32 %v2621, 4294901760
      %4256 = vmatpush.msra.mxu0 %v4255
      %v4257 = vand.u32 %v2620, 4294901760
      %4258 = vmatpush.msra.mxu0 %v4257
      %v4259 = vand.u32 %v2619, 4294901760
      %4260 = vmatpush.msra.mxu0 %v4259
      %v4261 = vand.u32 %v2618, 4294901760
      %4262 = vmatpush.msra.mxu0 %v4261
      %v4263 = vand.u32 %v2617, 4294901760
      %4264 = vmatpush.msra.mxu0 %v4263
      %v4265 = vand.u32 %v2616, 4294901760
      %4266 = vmatpush.msra.mxu0 %v4265
      %v4267 = vand.u32 %v2615, 4294901760
      %4268 = vmatpush.msra.mxu0 %v4267
      %v4269 = vand.u32 %v2614, 4294901760
      %4270 = vmatpush.msra.mxu0 %v4269
      %v4271 = vand.u32 %v2613, 4294901760
      %4272 = vmatpush.msra.mxu0 %v4271
      %v4273 = vand.u32 %v2612, 4294901760
      %4274 = vmatpush.msra.mxu0 %v4273
      %v4275 = vand.u32 %v2611, 4294901760
      %4276 = vmatpush.msra.mxu0 %v4275
      %v4277 = vand.u32 %v2610, 4294901760
      %4278 = vmatpush.msra.mxu0 %v4277
      %v4279 = vand.u32 %v2609, 4294901760
      %4280 = vmatpush.msra.mxu0 %v4279
      %v4281 = vand.u32 %v2608, 4294901760
      %4282 = vmatpush.msra.mxu0 %v4281
      %v4283 = vand.u32 %v2607, 4294901760
      %4284 = vmatpush.msra.mxu0 %v4283
      %v4285 = vand.u32 %v2606, 4294901760
      %4286 = vmatpush.msra.mxu0 %v4285
      %v4287 = vand.u32 %v2683, 4294901760
      %v4288 = vsub.f32 %v2683, %v4287
      %v4289 = vand.u32 %v4288, 4294901760
      %4290 = vmatmul.f32.gmra.mxu0 %v4289
      %v4291 = vpop.f32.mrf.mxu0
      %v4292 = vadd.f32 %v4253, %v4291
      %4293 = vdwg.mxu0
      %v4294 = vand.u32 %v2621, 4294901760
      %v4295 = vsub.f32 %v2621, %v4294
      %v4296 = vand.u32 %v4295, 4294901760
      %4297 = vmatpush.msra.mxu0 %v4296
      %v4298 = vand.u32 %v2620, 4294901760
      %v4299 = vsub.f32 %v2620, %v4298
      %v4300 = vand.u32 %v4299, 4294901760
      %4301 = vmatpush.msra.mxu0 %v4300
      %v4302 = vand.u32 %v2619, 4294901760
      %v4303 = vsub.f32 %v2619, %v4302
      %v4304 = vand.u32 %v4303, 4294901760
      %4305 = vmatpush.msra.mxu0 %v4304
      %v4306 = vand.u32 %v2618, 4294901760
      %v4307 = vsub.f32 %v2618, %v4306
      %v4308 = vand.u32 %v4307, 4294901760
      %4309 = vmatpush.msra.mxu0 %v4308
      %v4310 = vand.u32 %v2617, 4294901760
      %v4311 = vsub.f32 %v2617, %v4310
      %v4312 = vand.u32 %v4311, 4294901760
      %4313 = vmatpush.msra.mxu0 %v4312
      %v4314 = vand.u32 %v2616, 4294901760
      %v4315 = vsub.f32 %v2616, %v4314
      %v4316 = vand.u32 %v4315, 4294901760
      %4317 = vmatpush.msra.mxu0 %v4316
      %v4318 = vand.u32 %v2615, 4294901760
      %v4319 = vsub.f32 %v2615, %v4318
      %v4320 = vand.u32 %v4319, 4294901760
      %4321 = vmatpush.msra.mxu0 %v4320
      %v4322 = vand.u32 %v2614, 4294901760
      %v4323 = vsub.f32 %v2614, %v4322
      %v4324 = vand.u32 %v4323, 4294901760
      %4325 = vmatpush.msra.mxu0 %v4324
      %v4326 = vand.u32 %v2613, 4294901760
      %v4327 = vsub.f32 %v2613, %v4326
      %v4328 = vand.u32 %v4327, 4294901760
      %4329 = vmatpush.msra.mxu0 %v4328
      %v4330 = vand.u32 %v2612, 4294901760
      %v4331 = vsub.f32 %v2612, %v4330
      %v4332 = vand.u32 %v4331, 4294901760
      %4333 = vmatpush.msra.mxu0 %v4332
      %v4334 = vand.u32 %v2611, 4294901760
      %v4335 = vsub.f32 %v2611, %v4334
      %v4336 = vand.u32 %v4335, 4294901760
      %4337 = vmatpush.msra.mxu0 %v4336
      %v4338 = vand.u32 %v2610, 4294901760
      %v4339 = vsub.f32 %v2610, %v4338
      %v4340 = vand.u32 %v4339, 4294901760
      %4341 = vmatpush.msra.mxu0 %v4340
      %v4342 = vand.u32 %v2609, 4294901760
      %v4343 = vsub.f32 %v2609, %v4342
      %v4344 = vand.u32 %v4343, 4294901760
      %4345 = vmatpush.msra.mxu0 %v4344
      %v4346 = vand.u32 %v2608, 4294901760
      %v4347 = vsub.f32 %v2608, %v4346
      %v4348 = vand.u32 %v4347, 4294901760
      %4349 = vmatpush.msra.mxu0 %v4348
      %v4350 = vand.u32 %v2607, 4294901760
      %v4351 = vsub.f32 %v2607, %v4350
      %v4352 = vand.u32 %v4351, 4294901760
      %4353 = vmatpush.msra.mxu0 %v4352
      %v4354 = vand.u32 %v2606, 4294901760
      %v4355 = vsub.f32 %v2606, %v4354
      %v4356 = vand.u32 %v4355, 4294901760
      %4357 = vmatpush.msra.mxu0 %v4356
      %v4358 = vand.u32 %v2683, 4294901760
      %4359 = vmatmul.f32.gmra.mxu0 %v4358
      %v4360 = vpop.f32.mrf.mxu0
      %v4361 = vadd.f32 %v4292, %v4360
      %4362 = vdwg.mxu0
      %v4363 = vand.u32 %v2621, 4294901760
      %4364 = vmatpush.msra.mxu0 %v4363
      %v4365 = vand.u32 %v2620, 4294901760
      %4366 = vmatpush.msra.mxu0 %v4365
      %v4367 = vand.u32 %v2619, 4294901760
      %4368 = vmatpush.msra.mxu0 %v4367
      %v4369 = vand.u32 %v2618, 4294901760
      %4370 = vmatpush.msra.mxu0 %v4369
      %v4371 = vand.u32 %v2617, 4294901760
      %4372 = vmatpush.msra.mxu0 %v4371
      %v4373 = vand.u32 %v2616, 4294901760
      %4374 = vmatpush.msra.mxu0 %v4373
      %v4375 = vand.u32 %v2615, 4294901760
      %4376 = vmatpush.msra.mxu0 %v4375
      %v4377 = vand.u32 %v2614, 4294901760
      %4378 = vmatpush.msra.mxu0 %v4377
      %v4379 = vand.u32 %v2613, 4294901760
      %4380 = vmatpush.msra.mxu0 %v4379
      %v4381 = vand.u32 %v2612, 4294901760
      %4382 = vmatpush.msra.mxu0 %v4381
      %v4383 = vand.u32 %v2611, 4294901760
      %4384 = vmatpush.msra.mxu0 %v4383
      %v4385 = vand.u32 %v2610, 4294901760
      %4386 = vmatpush.msra.mxu0 %v4385
      %v4387 = vand.u32 %v2609, 4294901760
      %4388 = vmatpush.msra.mxu0 %v4387
      %v4389 = vand.u32 %v2608, 4294901760
      %4390 = vmatpush.msra.mxu0 %v4389
      %v4391 = vand.u32 %v2607, 4294901760
      %4392 = vmatpush.msra.mxu0 %v4391
      %v4393 = vand.u32 %v2606, 4294901760
      %4394 = vmatpush.msra.mxu0 %v4393
      %v4395 = vand.u32 %v2683, 4294901760
      %4396 = vmatmul.f32.gmra.mxu0 %v4395
      %v4397 = vpop.f32.mrf.mxu0
      %v4398 = vadd.f32 %v4361, %v4397
      %4399 = vdwg.mxu0
      %v4400 = vand.u32 %v2637, 4294901760
      %4401 = vmatpush.msra.mxu0 %v4400
      %v4402 = vand.u32 %v2636, 4294901760
      %4403 = vmatpush.msra.mxu0 %v4402
      %v4404 = vand.u32 %v2635, 4294901760
      %4405 = vmatpush.msra.mxu0 %v4404
      %v4406 = vand.u32 %v2634, 4294901760
      %4407 = vmatpush.msra.mxu0 %v4406
      %v4408 = vand.u32 %v2633, 4294901760
      %4409 = vmatpush.msra.mxu0 %v4408
      %v4410 = vand.u32 %v2632, 4294901760
      %4411 = vmatpush.msra.mxu0 %v4410
      %v4412 = vand.u32 %v2631, 4294901760
      %4413 = vmatpush.msra.mxu0 %v4412
      %v4414 = vand.u32 %v2630, 4294901760
      %4415 = vmatpush.msra.mxu0 %v4414
      %v4416 = vand.u32 %v2629, 4294901760
      %4417 = vmatpush.msra.mxu0 %v4416
      %v4418 = vand.u32 %v2628, 4294901760
      %4419 = vmatpush.msra.mxu0 %v4418
      %v4420 = vand.u32 %v2627, 4294901760
      %4421 = vmatpush.msra.mxu0 %v4420
      %v4422 = vand.u32 %v2626, 4294901760
      %4423 = vmatpush.msra.mxu0 %v4422
      %v4424 = vand.u32 %v2625, 4294901760
      %4425 = vmatpush.msra.mxu0 %v4424
      %v4426 = vand.u32 %v2624, 4294901760
      %4427 = vmatpush.msra.mxu0 %v4426
      %v4428 = vand.u32 %v2623, 4294901760
      %4429 = vmatpush.msra.mxu0 %v4428
      %v4430 = vand.u32 %v2622, 4294901760
      %4431 = vmatpush.msra.mxu0 %v4430
      %v4432 = vand.u32 %v2684, 4294901760
      %v4433 = vsub.f32 %v2684, %v4432
      %v4434 = vand.u32 %v4433, 4294901760
      %v4435 = vsub.f32 %v4433, %v4434
      %v4436 = vand.u32 %v4435, 4294901760
      %4437 = vmatmul.f32.gmra.mxu0 %v4436
      %v4438 = vpop.f32.mrf.mxu0
      %v4439 = vadd.f32 %v4398, %v4438
      %4440 = vdwg.mxu0
      %v4441 = vand.u32 %v2637, 4294901760
      %v4442 = vsub.f32 %v2637, %v4441
      %v4443 = vand.u32 %v4442, 4294901760
      %v4444 = vsub.f32 %v4442, %v4443
      %v4445 = vand.u32 %v4444, 4294901760
      %4446 = vmatpush.msra.mxu0 %v4445
      %v4447 = vand.u32 %v2636, 4294901760
      %v4448 = vsub.f32 %v2636, %v4447
      %v4449 = vand.u32 %v4448, 4294901760
      %v4450 = vsub.f32 %v4448, %v4449
      %v4451 = vand.u32 %v4450, 4294901760
      %4452 = vmatpush.msra.mxu0 %v4451
      %v4453 = vand.u32 %v2635, 4294901760
      %v4454 = vsub.f32 %v2635, %v4453
      %v4455 = vand.u32 %v4454, 4294901760
      %v4456 = vsub.f32 %v4454, %v4455
      %v4457 = vand.u32 %v4456, 4294901760
      %4458 = vmatpush.msra.mxu0 %v4457
      %v4459 = vand.u32 %v2634, 4294901760
      %v4460 = vsub.f32 %v2634, %v4459
      %v4461 = vand.u32 %v4460, 4294901760
      %v4462 = vsub.f32 %v4460, %v4461
      %v4463 = vand.u32 %v4462, 4294901760
      %4464 = vmatpush.msra.mxu0 %v4463
      %v4465 = vand.u32 %v2633, 4294901760
      %v4466 = vsub.f32 %v2633, %v4465
      %v4467 = vand.u32 %v4466, 4294901760
      %v4468 = vsub.f32 %v4466, %v4467
      %v4469 = vand.u32 %v4468, 4294901760
      %4470 = vmatpush.msra.mxu0 %v4469
      %v4471 = vand.u32 %v2632, 4294901760
      %v4472 = vsub.f32 %v2632, %v4471
      %v4473 = vand.u32 %v4472, 4294901760
      %v4474 = vsub.f32 %v4472, %v4473
      %v4475 = vand.u32 %v4474, 4294901760
      %4476 = vmatpush.msra.mxu0 %v4475
      %v4477 = vand.u32 %v2631, 4294901760
      %v4478 = vsub.f32 %v2631, %v4477
      %v4479 = vand.u32 %v4478, 4294901760
      %v4480 = vsub.f32 %v4478, %v4479
      %v4481 = vand.u32 %v4480, 4294901760
      %4482 = vmatpush.msra.mxu0 %v4481
      %v4483 = vand.u32 %v2630, 4294901760
      %v4484 = vsub.f32 %v2630, %v4483
      %v4485 = vand.u32 %v4484, 4294901760
      %v4486 = vsub.f32 %v4484, %v4485
      %v4487 = vand.u32 %v4486, 4294901760
      %4488 = vmatpush.msra.mxu0 %v4487
      %v4489 = vand.u32 %v2629, 4294901760
      %v4490 = vsub.f32 %v2629, %v4489
      %v4491 = vand.u32 %v4490, 4294901760
      %v4492 = vsub.f32 %v4490, %v4491
      %v4493 = vand.u32 %v4492, 4294901760
      %4494 = vmatpush.msra.mxu0 %v4493
      %v4495 = vand.u32 %v2628, 4294901760
      %v4496 = vsub.f32 %v2628, %v4495
      %v4497 = vand.u32 %v4496, 4294901760
      %v4498 = vsub.f32 %v4496, %v4497
      %v4499 = vand.u32 %v4498, 4294901760
      %4500 = vmatpush.msra.mxu0 %v4499
      %v4501 = vand.u32 %v2627, 4294901760
      %v4502 = vsub.f32 %v2627, %v4501
      %v4503 = vand.u32 %v4502, 4294901760
      %v4504 = vsub.f32 %v4502, %v4503
      %v4505 = vand.u32 %v4504, 4294901760
      %4506 = vmatpush.msra.mxu0 %v4505
      %v4507 = vand.u32 %v2626, 4294901760
      %v4508 = vsub.f32 %v2626, %v4507
      %v4509 = vand.u32 %v4508, 4294901760
      %v4510 = vsub.f32 %v4508, %v4509
      %v4511 = vand.u32 %v4510, 4294901760
      %4512 = vmatpush.msra.mxu0 %v4511
      %v4513 = vand.u32 %v2625, 4294901760
      %v4514 = vsub.f32 %v2625, %v4513
      %v4515 = vand.u32 %v4514, 4294901760
      %v4516 = vsub.f32 %v4514, %v4515
      %v4517 = vand.u32 %v4516, 4294901760
      %4518 = vmatpush.msra.mxu0 %v4517
      %v4519 = vand.u32 %v2624, 4294901760
      %v4520 = vsub.f32 %v2624, %v4519
      %v4521 = vand.u32 %v4520, 4294901760
      %v4522 = vsub.f32 %v4520, %v4521
      %v4523 = vand.u32 %v4522, 4294901760
      %4524 = vmatpush.msra.mxu0 %v4523
      %v4525 = vand.u32 %v2623, 4294901760
      %v4526 = vsub.f32 %v2623, %v4525
      %v4527 = vand.u32 %v4526, 4294901760
      %v4528 = vsub.f32 %v4526, %v4527
      %v4529 = vand.u32 %v4528, 4294901760
      %4530 = vmatpush.msra.mxu0 %v4529
      %v4531 = vand.u32 %v2622, 4294901760
      %v4532 = vsub.f32 %v2622, %v4531
      %v4533 = vand.u32 %v4532, 4294901760
      %v4534 = vsub.f32 %v4532, %v4533
      %v4535 = vand.u32 %v4534, 4294901760
      %4536 = vmatpush.msra.mxu0 %v4535
      %v4537 = vand.u32 %v2684, 4294901760
      %4538 = vmatmul.f32.gmra.mxu0 %v4537
      %v4539 = vpop.f32.mrf.mxu0
      %v4540 = vadd.f32 %v4439, %v4539
      %4541 = vdwg.mxu0
      %v4542 = vand.u32 %v2637, 4294901760
      %v4543 = vsub.f32 %v2637, %v4542
      %4544 = vmatpush.msra.mxu0 %v4543
      %v4545 = vand.u32 %v2636, 4294901760
      %v4546 = vsub.f32 %v2636, %v4545
      %4547 = vmatpush.msra.mxu0 %v4546
      %v4548 = vand.u32 %v2635, 4294901760
      %v4549 = vsub.f32 %v2635, %v4548
      %4550 = vmatpush.msra.mxu0 %v4549
      %v4551 = vand.u32 %v2634, 4294901760
      %v4552 = vsub.f32 %v2634, %v4551
      %4553 = vmatpush.msra.mxu0 %v4552
      %v4554 = vand.u32 %v2633, 4294901760
      %v4555 = vsub.f32 %v2633, %v4554
      %4556 = vmatpush.msra.mxu0 %v4555
      %v4557 = vand.u32 %v2632, 4294901760
      %v4558 = vsub.f32 %v2632, %v4557
      %4559 = vmatpush.msra.mxu0 %v4558
      %v4560 = vand.u32 %v2631, 4294901760
      %v4561 = vsub.f32 %v2631, %v4560
      %4562 = vmatpush.msra.mxu0 %v4561
      %v4563 = vand.u32 %v2630, 4294901760
      %v4564 = vsub.f32 %v2630, %v4563
      %4565 = vmatpush.msra.mxu0 %v4564
      %v4566 = vand.u32 %v2629, 4294901760
      %v4567 = vsub.f32 %v2629, %v4566
      %4568 = vmatpush.msra.mxu0 %v4567
      %v4569 = vand.u32 %v2628, 4294901760
      %v4570 = vsub.f32 %v2628, %v4569
      %4571 = vmatpush.msra.mxu0 %v4570
      %v4572 = vand.u32 %v2627, 4294901760
      %v4573 = vsub.f32 %v2627, %v4572
      %4574 = vmatpush.msra.mxu0 %v4573
      %v4575 = vand.u32 %v2626, 4294901760
      %v4576 = vsub.f32 %v2626, %v4575
      %4577 = vmatpush.msra.mxu0 %v4576
      %v4578 = vand.u32 %v2625, 4294901760
      %v4579 = vsub.f32 %v2625, %v4578
      %4580 = vmatpush.msra.mxu0 %v4579
      %v4581 = vand.u32 %v2624, 4294901760
      %v4582 = vsub.f32 %v2624, %v4581
      %4583 = vmatpush.msra.mxu0 %v4582
      %v4584 = vand.u32 %v2623, 4294901760
      %v4585 = vsub.f32 %v2623, %v4584
      %4586 = vmatpush.msra.mxu0 %v4585
      %v4587 = vand.u32 %v2622, 4294901760
      %v4588 = vsub.f32 %v2622, %v4587
      %4589 = vmatpush.msra.mxu0 %v4588
      %v4590 = vand.u32 %v2684, 4294901760
      %v4591 = vsub.f32 %v2684, %v4590
      %4592 = vmatmul.f32.gmra.mxu0 %v4591
      %v4593 = vpop.f32.mrf.mxu0
      %v4594 = vadd.f32 %v4540, %v4593
      %4595 = vdwg.mxu0
      %v4596 = vand.u32 %v2637, 4294901760
      %4597 = vmatpush.msra.mxu0 %v4596
      %v4598 = vand.u32 %v2636, 4294901760
      %4599 = vmatpush.msra.mxu0 %v4598
      %v4600 = vand.u32 %v2635, 4294901760
      %4601 = vmatpush.msra.mxu0 %v4600
      %v4602 = vand.u32 %v2634, 4294901760
      %4603 = vmatpush.msra.mxu0 %v4602
      %v4604 = vand.u32 %v2633, 4294901760
      %4605 = vmatpush.msra.mxu0 %v4604
      %v4606 = vand.u32 %v2632, 4294901760
      %4607 = vmatpush.msra.mxu0 %v4606
      %v4608 = vand.u32 %v2631, 4294901760
      %4609 = vmatpush.msra.mxu0 %v4608
      %v4610 = vand.u32 %v2630, 4294901760
      %4611 = vmatpush.msra.mxu0 %v4610
      %v4612 = vand.u32 %v2629, 4294901760
      %4613 = vmatpush.msra.mxu0 %v4612
      %v4614 = vand.u32 %v2628, 4294901760
      %4615 = vmatpush.msra.mxu0 %v4614
      %v4616 = vand.u32 %v2627, 4294901760
      %4617 = vmatpush.msra.mxu0 %v4616
      %v4618 = vand.u32 %v2626, 4294901760
      %4619 = vmatpush.msra.mxu0 %v4618
      %v4620 = vand.u32 %v2625, 4294901760
      %4621 = vmatpush.msra.mxu0 %v4620
      %v4622 = vand.u32 %v2624, 4294901760
      %4623 = vmatpush.msra.mxu0 %v4622
      %v4624 = vand.u32 %v2623, 4294901760
      %4625 = vmatpush.msra.mxu0 %v4624
      %v4626 = vand.u32 %v2622, 4294901760
      %4627 = vmatpush.msra.mxu0 %v4626
      %v4628 = vand.u32 %v2684, 4294901760
      %v4629 = vsub.f32 %v2684, %v4628
      %v4630 = vand.u32 %v4629, 4294901760
      %4631 = vmatmul.f32.gmra.mxu0 %v4630
      %v4632 = vpop.f32.mrf.mxu0
      %v4633 = vadd.f32 %v4594, %v4632
      %4634 = vdwg.mxu0
      %v4635 = vand.u32 %v2637, 4294901760
      %v4636 = vsub.f32 %v2637, %v4635
      %v4637 = vand.u32 %v4636, 4294901760
      %4638 = vmatpush.msra.mxu0 %v4637
      %v4639 = vand.u32 %v2636, 4294901760
      %v4640 = vsub.f32 %v2636, %v4639
      %v4641 = vand.u32 %v4640, 4294901760
      %4642 = vmatpush.msra.mxu0 %v4641
      %v4643 = vand.u32 %v2635, 4294901760
      %v4644 = vsub.f32 %v2635, %v4643
      %v4645 = vand.u32 %v4644, 4294901760
      %4646 = vmatpush.msra.mxu0 %v4645
      %v4647 = vand.u32 %v2634, 4294901760
      %v4648 = vsub.f32 %v2634, %v4647
      %v4649 = vand.u32 %v4648, 4294901760
      %4650 = vmatpush.msra.mxu0 %v4649
      %v4651 = vand.u32 %v2633, 4294901760
      %v4652 = vsub.f32 %v2633, %v4651
      %v4653 = vand.u32 %v4652, 4294901760
      %4654 = vmatpush.msra.mxu0 %v4653
      %v4655 = vand.u32 %v2632, 4294901760
      %v4656 = vsub.f32 %v2632, %v4655
      %v4657 = vand.u32 %v4656, 4294901760
      %4658 = vmatpush.msra.mxu0 %v4657
      %v4659 = vand.u32 %v2631, 4294901760
      %v4660 = vsub.f32 %v2631, %v4659
      %v4661 = vand.u32 %v4660, 4294901760
      %4662 = vmatpush.msra.mxu0 %v4661
      %v4663 = vand.u32 %v2630, 4294901760
      %v4664 = vsub.f32 %v2630, %v4663
      %v4665 = vand.u32 %v4664, 4294901760
      %4666 = vmatpush.msra.mxu0 %v4665
      %v4667 = vand.u32 %v2629, 4294901760
      %v4668 = vsub.f32 %v2629, %v4667
      %v4669 = vand.u32 %v4668, 4294901760
      %4670 = vmatpush.msra.mxu0 %v4669
      %v4671 = vand.u32 %v2628, 4294901760
      %v4672 = vsub.f32 %v2628, %v4671
      %v4673 = vand.u32 %v4672, 4294901760
      %4674 = vmatpush.msra.mxu0 %v4673
      %v4675 = vand.u32 %v2627, 4294901760
      %v4676 = vsub.f32 %v2627, %v4675
      %v4677 = vand.u32 %v4676, 4294901760
      %4678 = vmatpush.msra.mxu0 %v4677
      %v4679 = vand.u32 %v2626, 4294901760
      %v4680 = vsub.f32 %v2626, %v4679
      %v4681 = vand.u32 %v4680, 4294901760
      %4682 = vmatpush.msra.mxu0 %v4681
      %v4683 = vand.u32 %v2625, 4294901760
      %v4684 = vsub.f32 %v2625, %v4683
      %v4685 = vand.u32 %v4684, 4294901760
      %4686 = vmatpush.msra.mxu0 %v4685
      %v4687 = vand.u32 %v2624, 4294901760
      %v4688 = vsub.f32 %v2624, %v4687
      %v4689 = vand.u32 %v4688, 4294901760
      %4690 = vmatpush.msra.mxu0 %v4689
      %v4691 = vand.u32 %v2623, 4294901760
      %v4692 = vsub.f32 %v2623, %v4691
      %v4693 = vand.u32 %v4692, 4294901760
      %4694 = vmatpush.msra.mxu0 %v4693
      %v4695 = vand.u32 %v2622, 4294901760
      %v4696 = vsub.f32 %v2622, %v4695
      %v4697 = vand.u32 %v4696, 4294901760
      %4698 = vmatpush.msra.mxu0 %v4697
      %v4699 = vand.u32 %v2684, 4294901760
      %4700 = vmatmul.f32.gmra.mxu0 %v4699
      %v4701 = vpop.f32.mrf.mxu0
      %v4702 = vadd.f32 %v4633, %v4701
      %4703 = vdwg.mxu0
      %v4704 = vand.u32 %v2637, 4294901760
      %4705 = vmatpush.msra.mxu0 %v4704
      %v4706 = vand.u32 %v2636, 4294901760
      %4707 = vmatpush.msra.mxu0 %v4706
      %v4708 = vand.u32 %v2635, 4294901760
      %4709 = vmatpush.msra.mxu0 %v4708
      %v4710 = vand.u32 %v2634, 4294901760
      %4711 = vmatpush.msra.mxu0 %v4710
      %v4712 = vand.u32 %v2633, 4294901760
      %4713 = vmatpush.msra.mxu0 %v4712
      %v4714 = vand.u32 %v2632, 4294901760
      %4715 = vmatpush.msra.mxu0 %v4714
      %v4716 = vand.u32 %v2631, 4294901760
      %4717 = vmatpush.msra.mxu0 %v4716
      %v4718 = vand.u32 %v2630, 4294901760
      %4719 = vmatpush.msra.mxu0 %v4718
      %v4720 = vand.u32 %v2629, 4294901760
      %4721 = vmatpush.msra.mxu0 %v4720
      %v4722 = vand.u32 %v2628, 4294901760
      %4723 = vmatpush.msra.mxu0 %v4722
      %v4724 = vand.u32 %v2627, 4294901760
      %4725 = vmatpush.msra.mxu0 %v4724
      %v4726 = vand.u32 %v2626, 4294901760
      %4727 = vmatpush.msra.mxu0 %v4726
      %v4728 = vand.u32 %v2625, 4294901760
      %4729 = vmatpush.msra.mxu0 %v4728
      %v4730 = vand.u32 %v2624, 4294901760
      %4731 = vmatpush.msra.mxu0 %v4730
      %v4732 = vand.u32 %v2623, 4294901760
      %4733 = vmatpush.msra.mxu0 %v4732
      %v4734 = vand.u32 %v2622, 4294901760
      %4735 = vmatpush.msra.mxu0 %v4734
      %v4736 = vand.u32 %v2684, 4294901760
      %4737 = vmatmul.f32.gmra.mxu0 %v4736
      %v4738 = vpop.f32.mrf.mxu0
      %v4739 = vadd.f32 %v4702, %v4738
      %4740 = vdwg.mxu0
      %v4741 = vand.u32 %v2653, 4294901760
      %4742 = vmatpush.msra.mxu0 %v4741
      %v4743 = vand.u32 %v2652, 4294901760
      %4744 = vmatpush.msra.mxu0 %v4743
      %v4745 = vand.u32 %v2651, 4294901760
      %4746 = vmatpush.msra.mxu0 %v4745
      %v4747 = vand.u32 %v2650, 4294901760
      %4748 = vmatpush.msra.mxu0 %v4747
      %v4749 = vand.u32 %v2649, 4294901760
      %4750 = vmatpush.msra.mxu0 %v4749
      %v4751 = vand.u32 %v2648, 4294901760
      %4752 = vmatpush.msra.mxu0 %v4751
      %v4753 = vand.u32 %v2647, 4294901760
      %4754 = vmatpush.msra.mxu0 %v4753
      %v4755 = vand.u32 %v2646, 4294901760
      %4756 = vmatpush.msra.mxu0 %v4755
      %v4757 = vand.u32 %v2645, 4294901760
      %4758 = vmatpush.msra.mxu0 %v4757
      %v4759 = vand.u32 %v2644, 4294901760
      %4760 = vmatpush.msra.mxu0 %v4759
      %v4761 = vand.u32 %v2643, 4294901760
      %4762 = vmatpush.msra.mxu0 %v4761
      %v4763 = vand.u32 %v2642, 4294901760
      %4764 = vmatpush.msra.mxu0 %v4763
      %v4765 = vand.u32 %v2641, 4294901760
      %4766 = vmatpush.msra.mxu0 %v4765
      %v4767 = vand.u32 %v2640, 4294901760
      %4768 = vmatpush.msra.mxu0 %v4767
      %v4769 = vand.u32 %v2639, 4294901760
      %4770 = vmatpush.msra.mxu0 %v4769
      %v4771 = vand.u32 %v2638, 4294901760
      %4772 = vmatpush.msra.mxu0 %v4771
      %v4773 = vand.u32 %v2685, 4294901760
      %v4774 = vsub.f32 %v2685, %v4773
      %v4775 = vand.u32 %v4774, 4294901760
      %v4776 = vsub.f32 %v4774, %v4775
      %v4777 = vand.u32 %v4776, 4294901760
      %4778 = vmatmul.f32.gmra.mxu0 %v4777
      %v4779 = vpop.f32.mrf.mxu0
      %v4780 = vadd.f32 %v4739, %v4779
      %4781 = vdwg.mxu0
      %v4782 = vand.u32 %v2653, 4294901760
      %v4783 = vsub.f32 %v2653, %v4782
      %v4784 = vand.u32 %v4783, 4294901760
      %v4785 = vsub.f32 %v4783, %v4784
      %v4786 = vand.u32 %v4785, 4294901760
      %4787 = vmatpush.msra.mxu0 %v4786
      %v4788 = vand.u32 %v2652, 4294901760
      %v4789 = vsub.f32 %v2652, %v4788
      %v4790 = vand.u32 %v4789, 4294901760
      %v4791 = vsub.f32 %v4789, %v4790
      %v4792 = vand.u32 %v4791, 4294901760
      %4793 = vmatpush.msra.mxu0 %v4792
      %v4794 = vand.u32 %v2651, 4294901760
      %v4795 = vsub.f32 %v2651, %v4794
      %v4796 = vand.u32 %v4795, 4294901760
      %v4797 = vsub.f32 %v4795, %v4796
      %v4798 = vand.u32 %v4797, 4294901760
      %4799 = vmatpush.msra.mxu0 %v4798
      %v4800 = vand.u32 %v2650, 4294901760
      %v4801 = vsub.f32 %v2650, %v4800
      %v4802 = vand.u32 %v4801, 4294901760
      %v4803 = vsub.f32 %v4801, %v4802
      %v4804 = vand.u32 %v4803, 4294901760
      %4805 = vmatpush.msra.mxu0 %v4804
      %v4806 = vand.u32 %v2649, 4294901760
      %v4807 = vsub.f32 %v2649, %v4806
      %v4808 = vand.u32 %v4807, 4294901760
      %v4809 = vsub.f32 %v4807, %v4808
      %v4810 = vand.u32 %v4809, 4294901760
      %4811 = vmatpush.msra.mxu0 %v4810
      %v4812 = vand.u32 %v2648, 4294901760
      %v4813 = vsub.f32 %v2648, %v4812
      %v4814 = vand.u32 %v4813, 4294901760
      %v4815 = vsub.f32 %v4813, %v4814
      %v4816 = vand.u32 %v4815, 4294901760
      %4817 = vmatpush.msra.mxu0 %v4816
      %v4818 = vand.u32 %v2647, 4294901760
      %v4819 = vsub.f32 %v2647, %v4818
      %v4820 = vand.u32 %v4819, 4294901760
      %v4821 = vsub.f32 %v4819, %v4820
      %v4822 = vand.u32 %v4821, 4294901760
      %4823 = vmatpush.msra.mxu0 %v4822
      %v4824 = vand.u32 %v2646, 4294901760
      %v4825 = vsub.f32 %v2646, %v4824
      %v4826 = vand.u32 %v4825, 4294901760
      %v4827 = vsub.f32 %v4825, %v4826
      %v4828 = vand.u32 %v4827, 4294901760
      %4829 = vmatpush.msra.mxu0 %v4828
      %v4830 = vand.u32 %v2645, 4294901760
      %v4831 = vsub.f32 %v2645, %v4830
      %v4832 = vand.u32 %v4831, 4294901760
      %v4833 = vsub.f32 %v4831, %v4832
      %v4834 = vand.u32 %v4833, 4294901760
      %4835 = vmatpush.msra.mxu0 %v4834
      %v4836 = vand.u32 %v2644, 4294901760
      %v4837 = vsub.f32 %v2644, %v4836
      %v4838 = vand.u32 %v4837, 4294901760
      %v4839 = vsub.f32 %v4837, %v4838
      %v4840 = vand.u32 %v4839, 4294901760
      %4841 = vmatpush.msra.mxu0 %v4840
      %v4842 = vand.u32 %v2643, 4294901760
      %v4843 = vsub.f32 %v2643, %v4842
      %v4844 = vand.u32 %v4843, 4294901760
      %v4845 = vsub.f32 %v4843, %v4844
      %v4846 = vand.u32 %v4845, 4294901760
      %4847 = vmatpush.msra.mxu0 %v4846
      %v4848 = vand.u32 %v2642, 4294901760
      %v4849 = vsub.f32 %v2642, %v4848
      %v4850 = vand.u32 %v4849, 4294901760
      %v4851 = vsub.f32 %v4849, %v4850
      %v4852 = vand.u32 %v4851, 4294901760
      %4853 = vmatpush.msra.mxu0 %v4852
      %v4854 = vand.u32 %v2641, 4294901760
      %v4855 = vsub.f32 %v2641, %v4854
      %v4856 = vand.u32 %v4855, 4294901760
      %v4857 = vsub.f32 %v4855, %v4856
      %v4858 = vand.u32 %v4857, 4294901760
      %4859 = vmatpush.msra.mxu0 %v4858
      %v4860 = vand.u32 %v2640, 4294901760
      %v4861 = vsub.f32 %v2640, %v4860
      %v4862 = vand.u32 %v4861, 4294901760
      %v4863 = vsub.f32 %v4861, %v4862
      %v4864 = vand.u32 %v4863, 4294901760
      %4865 = vmatpush.msra.mxu0 %v4864
      %v4866 = vand.u32 %v2639, 4294901760
      %v4867 = vsub.f32 %v2639, %v4866
      %v4868 = vand.u32 %v4867, 4294901760
      %v4869 = vsub.f32 %v4867, %v4868
      %v4870 = vand.u32 %v4869, 4294901760
      %4871 = vmatpush.msra.mxu0 %v4870
      %v4872 = vand.u32 %v2638, 4294901760
      %v4873 = vsub.f32 %v2638, %v4872
      %v4874 = vand.u32 %v4873, 4294901760
      %v4875 = vsub.f32 %v4873, %v4874
      %v4876 = vand.u32 %v4875, 4294901760
      %4877 = vmatpush.msra.mxu0 %v4876
      %v4878 = vand.u32 %v2685, 4294901760
      %4879 = vmatmul.f32.gmra.mxu0 %v4878
      %v4880 = vpop.f32.mrf.mxu0
      %v4881 = vadd.f32 %v4780, %v4880
      %4882 = vdwg.mxu0
      %v4883 = vand.u32 %v2653, 4294901760
      %v4884 = vsub.f32 %v2653, %v4883
      %4885 = vmatpush.msra.mxu0 %v4884
      %v4886 = vand.u32 %v2652, 4294901760
      %v4887 = vsub.f32 %v2652, %v4886
      %4888 = vmatpush.msra.mxu0 %v4887
      %v4889 = vand.u32 %v2651, 4294901760
      %v4890 = vsub.f32 %v2651, %v4889
      %4891 = vmatpush.msra.mxu0 %v4890
      %v4892 = vand.u32 %v2650, 4294901760
      %v4893 = vsub.f32 %v2650, %v4892
      %4894 = vmatpush.msra.mxu0 %v4893
      %v4895 = vand.u32 %v2649, 4294901760
      %v4896 = vsub.f32 %v2649, %v4895
      %4897 = vmatpush.msra.mxu0 %v4896
      %v4898 = vand.u32 %v2648, 4294901760
      %v4899 = vsub.f32 %v2648, %v4898
      %4900 = vmatpush.msra.mxu0 %v4899
      %v4901 = vand.u32 %v2647, 4294901760
      %v4902 = vsub.f32 %v2647, %v4901
      %4903 = vmatpush.msra.mxu0 %v4902
      %v4904 = vand.u32 %v2646, 4294901760
      %v4905 = vsub.f32 %v2646, %v4904
      %4906 = vmatpush.msra.mxu0 %v4905
      %v4907 = vand.u32 %v2645, 4294901760
      %v4908 = vsub.f32 %v2645, %v4907
      %4909 = vmatpush.msra.mxu0 %v4908
      %v4910 = vand.u32 %v2644, 4294901760
      %v4911 = vsub.f32 %v2644, %v4910
      %4912 = vmatpush.msra.mxu0 %v4911
      %v4913 = vand.u32 %v2643, 4294901760
      %v4914 = vsub.f32 %v2643, %v4913
      %4915 = vmatpush.msra.mxu0 %v4914
      %v4916 = vand.u32 %v2642, 4294901760
      %v4917 = vsub.f32 %v2642, %v4916
      %4918 = vmatpush.msra.mxu0 %v4917
      %v4919 = vand.u32 %v2641, 4294901760
      %v4920 = vsub.f32 %v2641, %v4919
      %4921 = vmatpush.msra.mxu0 %v4920
      %v4922 = vand.u32 %v2640, 4294901760
      %v4923 = vsub.f32 %v2640, %v4922
      %4924 = vmatpush.msra.mxu0 %v4923
      %v4925 = vand.u32 %v2639, 4294901760
      %v4926 = vsub.f32 %v2639, %v4925
      %4927 = vmatpush.msra.mxu0 %v4926
      %v4928 = vand.u32 %v2638, 4294901760
      %v4929 = vsub.f32 %v2638, %v4928
      %4930 = vmatpush.msra.mxu0 %v4929
      %v4931 = vand.u32 %v2685, 4294901760
      %v4932 = vsub.f32 %v2685, %v4931
      %4933 = vmatmul.f32.gmra.mxu0 %v4932
      %v4934 = vpop.f32.mrf.mxu0
      %v4935 = vadd.f32 %v4881, %v4934
      %4936 = vdwg.mxu0
      %v4937 = vand.u32 %v2653, 4294901760
      %4938 = vmatpush.msra.mxu0 %v4937
      %v4939 = vand.u32 %v2652, 4294901760
      %4940 = vmatpush.msra.mxu0 %v4939
      %v4941 = vand.u32 %v2651, 4294901760
      %4942 = vmatpush.msra.mxu0 %v4941
      %v4943 = vand.u32 %v2650, 4294901760
      %4944 = vmatpush.msra.mxu0 %v4943
      %v4945 = vand.u32 %v2649, 4294901760
      %4946 = vmatpush.msra.mxu0 %v4945
      %v4947 = vand.u32 %v2648, 4294901760
      %4948 = vmatpush.msra.mxu0 %v4947
      %v4949 = vand.u32 %v2647, 4294901760
      %4950 = vmatpush.msra.mxu0 %v4949
      %v4951 = vand.u32 %v2646, 4294901760
      %4952 = vmatpush.msra.mxu0 %v4951
      %v4953 = vand.u32 %v2645, 4294901760
      %4954 = vmatpush.msra.mxu0 %v4953
      %v4955 = vand.u32 %v2644, 4294901760
      %4956 = vmatpush.msra.mxu0 %v4955
      %v4957 = vand.u32 %v2643, 4294901760
      %4958 = vmatpush.msra.mxu0 %v4957
      %v4959 = vand.u32 %v2642, 4294901760
      %4960 = vmatpush.msra.mxu0 %v4959
      %v4961 = vand.u32 %v2641, 4294901760
      %4962 = vmatpush.msra.mxu0 %v4961
      %v4963 = vand.u32 %v2640, 4294901760
      %4964 = vmatpush.msra.mxu0 %v4963
      %v4965 = vand.u32 %v2639, 4294901760
      %4966 = vmatpush.msra.mxu0 %v4965
      %v4967 = vand.u32 %v2638, 4294901760
      %4968 = vmatpush.msra.mxu0 %v4967
      %v4969 = vand.u32 %v2685, 4294901760
      %v4970 = vsub.f32 %v2685, %v4969
      %v4971 = vand.u32 %v4970, 4294901760
      %4972 = vmatmul.f32.gmra.mxu0 %v4971
      %v4973 = vpop.f32.mrf.mxu0
      %v4974 = vadd.f32 %v4935, %v4973
      %4975 = vdwg.mxu0
      %v4976 = vand.u32 %v2653, 4294901760
      %v4977 = vsub.f32 %v2653, %v4976
      %v4978 = vand.u32 %v4977, 4294901760
      %4979 = vmatpush.msra.mxu0 %v4978
      %v4980 = vand.u32 %v2652, 4294901760
      %v4981 = vsub.f32 %v2652, %v4980
      %v4982 = vand.u32 %v4981, 4294901760
      %4983 = vmatpush.msra.mxu0 %v4982
      %v4984 = vand.u32 %v2651, 4294901760
      %v4985 = vsub.f32 %v2651, %v4984
      %v4986 = vand.u32 %v4985, 4294901760
      %4987 = vmatpush.msra.mxu0 %v4986
      %v4988 = vand.u32 %v2650, 4294901760
      %v4989 = vsub.f32 %v2650, %v4988
      %v4990 = vand.u32 %v4989, 4294901760
      %4991 = vmatpush.msra.mxu0 %v4990
      %v4992 = vand.u32 %v2649, 4294901760
      %v4993 = vsub.f32 %v2649, %v4992
      %v4994 = vand.u32 %v4993, 4294901760
      %4995 = vmatpush.msra.mxu0 %v4994
      %v4996 = vand.u32 %v2648, 4294901760
      %v4997 = vsub.f32 %v2648, %v4996
      %v4998 = vand.u32 %v4997, 4294901760
      %4999 = vmatpush.msra.mxu0 %v4998
      %v5000 = vand.u32 %v2647, 4294901760
      %v5001 = vsub.f32 %v2647, %v5000
      %v5002 = vand.u32 %v5001, 4294901760
      %5003 = vmatpush.msra.mxu0 %v5002
      %v5004 = vand.u32 %v2646, 4294901760
      %v5005 = vsub.f32 %v2646, %v5004
      %v5006 = vand.u32 %v5005, 4294901760
      %5007 = vmatpush.msra.mxu0 %v5006
      %v5008 = vand.u32 %v2645, 4294901760
      %v5009 = vsub.f32 %v2645, %v5008
      %v5010 = vand.u32 %v5009, 4294901760
      %5011 = vmatpush.msra.mxu0 %v5010
      %v5012 = vand.u32 %v2644, 4294901760
      %v5013 = vsub.f32 %v2644, %v5012
      %v5014 = vand.u32 %v5013, 4294901760
      %5015 = vmatpush.msra.mxu0 %v5014
      %v5016 = vand.u32 %v2643, 4294901760
      %v5017 = vsub.f32 %v2643, %v5016
      %v5018 = vand.u32 %v5017, 4294901760
      %5019 = vmatpush.msra.mxu0 %v5018
      %v5020 = vand.u32 %v2642, 4294901760
      %v5021 = vsub.f32 %v2642, %v5020
      %v5022 = vand.u32 %v5021, 4294901760
      %5023 = vmatpush.msra.mxu0 %v5022
      %v5024 = vand.u32 %v2641, 4294901760
      %v5025 = vsub.f32 %v2641, %v5024
      %v5026 = vand.u32 %v5025, 4294901760
      %5027 = vmatpush.msra.mxu0 %v5026
      %v5028 = vand.u32 %v2640, 4294901760
      %v5029 = vsub.f32 %v2640, %v5028
      %v5030 = vand.u32 %v5029, 4294901760
      %5031 = vmatpush.msra.mxu0 %v5030
      %v5032 = vand.u32 %v2639, 4294901760
      %v5033 = vsub.f32 %v2639, %v5032
      %v5034 = vand.u32 %v5033, 4294901760
      %5035 = vmatpush.msra.mxu0 %v5034
      %v5036 = vand.u32 %v2638, 4294901760
      %v5037 = vsub.f32 %v2638, %v5036
      %v5038 = vand.u32 %v5037, 4294901760
      %5039 = vmatpush.msra.mxu0 %v5038
      %v5040 = vand.u32 %v2685, 4294901760
      %5041 = vmatmul.f32.gmra.mxu0 %v5040
      %v5042 = vpop.f32.mrf.mxu0
      %v5043 = vadd.f32 %v4974, %v5042
      %5044 = vdwg.mxu0
      %v5045 = vand.u32 %v2653, 4294901760
      %5046 = vmatpush.msra.mxu0 %v5045
      %v5047 = vand.u32 %v2652, 4294901760
      %5048 = vmatpush.msra.mxu0 %v5047
      %v5049 = vand.u32 %v2651, 4294901760
      %5050 = vmatpush.msra.mxu0 %v5049
      %v5051 = vand.u32 %v2650, 4294901760
      %5052 = vmatpush.msra.mxu0 %v5051
      %v5053 = vand.u32 %v2649, 4294901760
      %5054 = vmatpush.msra.mxu0 %v5053
      %v5055 = vand.u32 %v2648, 4294901760
      %5056 = vmatpush.msra.mxu0 %v5055
      %v5057 = vand.u32 %v2647, 4294901760
      %5058 = vmatpush.msra.mxu0 %v5057
      %v5059 = vand.u32 %v2646, 4294901760
      %5060 = vmatpush.msra.mxu0 %v5059
      %v5061 = vand.u32 %v2645, 4294901760
      %5062 = vmatpush.msra.mxu0 %v5061
      %v5063 = vand.u32 %v2644, 4294901760
      %5064 = vmatpush.msra.mxu0 %v5063
      %v5065 = vand.u32 %v2643, 4294901760
      %5066 = vmatpush.msra.mxu0 %v5065
      %v5067 = vand.u32 %v2642, 4294901760
      %5068 = vmatpush.msra.mxu0 %v5067
      %v5069 = vand.u32 %v2641, 4294901760
      %5070 = vmatpush.msra.mxu0 %v5069
      %v5071 = vand.u32 %v2640, 4294901760
      %5072 = vmatpush.msra.mxu0 %v5071
      %v5073 = vand.u32 %v2639, 4294901760
      %5074 = vmatpush.msra.mxu0 %v5073
      %v5075 = vand.u32 %v2638, 4294901760
      %5076 = vmatpush.msra.mxu0 %v5075
      %v5077 = vand.u32 %v2685, 4294901760
      %5078 = vmatmul.f32.gmra.mxu0 %v5077
      %v5079 = vpop.f32.mrf.mxu0
      %v5080 = vadd.f32 %v5043, %v5079
      %5081 = vdwg.mxu0
      %v5082 = vand.u32 %v2669, 4294901760
      %5083 = vmatpush.msra.mxu0 %v5082
      %v5084 = vand.u32 %v2668, 4294901760
      %5085 = vmatpush.msra.mxu0 %v5084
      %v5086 = vand.u32 %v2667, 4294901760
      %5087 = vmatpush.msra.mxu0 %v5086
      %v5088 = vand.u32 %v2666, 4294901760
      %5089 = vmatpush.msra.mxu0 %v5088
      %v5090 = vand.u32 %v2665, 4294901760
      %5091 = vmatpush.msra.mxu0 %v5090
      %v5092 = vand.u32 %v2664, 4294901760
      %5093 = vmatpush.msra.mxu0 %v5092
      %v5094 = vand.u32 %v2663, 4294901760
      %5095 = vmatpush.msra.mxu0 %v5094
      %v5096 = vand.u32 %v2662, 4294901760
      %5097 = vmatpush.msra.mxu0 %v5096
      %v5098 = vand.u32 %v2661, 4294901760
      %5099 = vmatpush.msra.mxu0 %v5098
      %v5100 = vand.u32 %v2660, 4294901760
      %5101 = vmatpush.msra.mxu0 %v5100
      %v5102 = vand.u32 %v2659, 4294901760
      %5103 = vmatpush.msra.mxu0 %v5102
      %v5104 = vand.u32 %v2658, 4294901760
      %5105 = vmatpush.msra.mxu0 %v5104
      %v5106 = vand.u32 %v2657, 4294901760
      %5107 = vmatpush.msra.mxu0 %v5106
      %v5108 = vand.u32 %v2656, 4294901760
      %5109 = vmatpush.msra.mxu0 %v5108
      %v5110 = vand.u32 %v2655, 4294901760
      %5111 = vmatpush.msra.mxu0 %v5110
      %v5112 = vand.u32 %v2654, 4294901760
      %5113 = vmatpush.msra.mxu0 %v5112
      %v5114 = vand.u32 %v2686, 4294901760
      %v5115 = vsub.f32 %v2686, %v5114
      %v5116 = vand.u32 %v5115, 4294901760
      %v5117 = vsub.f32 %v5115, %v5116
      %v5118 = vand.u32 %v5117, 4294901760
      %5119 = vmatmul.f32.gmra.mxu0 %v5118
      %v5120 = vpop.f32.mrf.mxu0
      %v5121 = vadd.f32 %v5080, %v5120
      %5122 = vdwg.mxu0
      %v5123 = vand.u32 %v2669, 4294901760
      %v5124 = vsub.f32 %v2669, %v5123
      %v5125 = vand.u32 %v5124, 4294901760
      %v5126 = vsub.f32 %v5124, %v5125
      %v5127 = vand.u32 %v5126, 4294901760
      %5128 = vmatpush.msra.mxu0 %v5127
      %v5129 = vand.u32 %v2668, 4294901760
      %v5130 = vsub.f32 %v2668, %v5129
      %v5131 = vand.u32 %v5130, 4294901760
      %v5132 = vsub.f32 %v5130, %v5131
      %v5133 = vand.u32 %v5132, 4294901760
      %5134 = vmatpush.msra.mxu0 %v5133
      %v5135 = vand.u32 %v2667, 4294901760
      %v5136 = vsub.f32 %v2667, %v5135
      %v5137 = vand.u32 %v5136, 4294901760
      %v5138 = vsub.f32 %v5136, %v5137
      %v5139 = vand.u32 %v5138, 4294901760
      %5140 = vmatpush.msra.mxu0 %v5139
      %v5141 = vand.u32 %v2666, 4294901760
      %v5142 = vsub.f32 %v2666, %v5141
      %v5143 = vand.u32 %v5142, 4294901760
      %v5144 = vsub.f32 %v5142, %v5143
      %v5145 = vand.u32 %v5144, 4294901760
      %5146 = vmatpush.msra.mxu0 %v5145
      %v5147 = vand.u32 %v2665, 4294901760
      %v5148 = vsub.f32 %v2665, %v5147
      %v5149 = vand.u32 %v5148, 4294901760
      %v5150 = vsub.f32 %v5148, %v5149
      %v5151 = vand.u32 %v5150, 4294901760
      %5152 = vmatpush.msra.mxu0 %v5151
      %v5153 = vand.u32 %v2664, 4294901760
      %v5154 = vsub.f32 %v2664, %v5153
      %v5155 = vand.u32 %v5154, 4294901760
      %v5156 = vsub.f32 %v5154, %v5155
      %v5157 = vand.u32 %v5156, 4294901760
      %5158 = vmatpush.msra.mxu0 %v5157
      %v5159 = vand.u32 %v2663, 4294901760
      %v5160 = vsub.f32 %v2663, %v5159
      %v5161 = vand.u32 %v5160, 4294901760
      %v5162 = vsub.f32 %v5160, %v5161
      %v5163 = vand.u32 %v5162, 4294901760
      %5164 = vmatpush.msra.mxu0 %v5163
      %v5165 = vand.u32 %v2662, 4294901760
      %v5166 = vsub.f32 %v2662, %v5165
      %v5167 = vand.u32 %v5166, 4294901760
      %v5168 = vsub.f32 %v5166, %v5167
      %v5169 = vand.u32 %v5168, 4294901760
      %5170 = vmatpush.msra.mxu0 %v5169
      %v5171 = vand.u32 %v2661, 4294901760
      %v5172 = vsub.f32 %v2661, %v5171
      %v5173 = vand.u32 %v5172, 4294901760
      %v5174 = vsub.f32 %v5172, %v5173
      %v5175 = vand.u32 %v5174, 4294901760
      %5176 = vmatpush.msra.mxu0 %v5175
      %v5177 = vand.u32 %v2660, 4294901760
      %v5178 = vsub.f32 %v2660, %v5177
      %v5179 = vand.u32 %v5178, 4294901760
      %v5180 = vsub.f32 %v5178, %v5179
      %v5181 = vand.u32 %v5180, 4294901760
      %5182 = vmatpush.msra.mxu0 %v5181
      %v5183 = vand.u32 %v2659, 4294901760
      %v5184 = vsub.f32 %v2659, %v5183
      %v5185 = vand.u32 %v5184, 4294901760
      %v5186 = vsub.f32 %v5184, %v5185
      %v5187 = vand.u32 %v5186, 4294901760
      %5188 = vmatpush.msra.mxu0 %v5187
      %v5189 = vand.u32 %v2658, 4294901760
      %v5190 = vsub.f32 %v2658, %v5189
      %v5191 = vand.u32 %v5190, 4294901760
      %v5192 = vsub.f32 %v5190, %v5191
      %v5193 = vand.u32 %v5192, 4294901760
      %5194 = vmatpush.msra.mxu0 %v5193
      %v5195 = vand.u32 %v2657, 4294901760
      %v5196 = vsub.f32 %v2657, %v5195
      %v5197 = vand.u32 %v5196, 4294901760
      %v5198 = vsub.f32 %v5196, %v5197
      %v5199 = vand.u32 %v5198, 4294901760
      %5200 = vmatpush.msra.mxu0 %v5199
      %v5201 = vand.u32 %v2656, 4294901760
      %v5202 = vsub.f32 %v2656, %v5201
      %v5203 = vand.u32 %v5202, 4294901760
      %v5204 = vsub.f32 %v5202, %v5203
      %v5205 = vand.u32 %v5204, 4294901760
      %5206 = vmatpush.msra.mxu0 %v5205
      %v5207 = vand.u32 %v2655, 4294901760
      %v5208 = vsub.f32 %v2655, %v5207
      %v5209 = vand.u32 %v5208, 4294901760
      %v5210 = vsub.f32 %v5208, %v5209
      %v5211 = vand.u32 %v5210, 4294901760
      %5212 = vmatpush.msra.mxu0 %v5211
      %v5213 = vand.u32 %v2654, 4294901760
      %v5214 = vsub.f32 %v2654, %v5213
      %v5215 = vand.u32 %v5214, 4294901760
      %v5216 = vsub.f32 %v5214, %v5215
      %v5217 = vand.u32 %v5216, 4294901760
      %5218 = vmatpush.msra.mxu0 %v5217
      %v5219 = vand.u32 %v2686, 4294901760
      %5220 = vmatmul.f32.gmra.mxu0 %v5219
      %v5221 = vpop.f32.mrf.mxu0
      %v5222 = vadd.f32 %v5121, %v5221
      %5223 = vdwg.mxu0
      %v5224 = vand.u32 %v2669, 4294901760
      %v5225 = vsub.f32 %v2669, %v5224
      %5226 = vmatpush.msra.mxu0 %v5225
      %v5227 = vand.u32 %v2668, 4294901760
      %v5228 = vsub.f32 %v2668, %v5227
      %5229 = vmatpush.msra.mxu0 %v5228
      %v5230 = vand.u32 %v2667, 4294901760
      %v5231 = vsub.f32 %v2667, %v5230
      %5232 = vmatpush.msra.mxu0 %v5231
      %v5233 = vand.u32 %v2666, 4294901760
      %v5234 = vsub.f32 %v2666, %v5233
      %5235 = vmatpush.msra.mxu0 %v5234
      %v5236 = vand.u32 %v2665, 4294901760
      %v5237 = vsub.f32 %v2665, %v5236
      %5238 = vmatpush.msra.mxu0 %v5237
      %v5239 = vand.u32 %v2664, 4294901760
      %v5240 = vsub.f32 %v2664, %v5239
      %5241 = vmatpush.msra.mxu0 %v5240
      %v5242 = vand.u32 %v2663, 4294901760
      %v5243 = vsub.f32 %v2663, %v5242
      %5244 = vmatpush.msra.mxu0 %v5243
      %v5245 = vand.u32 %v2662, 4294901760
      %v5246 = vsub.f32 %v2662, %v5245
      %5247 = vmatpush.msra.mxu0 %v5246
      %v5248 = vand.u32 %v2661, 4294901760
      %v5249 = vsub.f32 %v2661, %v5248
      %5250 = vmatpush.msra.mxu0 %v5249
      %v5251 = vand.u32 %v2660, 4294901760
      %v5252 = vsub.f32 %v2660, %v5251
      %5253 = vmatpush.msra.mxu0 %v5252
      %v5254 = vand.u32 %v2659, 4294901760
      %v5255 = vsub.f32 %v2659, %v5254
      %5256 = vmatpush.msra.mxu0 %v5255
      %v5257 = vand.u32 %v2658, 4294901760
      %v5258 = vsub.f32 %v2658, %v5257
      %5259 = vmatpush.msra.mxu0 %v5258
      %v5260 = vand.u32 %v2657, 4294901760
      %v5261 = vsub.f32 %v2657, %v5260
      %5262 = vmatpush.msra.mxu0 %v5261
      %v5263 = vand.u32 %v2656, 4294901760
      %v5264 = vsub.f32 %v2656, %v5263
      %5265 = vmatpush.msra.mxu0 %v5264
      %v5266 = vand.u32 %v2655, 4294901760
      %v5267 = vsub.f32 %v2655, %v5266
      %5268 = vmatpush.msra.mxu0 %v5267
      %v5269 = vand.u32 %v2654, 4294901760
      %v5270 = vsub.f32 %v2654, %v5269
      %5271 = vmatpush.msra.mxu0 %v5270
      %v5272 = vand.u32 %v2686, 4294901760
      %v5273 = vsub.f32 %v2686, %v5272
      %5274 = vmatmul.f32.gmra.mxu0 %v5273
      %v5275 = vpop.f32.mrf.mxu0
      %v5276 = vadd.f32 %v5222, %v5275
      %5277 = vdwg.mxu0
      %v5278 = vand.u32 %v2669, 4294901760
      %5279 = vmatpush.msra.mxu0 %v5278
      %v5280 = vand.u32 %v2668, 4294901760
      %5281 = vmatpush.msra.mxu0 %v5280
      %v5282 = vand.u32 %v2667, 4294901760
      %5283 = vmatpush.msra.mxu0 %v5282
      %v5284 = vand.u32 %v2666, 4294901760
      %5285 = vmatpush.msra.mxu0 %v5284
      %v5286 = vand.u32 %v2665, 4294901760
      %5287 = vmatpush.msra.mxu0 %v5286
      %v5288 = vand.u32 %v2664, 4294901760
      %5289 = vmatpush.msra.mxu0 %v5288
      %v5290 = vand.u32 %v2663, 4294901760
      %5291 = vmatpush.msra.mxu0 %v5290
      %v5292 = vand.u32 %v2662, 4294901760
      %5293 = vmatpush.msra.mxu0 %v5292
      %v5294 = vand.u32 %v2661, 4294901760
      %5295 = vmatpush.msra.mxu0 %v5294
      %v5296 = vand.u32 %v2660, 4294901760
      %5297 = vmatpush.msra.mxu0 %v5296
      %v5298 = vand.u32 %v2659, 4294901760
      %5299 = vmatpush.msra.mxu0 %v5298
      %v5300 = vand.u32 %v2658, 4294901760
      %5301 = vmatpush.msra.mxu0 %v5300
      %v5302 = vand.u32 %v2657, 4294901760
      %5303 = vmatpush.msra.mxu0 %v5302
      %v5304 = vand.u32 %v2656, 4294901760
      %5305 = vmatpush.msra.mxu0 %v5304
      %v5306 = vand.u32 %v2655, 4294901760
      %5307 = vmatpush.msra.mxu0 %v5306
      %v5308 = vand.u32 %v2654, 4294901760
      %5309 = vmatpush.msra.mxu0 %v5308
      %v5310 = vand.u32 %v2686, 4294901760
      %v5311 = vsub.f32 %v2686, %v5310
      %v5312 = vand.u32 %v5311, 4294901760
      %5313 = vmatmul.f32.gmra.mxu0 %v5312
      %v5314 = vpop.f32.mrf.mxu0
      %v5315 = vadd.f32 %v5276, %v5314
      %5316 = vdwg.mxu0
      %v5317 = vand.u32 %v2669, 4294901760
      %v5318 = vsub.f32 %v2669, %v5317
      %v5319 = vand.u32 %v5318, 4294901760
      %5320 = vmatpush.msra.mxu0 %v5319
      %v5321 = vand.u32 %v2668, 4294901760
      %v5322 = vsub.f32 %v2668, %v5321
      %v5323 = vand.u32 %v5322, 4294901760
      %5324 = vmatpush.msra.mxu0 %v5323
      %v5325 = vand.u32 %v2667, 4294901760
      %v5326 = vsub.f32 %v2667, %v5325
      %v5327 = vand.u32 %v5326, 4294901760
      %5328 = vmatpush.msra.mxu0 %v5327
      %v5329 = vand.u32 %v2666, 4294901760
      %v5330 = vsub.f32 %v2666, %v5329
      %v5331 = vand.u32 %v5330, 4294901760
      %5332 = vmatpush.msra.mxu0 %v5331
      %v5333 = vand.u32 %v2665, 4294901760
      %v5334 = vsub.f32 %v2665, %v5333
      %v5335 = vand.u32 %v5334, 4294901760
      %5336 = vmatpush.msra.mxu0 %v5335
      %v5337 = vand.u32 %v2664, 4294901760
      %v5338 = vsub.f32 %v2664, %v5337
      %v5339 = vand.u32 %v5338, 4294901760
      %5340 = vmatpush.msra.mxu0 %v5339
      %v5341 = vand.u32 %v2663, 4294901760
      %v5342 = vsub.f32 %v2663, %v5341
      %v5343 = vand.u32 %v5342, 4294901760
      %5344 = vmatpush.msra.mxu0 %v5343
      %v5345 = vand.u32 %v2662, 4294901760
      %v5346 = vsub.f32 %v2662, %v5345
      %v5347 = vand.u32 %v5346, 4294901760
      %5348 = vmatpush.msra.mxu0 %v5347
      %v5349 = vand.u32 %v2661, 4294901760
      %v5350 = vsub.f32 %v2661, %v5349
      %v5351 = vand.u32 %v5350, 4294901760
      %5352 = vmatpush.msra.mxu0 %v5351
      %v5353 = vand.u32 %v2660, 4294901760
      %v5354 = vsub.f32 %v2660, %v5353
      %v5355 = vand.u32 %v5354, 4294901760
      %5356 = vmatpush.msra.mxu0 %v5355
      %v5357 = vand.u32 %v2659, 4294901760
      %v5358 = vsub.f32 %v2659, %v5357
      %v5359 = vand.u32 %v5358, 4294901760
      %5360 = vmatpush.msra.mxu0 %v5359
      %v5361 = vand.u32 %v2658, 4294901760
      %v5362 = vsub.f32 %v2658, %v5361
      %v5363 = vand.u32 %v5362, 4294901760
      %5364 = vmatpush.msra.mxu0 %v5363
      %v5365 = vand.u32 %v2657, 4294901760
      %v5366 = vsub.f32 %v2657, %v5365
      %v5367 = vand.u32 %v5366, 4294901760
      %5368 = vmatpush.msra.mxu0 %v5367
      %v5369 = vand.u32 %v2656, 4294901760
      %v5370 = vsub.f32 %v2656, %v5369
      %v5371 = vand.u32 %v5370, 4294901760
      %5372 = vmatpush.msra.mxu0 %v5371
      %v5373 = vand.u32 %v2655, 4294901760
      %v5374 = vsub.f32 %v2655, %v5373
      %v5375 = vand.u32 %v5374, 4294901760
      %5376 = vmatpush.msra.mxu0 %v5375
      %v5377 = vand.u32 %v2654, 4294901760
      %v5378 = vsub.f32 %v2654, %v5377
      %v5379 = vand.u32 %v5378, 4294901760
      %5380 = vmatpush.msra.mxu0 %v5379
      %v5381 = vand.u32 %v2686, 4294901760
      %5382 = vmatmul.f32.gmra.mxu0 %v5381
      %v5383 = vpop.f32.mrf.mxu0
      %v5384 = vadd.f32 %v5315, %v5383
      %5385 = vdwg.mxu0
      %v5386 = vand.u32 %v2669, 4294901760
      %5387 = vmatpush.msra.mxu0 %v5386
      %v5388 = vand.u32 %v2668, 4294901760
      %5389 = vmatpush.msra.mxu0 %v5388
      %v5390 = vand.u32 %v2667, 4294901760
      %5391 = vmatpush.msra.mxu0 %v5390
      %v5392 = vand.u32 %v2666, 4294901760
      %5393 = vmatpush.msra.mxu0 %v5392
      %v5394 = vand.u32 %v2665, 4294901760
      %5395 = vmatpush.msra.mxu0 %v5394
      %v5396 = vand.u32 %v2664, 4294901760
      %5397 = vmatpush.msra.mxu0 %v5396
      %v5398 = vand.u32 %v2663, 4294901760
      %5399 = vmatpush.msra.mxu0 %v5398
      %v5400 = vand.u32 %v2662, 4294901760
      %5401 = vmatpush.msra.mxu0 %v5400
      %v5402 = vand.u32 %v2661, 4294901760
      %5403 = vmatpush.msra.mxu0 %v5402
      %v5404 = vand.u32 %v2660, 4294901760
      %5405 = vmatpush.msra.mxu0 %v5404
      %v5406 = vand.u32 %v2659, 4294901760
      %5407 = vmatpush.msra.mxu0 %v5406
      %v5408 = vand.u32 %v2658, 4294901760
      %5409 = vmatpush.msra.mxu0 %v5408
      %v5410 = vand.u32 %v2657, 4294901760
      %5411 = vmatpush.msra.mxu0 %v5410
      %v5412 = vand.u32 %v2656, 4294901760
      %5413 = vmatpush.msra.mxu0 %v5412
      %v5414 = vand.u32 %v2655, 4294901760
      %5415 = vmatpush.msra.mxu0 %v5414
      %v5416 = vand.u32 %v2654, 4294901760
      %5417 = vmatpush.msra.mxu0 %v5416
      %v5418 = vand.u32 %v2686, 4294901760
      %5419 = vmatmul.f32.gmra.mxu0 %v5418
      %v5420 = vpop.f32.mrf.mxu0
      %v5421 = vadd.f32 %v5384, %v5420
      %5422 = vdwg.mxu0
      %5423 = vst [vmem:[#allocation10] sm:$0x3] %v5421
    $region37: #{tpu_custom_call.1} parent=1 // pred_fallthru
      _
    // Predicated region
    $region38: #{tpu_custom_call.1} parent=1 // pred_check
      _
    $region39: #{tpu_custom_call.1} parent=1 // pred_check_branch
      %5425 = sbr.rel (0) target = $region41
    $region40: #{tpu_custom_call.1} parent=1 // pred_region
      %5427 = vsyncadd [#allocation6], 0
      %s5429 = sshll.u32 [#allocation10], 4
      %s5430 = int_to_ptr.vmem [resolvable:$true] %s5429
      %s5431 = sshll.u32 %s4, 4
      %s5432 = int_to_ptr.hbm [resolvable:$true] %s5431
      %5434 = dma.vmem_to_hbm [thread:$0]  %s5430, 32, %s5432, [#allocation6]
    $region41: #{tpu_custom_call.1} parent=1 // pred_fallthru
      _
    // Predicated region
    $region42: #{tpu_custom_call.1} parent=1 // pred_check
      _
    $region43: #{tpu_custom_call.1} parent=1 // pred_check_branch
      %5436 = sbr.rel (0) target = $region45
    $region44: #{tpu_custom_call.1} parent=1 // pred_region
      %5438 = dma.done [#allocation6], 32
    $region45: #{tpu_custom_call.1} parent=1 // pred_fallthru
      _
    %5439 = vsyncpa [#allocation5], 1
    %5440 = vsyncpa [#allocation8], 1
    %5441 = vsyncpa [#allocation6], 1

</llo_original>
